<compile_context>
chip_gen: v7x
topology: tpu7x:2x2x1
jax: 0.10.0
libtpu: 0.0.40
codegen_flags: <defaults>
</compile_context>

<pallas_src>
import jax
import jax.numpy as jnp
from jax.experimental import pallas as pl
from jax.experimental.pallas import tpu as pltpu

BN_EPS = 1e-5


# ----------------------------- fused Pallas kernel -----------------------------

def _make_upblock_kernel(N, Hs, Ws, Ccat, Cmid, Cout):
    """Fused: concat(already done) -> conv3x3 -> BN -> ReLU -> conv3x3 -> BN -> +skip -> ReLU.

    All tensors are (C, M) with M = N*Hs*Ws flattened as (n, y, x) on the lane axis.
    """
    M = N * Hs * Ws
    P = Ws + 1            # flat halo, >= max |shift| = Ws + 1

    def kernel(cat_ref, w1_ref, g1_ref, b1_ref, w2_ref, g2_ref, b2_ref, o_ref):
        f32 = jnp.float32

        # ---- per-pixel boundary masks (lane index m = n*Hs*Ws + y*Ws + x) ----
        lane = jax.lax.broadcasted_iota(jnp.int32, (1, M), 1)
        if (Ws & (Ws - 1)) == 0 and (Hs & (Hs - 1)) == 0:
            xp = lane & (Ws - 1)
            yp = (lane >> (Ws.bit_length() - 1)) & (Hs - 1)
        else:
            # TODO(synk): non-power-of-2 spatial sizes use s32 div/rem lowering.
            xp = lane % Ws
            yp = (lane // Ws) % Hs
        vx = ((xp >= 1).astype(f32), None, (xp <= Ws - 2).astype(f32))
        vy = ((yp >= 1).astype(f32), None, (yp <= Hs - 2).astype(f32))
        masks = []
        for ky in range(3):
            row = []
            for kx in range(3):
                mx, my = vx[kx], vy[ky]
                if mx is None and my is None:
                    row.append(None)
                elif mx is None:
                    row.append(my)
                elif my is None:
                    row.append(mx)
                else:
                    row.append(mx * my)
            masks.append(row)

        def conv3x3(v, w_ref, c_out):
            # v: (c_in, M); w_ref: (9*c_out, c_in) with rows ordered (ky, kx, co).
            c_in = v.shape[0]
            zpad = jnp.zeros((c_in, P), f32)
            vp = jnp.concatenate([zpad, v, zpad], axis=1)          # (c_in, M + 2P)
            acc = jnp.zeros((c_out, M), f32)
            for ky in range(3):
                for kx in range(3):
                    off = (ky - 1) * Ws + (kx - 1)
                    s = vp[:, P + off:P + off + M]                 # flat lane shift
                    if masks[ky][kx] is not None:
                        s = s * masks[ky][kx]                      # zero 'same'-pad taps
                    k = ky * 3 + kx
                    wk = w_ref[k * c_out:(k + 1) * c_out, :]       # (c_out, c_in)
                    acc = acc + jnp.dot(wk, s, preferred_element_type=f32)
            return acc

        def bn(z, g_ref, b_ref):
            # training-mode batch stats over (N, H, W) == the lane axis, one pass.
            inv_m = 1.0 / M
            mean = jnp.sum(z, axis=1, keepdims=True) * inv_m
            var = jnp.maximum(
                jnp.sum(z * z, axis=1, keepdims=True) * inv_m - mean * mean, 0.0)
            return (z - mean) * jax.lax.rsqrt(var + BN_EPS) * g_ref[...] + b_ref[...]

        cat = cat_ref[...]                                          # (Ccat, M)
        h = jnp.maximum(bn(conv3x3(cat, w1_ref, Cmid), g1_ref, b1_ref), 0.0)
        z2 = conv3x3(h, w2_ref, Cout)
        o_ref[...] = jnp.maximum(bn(z2, g2_ref, b2_ref) + h, 0.0)   # lane-dense store

    return kernel


# ----------------------------- wrapper -----------------------------

def up_block_forward(params, x_nchw, x_skip_nchw):
    """Fused UpBlock forward.  x: (N, Cin, H, W), x_skip: (N, Csk, Hs, Ws), NCHW f32."""
    N, Cin, H, W = x_nchw.shape
    _, Csk, Hs, Ws = x_skip_nchw.shape
    Cup = params["up_w"].shape[1]
    Cmid = params["c1_w"].shape[0]
    Cout = params["c2_w"].shape[0]
    Ccat = Cup + Csk
    UH, UW = 2 * H, 2 * W
    M = N * Hs * Ws

    assert params["c1_w"].shape[1] == Ccat
    assert Cmid == Cout, "residual add requires mid_channels == out_channels"

    # PyTorch UpBlock pad quirk: diff_x is the H-dim difference but pads W, and
    # diff_y is the W-dim difference but pads H (kept verbatim).
    diff_x = Hs - UH
    diff_y = Ws - UW
    # TODO(synk): negative diffs (cropping) unsupported; k=2,s=2 always gives 0 here.
    assert diff_x >= 0 and diff_y >= 0
    assert UH + diff_y == Hs and UW + diff_x == Ws, "padded x must match x_skip"

    # ---- ConvTranspose2d(k=2, s=2) at LOW resolution, in XLA (tiny) ----
    # out[n, co, 2h+ky, 2w+kx] = sum_ci x[n, ci, h, w] * up_w[ci, co, ky, kx] + up_b[co]
    up = jnp.einsum("nihw,iokl->onhkwl", x_nchw, params["up_w"])
    up = up.reshape(Cup, N, UH, UW) + params["up_b"][:, None, None, None]
    up = jnp.pad(up, ((0, 0), (0, 0),
                      (diff_y // 2, diff_y - diff_y // 2),
                      (diff_x // 2, diff_x - diff_x // 2)))
    up_m = up.reshape(Cup, M)

    # skip + channel concat, already in the kernel's (C, M) layout
    sk_m = jnp.transpose(x_skip_nchw, (1, 0, 2, 3)).reshape(Csk, M)
    cat_m = jnp.concatenate([up_m, sk_m], axis=0)                    # (Ccat, M)

    # Conv weights -> per-tap (ky, kx, co, ci) stacks.  Conv biases c1_b / c2_b are
    # dropped: a uniform per-channel bias before training-mode BN cancels exactly.
    w1 = jnp.transpose(params["c1_w"], (2, 3, 0, 1)).reshape(9 * Cmid, Ccat)
    w2 = jnp.transpose(params["c2_w"], (2, 3, 0, 1)).reshape(9 * Cout, Cmid)
    g1 = params["bn1_g"].reshape(Cmid, 1)
    b1 = params["bn1_b"].reshape(Cmid, 1)
    g2 = params["bn2_g"].reshape(Cout, 1)
    b2 = params["bn2_b"].reshape(Cout, 1)

    kernel = _make_upblock_kernel(N, Hs, Ws, Ccat, Cmid, Cout)
    out_m = pl.pallas_call(
        kernel,
        out_shape=jax.ShapeDtypeStruct((Cout, M), jnp.float32),
        compiler_params=pltpu.CompilerParams(vmem_limit_bytes=32 * 1024 * 1024),
    )(cat_m, w1, g1, b1, w2, g2, b2)

    # (Cout, N*Hs*Ws) -> (N, Cout, Hs, Ws)
    return jnp.transpose(out_m.reshape(Cout, N, Hs, Ws), (1, 0, 2, 3))


# ----------------------------- reference (pure jnp) -----------------------------

def _ref_forward(params, x_nchw, x_skip_nchw):
    x = jnp.transpose(x_nchw, (0, 2, 3, 1))
    sk = jnp.transpose(x_skip_nchw, (0, 2, 3, 1))
    N, H, W, Cin = x.shape
    Cup = params["up_w"].shape[1]

    # ConvTranspose2d(k=2, s=2)
    w2 = jnp.transpose(params["up_w"], (0, 2, 3, 1)).reshape(Cin, 4 * Cup)
    y = x.reshape(N * H * W, Cin) @ w2 + jnp.tile(params["up_b"], (4,))
    xu = y.reshape(N, H, W, 2, 2, Cup).transpose(0, 1, 3, 2, 4, 5)
    xu = xu.reshape(N, 2 * H, 2 * W, Cup)

    # pad quirk (no-op at these shapes) + channel concat
    diff_x = sk.shape[1] - xu.shape[1]
    diff_y = sk.shape[2] - xu.shape[2]
    xu = jnp.pad(xu, ((0, 0),
                      (diff_y // 2, diff_y - diff_y // 2),
                      (diff_x // 2, diff_x - diff_x // 2),
                      (0, 0)))
    cat = jnp.concatenate([xu, sk], axis=-1)

    def conv3(v, w_oihw, b):
        w = jnp.transpose(w_oihw, (2, 3, 1, 0))          # (dy, dx, ci, co)
        vp = jnp.pad(v, ((0, 0), (1, 1), (1, 1), (0, 0)))
        Hh, Ww = v.shape[1], v.shape[2]
        acc = jnp.zeros(v.shape[:3] + (w.shape[-1],), jnp.float32)
        for dy in range(3):
            for dx in range(3):
                acc += jnp.einsum("nhwc,co->nhwo",
                                  vp[:, dy:dy + Hh, dx:dx + Ww, :], w[dy, dx])
        return acc + b

    def bn(v, g, b):
        m = v.mean(axis=(0, 1, 2), keepdims=True)
        var = ((v - m) ** 2).mean(axis=(0, 1, 2), keepdims=True)
        return (v - m) * jax.lax.rsqrt(var + BN_EPS) * g + b

    h = jnp.maximum(bn(conv3(cat, params["c1_w"], params["c1_b"]),
                       params["bn1_g"], params["bn1_b"]), 0.0)
    h2 = bn(conv3(h, params["c2_w"], params["c2_b"]),
            params["bn2_g"], params["bn2_b"])
    out = jnp.maximum(h2 + h, 0.0)
    return jnp.transpose(out, (0, 3, 1, 2))


# ----------------------------- main -----------------------------

if __name__ == "__main__":
    # UpBlock(in_channels=8, out_channels=4, resolution=16, stride=2)
    in_ch, out_ch = 8, 4
    N, H, W = 2, 8, 8                       # x spatial; skip is 16x16
    skip_ch = in_ch - out_ch                # concat channels must equal in_ch

    key = jax.random.PRNGKey(0)
    ks = jax.random.split(key, 12)

    params = {
        # all weights kept in their native PyTorch layouts
        "up_w": 0.1 * jax.random.normal(ks[0], (in_ch, out_ch, 2, 2), jnp.float32),
        "up_b": 0.1 * jax.random.normal(ks[1], (out_ch,), jnp.float32),
        "c1_w": 0.1 * jax.random.normal(ks[2], (out_ch, in_ch, 3, 3), jnp.float32),
        "c1_b": 0.1 * jax.random.normal(ks[3], (out_ch,), jnp.float32),
        "bn1_g": 1.0 + 0.1 * jax.random.normal(ks[4], (out_ch,), jnp.float32),
        "bn1_b": 0.1 * jax.random.normal(ks[5], (out_ch,), jnp.float32),
        "c2_w": 0.1 * jax.random.normal(ks[6], (out_ch, out_ch, 3, 3), jnp.float32),
        "c2_b": 0.1 * jax.random.normal(ks[7], (out_ch,), jnp.float32),
        "bn2_g": 1.0 + 0.1 * jax.random.normal(ks[8], (out_ch,), jnp.float32),
        "bn2_b": 0.1 * jax.random.normal(ks[9], (out_ch,), jnp.float32),
    }

    x = jax.random.normal(ks[10], (N, in_ch, H, W), jnp.float32)             # NCHW
    x_skip = jax.random.normal(ks[11], (N, skip_ch, 2 * H, 2 * W), jnp.float32)

    out = jax.jit(up_block_forward)(params, x, x_skip)
    out = jax.block_until_ready(out)

    ref = _ref_forward(params, x, x_skip)
    assert out.shape == (N, out_ch, 2 * H, 2 * W), out.shape
    assert jnp.allclose(out, ref, atol=1e-4, rtol=1e-4), \
        float(jnp.max(jnp.abs(out - ref)))

    print("KERNEL_OK")
</pallas_src>

<mosaic_0001>
module attributes {stable_mosaic.version = 11 : i64} {
  func.func @kernel(%arg0: memref<8x512xf32, #tpu.memory_space<vmem>>, %arg1: memref<36x8xf32, #tpu.memory_space<vmem>>, %arg2: memref<4x1xf32, #tpu.memory_space<vmem>>, %arg3: memref<4x1xf32, #tpu.memory_space<vmem>>, %arg4: memref<36x4xf32, #tpu.memory_space<vmem>>, %arg5: memref<4x1xf32, #tpu.memory_space<vmem>>, %arg6: memref<4x1xf32, #tpu.memory_space<vmem>>, %arg7: memref<4x512xf32, #tpu.memory_space<vmem>>) attributes {dimension_semantics = [], scalar_prefetch = 0 : i64, scratch_operands = 0 : i64, tpu.core_type = #tpu.core_type<tc>} {
    %0 = tpu.iota {dimensions = array<i32: 1>} : vector<1x512xi32>
    %c15_i32 = arith.constant 15 : i32
    %1 = vector.broadcast %c15_i32 : i32 to vector<1x512xi32>
    %2 = arith.andi %0, %1 : vector<1x512xi32>
    %c4_i32 = arith.constant 4 : i32
    %3 = vector.broadcast %c4_i32 : i32 to vector<1x512xi32>
    %4 = arith.shrsi %0, %3 : vector<1x512xi32>
    %c15_i32_0 = arith.constant 15 : i32
    %5 = vector.broadcast %c15_i32_0 : i32 to vector<1x512xi32>
    %6 = arith.andi %4, %5 : vector<1x512xi32>
    %c1_i32 = arith.constant 1 : i32
    %7 = vector.broadcast %c1_i32 : i32 to vector<1x512xi32>
    %8 = arith.cmpi sge, %2, %7 : vector<1x512xi32>
    %9 = arith.extui %8 : vector<1x512xi1> to vector<1x512xi32>
    %10 = arith.sitofp %9 : vector<1x512xi32> to vector<1x512xf32>
    %c14_i32 = arith.constant 14 : i32
    %11 = vector.broadcast %c14_i32 : i32 to vector<1x512xi32>
    %12 = arith.cmpi sle, %2, %11 : vector<1x512xi32>
    %13 = arith.extui %12 : vector<1x512xi1> to vector<1x512xi32>
    %14 = arith.sitofp %13 : vector<1x512xi32> to vector<1x512xf32>
    %c1_i32_1 = arith.constant 1 : i32
    %15 = vector.broadcast %c1_i32_1 : i32 to vector<1x512xi32>
    %16 = arith.cmpi sge, %6, %15 : vector<1x512xi32>
    %17 = arith.extui %16 : vector<1x512xi1> to vector<1x512xi32>
    %18 = arith.sitofp %17 : vector<1x512xi32> to vector<1x512xf32>
    %c14_i32_2 = arith.constant 14 : i32
    %19 = vector.broadcast %c14_i32_2 : i32 to vector<1x512xi32>
    %20 = arith.cmpi sle, %6, %19 : vector<1x512xi32>
    %21 = arith.extui %20 : vector<1x512xi1> to vector<1x512xi32>
    %22 = arith.sitofp %21 : vector<1x512xi32> to vector<1x512xf32>
    %23 = arith.mulf %10, %18 : vector<1x512xf32>
    %24 = arith.mulf %14, %18 : vector<1x512xf32>
    %25 = arith.mulf %10, %22 : vector<1x512xf32>
    %26 = arith.mulf %14, %22 : vector<1x512xf32>
    %c0 = arith.constant 0 : index
    %c0_3 = arith.constant 0 : index
    %27 = vector.load %arg0[%c0, %c0_3] : memref<8x512xf32, #tpu.memory_space<vmem>>, vector<8x512xf32>
    %cst = arith.constant 0.000000e+00 : f32
    %28 = vector.broadcast %cst : f32 to vector<8x17xf32>
    %29 = tpu.concatenate %28, %27, %28 in 1 : vector<8x17xf32>, vector<8x512xf32>, vector<8x17xf32> -> vector<8x546xf32>
    %cst_4 = arith.constant 0.000000e+00 : f32
    %30 = vector.broadcast %cst_4 : f32 to vector<4x512xf32>
    %31 = vector.extract_strided_slice %29 {offsets = [0, 0], sizes = [8, 512], strides = [1, 1]} : vector<8x546xf32> to vector<8x512xf32>
    %32 = vector.broadcast %23 : vector<1x512xf32> to vector<8x512xf32>
    %33 = arith.mulf %31, %32 : vector<8x512xf32>
    %c0_5 = arith.constant 0 : index
    %c0_6 = arith.constant 0 : index
    %34 = vector.load %arg1[%c0_5, %c0_6] : memref<36x8xf32, #tpu.memory_space<vmem>>, vector<4x8xf32>
    %cst_7 = arith.constant dense<0.000000e+00> : vector<4x512xf32>
    %35 = tpu.matmul %34, %33, %cst_7 {dimension_numbers = #tpu.dot_dimension_numbers<[1], [0], [0], [1], [0, 0, 1, 1], [], []>} : vector<4x8xf32>, vector<8x512xf32>, vector<4x512xf32> -> vector<4x512xf32>
    %36 = arith.addf %30, %35 : vector<4x512xf32>
    %37 = vector.extract_strided_slice %29 {offsets = [0, 1], sizes = [8, 512], strides = [1, 1]} : vector<8x546xf32> to vector<8x512xf32>
    %38 = vector.broadcast %18 : vector<1x512xf32> to vector<8x512xf32>
    %39 = arith.mulf %37, %38 : vector<8x512xf32>
    %c4 = arith.constant 4 : index
    %c0_8 = arith.constant 0 : index
    %40 = vector.load %arg1[%c4, %c0_8] : memref<36x8xf32, #tpu.memory_space<vmem>>, vector<4x8xf32>
    %cst_9 = arith.constant dense<0.000000e+00> : vector<4x512xf32>
    %41 = tpu.matmul %40, %39, %cst_9 {dimension_numbers = #tpu.dot_dimension_numbers<[1], [0], [0], [1], [0, 0, 1, 1], [], []>} : vector<4x8xf32>, vector<8x512xf32>, vector<4x512xf32> -> vector<4x512xf32>
    %42 = arith.addf %36, %41 : vector<4x512xf32>
    %43 = vector.extract_strided_slice %29 {offsets = [0, 2], sizes = [8, 512], strides = [1, 1]} : vector<8x546xf32> to vector<8x512xf32>
    %44 = vector.broadcast %24 : vector<1x512xf32> to vector<8x512xf32>
    %45 = arith.mulf %43, %44 : vector<8x512xf32>
    %c8 = arith.constant 8 : index
    %c0_10 = arith.constant 0 : index
    %46 = vector.load %arg1[%c8, %c0_10] : memref<36x8xf32, #tpu.memory_space<vmem>>, vector<4x8xf32>
    %cst_11 = arith.constant dense<0.000000e+00> : vector<4x512xf32>
    %47 = tpu.matmul %46, %45, %cst_11 {dimension_numbers = #tpu.dot_dimension_numbers<[1], [0], [0], [1], [0, 0, 1, 1], [], []>} : vector<4x8xf32>, vector<8x512xf32>, vector<4x512xf32> -> vector<4x512xf32>
    %48 = arith.addf %42, %47 : vector<4x512xf32>
    %49 = vector.extract_strided_slice %29 {offsets = [0, 16], sizes = [8, 512], strides = [1, 1]} : vector<8x546xf32> to vector<8x512xf32>
    %50 = vector.broadcast %10 : vector<1x512xf32> to vector<8x512xf32>
    %51 = arith.mulf %49, %50 : vector<8x512xf32>
    %c12 = arith.constant 12 : index
    %c0_12 = arith.constant 0 : index
    %52 = vector.load %arg1[%c12, %c0_12] : memref<36x8xf32, #tpu.memory_space<vmem>>, vector<4x8xf32>
    %cst_13 = arith.constant dense<0.000000e+00> : vector<4x512xf32>
    %53 = tpu.matmul %52, %51, %cst_13 {dimension_numbers = #tpu.dot_dimension_numbers<[1], [0], [0], [1], [0, 0, 1, 1], [], []>} : vector<4x8xf32>, vector<8x512xf32>, vector<4x512xf32> -> vector<4x512xf32>
    %54 = arith.addf %48, %53 : vector<4x512xf32>
    %55 = vector.extract_strided_slice %29 {offsets = [0, 17], sizes = [8, 512], strides = [1, 1]} : vector<8x546xf32> to vector<8x512xf32>
    %c16 = arith.constant 16 : index
    %c0_14 = arith.constant 0 : index
    %56 = vector.load %arg1[%c16, %c0_14] : memref<36x8xf32, #tpu.memory_space<vmem>>, vector<4x8xf32>
    %cst_15 = arith.constant dense<0.000000e+00> : vector<4x512xf32>
    %57 = tpu.matmul %56, %55, %cst_15 {dimension_numbers = #tpu.dot_dimension_numbers<[1], [0], [0], [1], [0, 0, 1, 1], [], []>} : vector<4x8xf32>, vector<8x512xf32>, vector<4x512xf32> -> vector<4x512xf32>
    %58 = arith.addf %54, %57 : vector<4x512xf32>
    %59 = vector.extract_strided_slice %29 {offsets = [0, 18], sizes = [8, 512], strides = [1, 1]} : vector<8x546xf32> to vector<8x512xf32>
    %60 = vector.broadcast %14 : vector<1x512xf32> to vector<8x512xf32>
    %61 = arith.mulf %59, %60 : vector<8x512xf32>
    %c20 = arith.constant 20 : index
    %c0_16 = arith.constant 0 : index
    %62 = vector.load %arg1[%c20, %c0_16] : memref<36x8xf32, #tpu.memory_space<vmem>>, vector<4x8xf32>
    %cst_17 = arith.constant dense<0.000000e+00> : vector<4x512xf32>
    %63 = tpu.matmul %62, %61, %cst_17 {dimension_numbers = #tpu.dot_dimension_numbers<[1], [0], [0], [1], [0, 0, 1, 1], [], []>} : vector<4x8xf32>, vector<8x512xf32>, vector<4x512xf32> -> vector<4x512xf32>
    %64 = arith.addf %58, %63 : vector<4x512xf32>
    %65 = vector.extract_strided_slice %29 {offsets = [0, 32], sizes = [8, 512], strides = [1, 1]} : vector<8x546xf32> to vector<8x512xf32>
    %66 = vector.broadcast %25 : vector<1x512xf32> to vector<8x512xf32>
    %67 = arith.mulf %65, %66 : vector<8x512xf32>
    %c24 = arith.constant 24 : index
    %c0_18 = arith.constant 0 : index
    %68 = vector.load %arg1[%c24, %c0_18] : memref<36x8xf32, #tpu.memory_space<vmem>>, vector<4x8xf32>
    %cst_19 = arith.constant dense<0.000000e+00> : vector<4x512xf32>
    %69 = tpu.matmul %68, %67, %cst_19 {dimension_numbers = #tpu.dot_dimension_numbers<[1], [0], [0], [1], [0, 0, 1, 1], [], []>} : vector<4x8xf32>, vector<8x512xf32>, vector<4x512xf32> -> vector<4x512xf32>
    %70 = arith.addf %64, %69 : vector<4x512xf32>
    %71 = vector.extract_strided_slice %29 {offsets = [0, 33], sizes = [8, 512], strides = [1, 1]} : vector<8x546xf32> to vector<8x512xf32>
    %72 = vector.broadcast %22 : vector<1x512xf32> to vector<8x512xf32>
    %73 = arith.mulf %71, %72 : vector<8x512xf32>
    %c28 = arith.constant 28 : index
    %c0_20 = arith.constant 0 : index
    %74 = vector.load %arg1[%c28, %c0_20] : memref<36x8xf32, #tpu.memory_space<vmem>>, vector<4x8xf32>
    %cst_21 = arith.constant dense<0.000000e+00> : vector<4x512xf32>
    %75 = tpu.matmul %74, %73, %cst_21 {dimension_numbers = #tpu.dot_dimension_numbers<[1], [0], [0], [1], [0, 0, 1, 1], [], []>} : vector<4x8xf32>, vector<8x512xf32>, vector<4x512xf32> -> vector<4x512xf32>
    %76 = arith.addf %70, %75 : vector<4x512xf32>
    %77 = vector.extract_strided_slice %29 {offsets = [0, 34], sizes = [8, 512], strides = [1, 1]} : vector<8x546xf32> to vector<8x512xf32>
    %78 = vector.broadcast %26 : vector<1x512xf32> to vector<8x512xf32>
    %79 = arith.mulf %77, %78 : vector<8x512xf32>
    %c32 = arith.constant 32 : index
    %c0_22 = arith.constant 0 : index
    %80 = vector.load %arg1[%c32, %c0_22] : memref<36x8xf32, #tpu.memory_space<vmem>>, vector<4x8xf32>
    %cst_23 = arith.constant dense<0.000000e+00> : vector<4x512xf32>
    %81 = tpu.matmul %80, %79, %cst_23 {dimension_numbers = #tpu.dot_dimension_numbers<[1], [0], [0], [1], [0, 0, 1, 1], [], []>} : vector<4x8xf32>, vector<8x512xf32>, vector<4x512xf32> -> vector<4x512xf32>
    %82 = arith.addf %76, %81 : vector<4x512xf32>
    %cst_24 = arith.constant dense<0.000000e+00> : vector<4xf32>
    %83 = vector.multi_reduction <add>, %82, %cst_24 [1] : vector<4x512xf32> to vector<4xf32>
    %84 = vector.shape_cast %83 : vector<4xf32> to vector<4x1xf32>
    %cst_25 = arith.constant 0.001953125 : f32
    %85 = vector.broadcast %cst_25 : f32 to vector<4x1xf32>
    %86 = arith.mulf %84, %85 : vector<4x1xf32>
    %87 = arith.mulf %82, %82 : vector<4x512xf32>
    %cst_26 = arith.constant dense<0.000000e+00> : vector<4xf32>
    %88 = vector.multi_reduction <add>, %87, %cst_26 [1] : vector<4x512xf32> to vector<4xf32>
    %89 = vector.shape_cast %88 : vector<4xf32> to vector<4x1xf32>
    %cst_27 = arith.constant 0.001953125 : f32
    %90 = vector.broadcast %cst_27 : f32 to vector<4x1xf32>
    %91 = arith.mulf %89, %90 : vector<4x1xf32>
    %92 = arith.mulf %86, %86 : vector<4x1xf32>
    %93 = arith.subf %91, %92 : vector<4x1xf32>
    %cst_28 = arith.constant 0.000000e+00 : f32
    %94 = vector.broadcast %cst_28 : f32 to vector<4x1xf32>
    %95 = arith.maximumf %93, %94 : vector<4x1xf32>
    %96 = vector.broadcast %86 : vector<4x1xf32> to vector<4x512xf32>
    %97 = arith.subf %82, %96 : vector<4x512xf32>
    %cst_29 = arith.constant 9.99999974E-6 : f32
    %98 = vector.broadcast %cst_29 : f32 to vector<4x1xf32>
    %99 = arith.addf %95, %98 : vector<4x1xf32>
    %100 = math.rsqrt %99 : vector<4x1xf32>
    %101 = vector.broadcast %100 : vector<4x1xf32> to vector<4x512xf32>
    %102 = arith.mulf %97, %101 : vector<4x512xf32>
    %c0_30 = arith.constant 0 : index
    %c0_31 = arith.constant 0 : index
    %103 = vector.load %arg2[%c0_30, %c0_31] : memref<4x1xf32, #tpu.memory_space<vmem>>, vector<4x1xf32>
    %104 = vector.broadcast %103 : vector<4x1xf32> to vector<4x512xf32>
    %105 = arith.mulf %102, %104 : vector<4x512xf32>
    %c0_32 = arith.constant 0 : index
    %c0_33 = arith.constant 0 : index
    %106 = vector.load %arg3[%c0_32, %c0_33] : memref<4x1xf32, #tpu.memory_space<vmem>>, vector<4x1xf32>
    %107 = vector.broadcast %106 : vector<4x1xf32> to vector<4x512xf32>
    %108 = arith.addf %105, %107 : vector<4x512xf32>
    %cst_34 = arith.constant 0.000000e+00 : f32
    %109 = vector.broadcast %cst_34 : f32 to vector<4x512xf32>
    %110 = arith.maximumf %108, %109 : vector<4x512xf32>
    %cst_35 = arith.constant 0.000000e+00 : f32
    %111 = vector.broadcast %cst_35 : f32 to vector<4x17xf32>
    %112 = tpu.concatenate %111, %110, %111 in 1 : vector<4x17xf32>, vector<4x512xf32>, vector<4x17xf32> -> vector<4x546xf32>
    %cst_36 = arith.constant 0.000000e+00 : f32
    %113 = vector.broadcast %cst_36 : f32 to vector<4x512xf32>
    %114 = vector.extract_strided_slice %112 {offsets = [0, 0], sizes = [4, 512], strides = [1, 1]} : vector<4x546xf32> to vector<4x512xf32>
    %115 = vector.broadcast %23 : vector<1x512xf32> to vector<4x512xf32>
    %116 = arith.mulf %114, %115 : vector<4x512xf32>
    %c0_37 = arith.constant 0 : index
    %c0_38 = arith.constant 0 : index
    %117 = vector.load %arg4[%c0_37, %c0_38] : memref<36x4xf32, #tpu.memory_space<vmem>>, vector<4x4xf32>
    %cst_39 = arith.constant dense<0.000000e+00> : vector<4x512xf32>
    %118 = tpu.matmul %117, %116, %cst_39 {dimension_numbers = #tpu.dot_dimension_numbers<[1], [0], [0], [1], [0, 0, 1, 1], [], []>} : vector<4x4xf32>, vector<4x512xf32>, vector<4x512xf32> -> vector<4x512xf32>
    %119 = arith.addf %113, %118 : vector<4x512xf32>
    %120 = vector.extract_strided_slice %112 {offsets = [0, 1], sizes = [4, 512], strides = [1, 1]} : vector<4x546xf32> to vector<4x512xf32>
    %121 = vector.broadcast %18 : vector<1x512xf32> to vector<4x512xf32>
    %122 = arith.mulf %120, %121 : vector<4x512xf32>
    %c4_40 = arith.constant 4 : index
    %c0_41 = arith.constant 0 : index
    %123 = vector.load %arg4[%c4_40, %c0_41] : memref<36x4xf32, #tpu.memory_space<vmem>>, vector<4x4xf32>
    %cst_42 = arith.constant dense<0.000000e+00> : vector<4x512xf32>
    %124 = tpu.matmul %123, %122, %cst_42 {dimension_numbers = #tpu.dot_dimension_numbers<[1], [0], [0], [1], [0, 0, 1, 1], [], []>} : vector<4x4xf32>, vector<4x512xf32>, vector<4x512xf32> -> vector<4x512xf32>
    %125 = arith.addf %119, %124 : vector<4x512xf32>
    %126 = vector.extract_strided_slice %112 {offsets = [0, 2], sizes = [4, 512], strides = [1, 1]} : vector<4x546xf32> to vector<4x512xf32>
    %127 = vector.broadcast %24 : vector<1x512xf32> to vector<4x512xf32>
    %128 = arith.mulf %126, %127 : vector<4x512xf32>
    %c8_43 = arith.constant 8 : index
    %c0_44 = arith.constant 0 : index
    %129 = vector.load %arg4[%c8_43, %c0_44] : memref<36x4xf32, #tpu.memory_space<vmem>>, vector<4x4xf32>
    %cst_45 = arith.constant dense<0.000000e+00> : vector<4x512xf32>
    %130 = tpu.matmul %129, %128, %cst_45 {dimension_numbers = #tpu.dot_dimension_numbers<[1], [0], [0], [1], [0, 0, 1, 1], [], []>} : vector<4x4xf32>, vector<4x512xf32>, vector<4x512xf32> -> vector<4x512xf32>
    %131 = arith.addf %125, %130 : vector<4x512xf32>
    %132 = vector.extract_strided_slice %112 {offsets = [0, 16], sizes = [4, 512], strides = [1, 1]} : vector<4x546xf32> to vector<4x512xf32>
    %133 = vector.broadcast %10 : vector<1x512xf32> to vector<4x512xf32>
    %134 = arith.mulf %132, %133 : vector<4x512xf32>
    %c12_46 = arith.constant 12 : index
    %c0_47 = arith.constant 0 : index
    %135 = vector.load %arg4[%c12_46, %c0_47] : memref<36x4xf32, #tpu.memory_space<vmem>>, vector<4x4xf32>
    %cst_48 = arith.constant dense<0.000000e+00> : vector<4x512xf32>
    %136 = tpu.matmul %135, %134, %cst_48 {dimension_numbers = #tpu.dot_dimension_numbers<[1], [0], [0], [1], [0, 0, 1, 1], [], []>} : vector<4x4xf32>, vector<4x512xf32>, vector<4x512xf32> -> vector<4x512xf32>
    %137 = arith.addf %131, %136 : vector<4x512xf32>
    %138 = vector.extract_strided_slice %112 {offsets = [0, 17], sizes = [4, 512], strides = [1, 1]} : vector<4x546xf32> to vector<4x512xf32>
    %c16_49 = arith.constant 16 : index
    %c0_50 = arith.constant 0 : index
    %139 = vector.load %arg4[%c16_49, %c0_50] : memref<36x4xf32, #tpu.memory_space<vmem>>, vector<4x4xf32>
    %cst_51 = arith.constant dense<0.000000e+00> : vector<4x512xf32>
    %140 = tpu.matmul %139, %138, %cst_51 {dimension_numbers = #tpu.dot_dimension_numbers<[1], [0], [0], [1], [0, 0, 1, 1], [], []>} : vector<4x4xf32>, vector<4x512xf32>, vector<4x512xf32> -> vector<4x512xf32>
    %141 = arith.addf %137, %140 : vector<4x512xf32>
    %142 = vector.extract_strided_slice %112 {offsets = [0, 18], sizes = [4, 512], strides = [1, 1]} : vector<4x546xf32> to vector<4x512xf32>
    %143 = vector.broadcast %14 : vector<1x512xf32> to vector<4x512xf32>
    %144 = arith.mulf %142, %143 : vector<4x512xf32>
    %c20_52 = arith.constant 20 : index
    %c0_53 = arith.constant 0 : index
    %145 = vector.load %arg4[%c20_52, %c0_53] : memref<36x4xf32, #tpu.memory_space<vmem>>, vector<4x4xf32>
    %cst_54 = arith.constant dense<0.000000e+00> : vector<4x512xf32>
    %146 = tpu.matmul %145, %144, %cst_54 {dimension_numbers = #tpu.dot_dimension_numbers<[1], [0], [0], [1], [0, 0, 1, 1], [], []>} : vector<4x4xf32>, vector<4x512xf32>, vector<4x512xf32> -> vector<4x512xf32>
    %147 = arith.addf %141, %146 : vector<4x512xf32>
    %148 = vector.extract_strided_slice %112 {offsets = [0, 32], sizes = [4, 512], strides = [1, 1]} : vector<4x546xf32> to vector<4x512xf32>
    %149 = vector.broadcast %25 : vector<1x512xf32> to vector<4x512xf32>
    %150 = arith.mulf %148, %149 : vector<4x512xf32>
    %c24_55 = arith.constant 24 : index
    %c0_56 = arith.constant 0 : index
    %151 = vector.load %arg4[%c24_55, %c0_56] : memref<36x4xf32, #tpu.memory_space<vmem>>, vector<4x4xf32>
    %cst_57 = arith.constant dense<0.000000e+00> : vector<4x512xf32>
    %152 = tpu.matmul %151, %150, %cst_57 {dimension_numbers = #tpu.dot_dimension_numbers<[1], [0], [0], [1], [0, 0, 1, 1], [], []>} : vector<4x4xf32>, vector<4x512xf32>, vector<4x512xf32> -> vector<4x512xf32>
    %153 = arith.addf %147, %152 : vector<4x512xf32>
    %154 = vector.extract_strided_slice %112 {offsets = [0, 33], sizes = [4, 512], strides = [1, 1]} : vector<4x546xf32> to vector<4x512xf32>
    %155 = vector.broadcast %22 : vector<1x512xf32> to vector<4x512xf32>
    %156 = arith.mulf %154, %155 : vector<4x512xf32>
    %c28_58 = arith.constant 28 : index
    %c0_59 = arith.constant 0 : index
    %157 = vector.load %arg4[%c28_58, %c0_59] : memref<36x4xf32, #tpu.memory_space<vmem>>, vector<4x4xf32>
    %cst_60 = arith.constant dense<0.000000e+00> : vector<4x512xf32>
    %158 = tpu.matmul %157, %156, %cst_60 {dimension_numbers = #tpu.dot_dimension_numbers<[1], [0], [0], [1], [0, 0, 1, 1], [], []>} : vector<4x4xf32>, vector<4x512xf32>, vector<4x512xf32> -> vector<4x512xf32>
    %159 = arith.addf %153, %158 : vector<4x512xf32>
    %160 = vector.extract_strided_slice %112 {offsets = [0, 34], sizes = [4, 512], strides = [1, 1]} : vector<4x546xf32> to vector<4x512xf32>
    %161 = vector.broadcast %26 : vector<1x512xf32> to vector<4x512xf32>
    %162 = arith.mulf %160, %161 : vector<4x512xf32>
    %c32_61 = arith.constant 32 : index
    %c0_62 = arith.constant 0 : index
    %163 = vector.load %arg4[%c32_61, %c0_62] : memref<36x4xf32, #tpu.memory_space<vmem>>, vector<4x4xf32>
    %cst_63 = arith.constant dense<0.000000e+00> : vector<4x512xf32>
    %164 = tpu.matmul %163, %162, %cst_63 {dimension_numbers = #tpu.dot_dimension_numbers<[1], [0], [0], [1], [0, 0, 1, 1], [], []>} : vector<4x4xf32>, vector<4x512xf32>, vector<4x512xf32> -> vector<4x512xf32>
    %165 = arith.addf %159, %164 : vector<4x512xf32>
    %cst_64 = arith.constant dense<0.000000e+00> : vector<4xf32>
    %166 = vector.multi_reduction <add>, %165, %cst_64 [1] : vector<4x512xf32> to vector<4xf32>
    %167 = vector.shape_cast %166 : vector<4xf32> to vector<4x1xf32>
    %cst_65 = arith.constant 0.001953125 : f32
    %168 = vector.broadcast %cst_65 : f32 to vector<4x1xf32>
    %169 = arith.mulf %167, %168 : vector<4x1xf32>
    %170 = arith.mulf %165, %165 : vector<4x512xf32>
    %cst_66 = arith.constant dense<0.000000e+00> : vector<4xf32>
    %171 = vector.multi_reduction <add>, %170, %cst_66 [1] : vector<4x512xf32> to vector<4xf32>
    %172 = vector.shape_cast %171 : vector<4xf32> to vector<4x1xf32>
    %cst_67 = arith.constant 0.001953125 : f32
    %173 = vector.broadcast %cst_67 : f32 to vector<4x1xf32>
    %174 = arith.mulf %172, %173 : vector<4x1xf32>
    %175 = arith.mulf %169, %169 : vector<4x1xf32>
    %176 = arith.subf %174, %175 : vector<4x1xf32>
    %cst_68 = arith.constant 0.000000e+00 : f32
    %177 = vector.broadcast %cst_68 : f32 to vector<4x1xf32>
    %178 = arith.maximumf %176, %177 : vector<4x1xf32>
    %179 = vector.broadcast %169 : vector<4x1xf32> to vector<4x512xf32>
    %180 = arith.subf %165, %179 : vector<4x512xf32>
    %cst_69 = arith.constant 9.99999974E-6 : f32
    %181 = vector.broadcast %cst_69 : f32 to vector<4x1xf32>
    %182 = arith.addf %178, %181 : vector<4x1xf32>
    %183 = math.rsqrt %182 : vector<4x1xf32>
    %184 = vector.broadcast %183 : vector<4x1xf32> to vector<4x512xf32>
    %185 = arith.mulf %180, %184 : vector<4x512xf32>
    %c0_70 = arith.constant 0 : index
    %c0_71 = arith.constant 0 : index
    %186 = vector.load %arg5[%c0_70, %c0_71] : memref<4x1xf32, #tpu.memory_space<vmem>>, vector<4x1xf32>
    %187 = vector.broadcast %186 : vector<4x1xf32> to vector<4x512xf32>
    %188 = arith.mulf %185, %187 : vector<4x512xf32>
    %c0_72 = arith.constant 0 : index
    %c0_73 = arith.constant 0 : index
    %189 = vector.load %arg6[%c0_72, %c0_73] : memref<4x1xf32, #tpu.memory_space<vmem>>, vector<4x1xf32>
    %190 = vector.broadcast %189 : vector<4x1xf32> to vector<4x512xf32>
    %191 = arith.addf %188, %190 : vector<4x512xf32>
    %192 = arith.addf %191, %110 : vector<4x512xf32>
    %cst_74 = arith.constant 0.000000e+00 : f32
    %193 = vector.broadcast %cst_74 : f32 to vector<4x512xf32>
    %194 = arith.maximumf %192, %193 : vector<4x512xf32>
    %c0_75 = arith.constant 0 : index
    %c0_76 = arith.constant 0 : index
    %195 = vector.load %arg7[%c0_75, %c0_76] : memref<4x512xf32, #tpu.memory_space<vmem>>, vector<4x512xf32>
    tpu.vector_store %arg7[%c0_75, %c0_76], %194 {strides = array<i32>} : memref<4x512xf32, #tpu.memory_space<vmem>>, vector<4x512xf32>,
    return
  }
}

</mosaic_0001>

<llo_original>
// kernel: up_block_forward.1
$region0: #{up_block_forward.1}
  #allocation0 [shape = 'u32[]', space=smem, size = 0x4, offset = 0x4, fixed_abs, tag = 'smem constant byte address 0x4 - core index']
  #allocation1 [shape = 'u32[144,128]{1,0:T(1,128)}', space=vmem, size = 0x12000, scoped, tag = 'internal scratch']
  %s0 = inlined_call_operand.vmem [shape: f32[8,512], index: 0, kind: input, shape index: {}]
  %s1 = inlined_call_operand.vmem [shape: f32[36,8], index: 1, kind: input, shape index: {}]
  %s2 = inlined_call_operand.vmem [shape: f32[4,1], index: 2, kind: input, shape index: {}]
  %s3 = inlined_call_operand.vmem [shape: f32[4,1], index: 3, kind: input, shape index: {}]
  %s4 = inlined_call_operand.vmem [shape: f32[36,4], index: 4, kind: input, shape index: {}]
  %s5 = inlined_call_operand.vmem [shape: f32[4,1], index: 5, kind: input, shape index: {}]
  %s6 = inlined_call_operand.vmem [shape: f32[4,1], index: 6, kind: input, shape index: {}]
  %s7 = inlined_call_operand.vmem [shape: f32[4,512], index: 7, kind: output, shape index: {}]
  %s8 = sld [smem:[#allocation0]]
  $region38: #{up_block_forward.1} parent=0
    _
  %s10 = ssub.s32 1, %s8
  %s11 = scalar_select 0, %s10, %s8
  // Predicated region
  $region2: #{up_block_forward.1} parent=0 // pred_check
    _
  $region3: #{up_block_forward.1} parent=0 // pred_check_branch
    %13 = sbr.rel (0) target = $region5
  $region4: #{up_block_forward.1} parent=0 // pred_region
    _
  $region5: #{up_block_forward.1} parent=0 // pred_fallthru
    _
  // Predicated region
  $region6: #{up_block_forward.1} parent=0 // pred_check
    _
  $region7: #{up_block_forward.1} parent=0 // pred_check_branch
    %15 = sbr.rel (0) target = $region9
  $region8: #{up_block_forward.1} parent=0 // pred_region
    _
  $region9: #{up_block_forward.1} parent=0 // pred_fallthru
    _
  // Predicated region
  $region10: #{up_block_forward.1} parent=0 // pred_check
    _
  $region11: #{up_block_forward.1} parent=0 // pred_check_branch
    %17 = sbr.rel (0) target = $region13
  $region12: #{up_block_forward.1} parent=0 // pred_region
    _
  $region13: #{up_block_forward.1} parent=0 // pred_fallthru
    _
  // Predicated region
  $region14: #{up_block_forward.1} parent=0 // pred_check
    _
  $region15: #{up_block_forward.1} parent=0 // pred_check_branch
    %19 = sbr.rel (0) target = $region17
  $region16: #{up_block_forward.1} parent=0 // pred_region
    _
  $region17: #{up_block_forward.1} parent=0 // pred_fallthru
    _
  // Predicated region
  $region18: #{up_block_forward.1} parent=0 // pred_check
    _
  $region19: #{up_block_forward.1} parent=0 // pred_check_branch
    %21 = sbr.rel (0) target = $region21
  $region20: #{up_block_forward.1} parent=0 // pred_region
    _
  $region21: #{up_block_forward.1} parent=0 // pred_fallthru
    _
  // Predicated region
  $region22: #{up_block_forward.1} parent=0 // pred_check
    _
  $region23: #{up_block_forward.1} parent=0 // pred_check_branch
    %23 = sbr.rel (0) target = $region25
  $region24: #{up_block_forward.1} parent=0 // pred_region
    _
  $region25: #{up_block_forward.1} parent=0 // pred_fallthru
    _
  // Predicated region
  $region26: #{up_block_forward.1} parent=0 // pred_check
    _
  $region27: #{up_block_forward.1} parent=0 // pred_check_branch
    %25 = sbr.rel (0) target = $region29
  $region28: #{up_block_forward.1} parent=0 // pred_region
    _
  $region29: #{up_block_forward.1} parent=0 // pred_fallthru
    _
  %v26 = vlaneseq
  %v27 = vand.u32 %v26, 127
  %v28 = vadd.s32 %v27, 128
  %v29 = vadd.s32 %v27, 256
  %v30 = vadd.s32 %v27, 384
  %v31 = vand.u32 %v27, 15
  %v32 = vand.u32 %v28, 15
  %v33 = vand.u32 %v29, 15
  %v34 = vand.u32 %v30, 15
  %v35 = vshra.s32 %v27, 4
  %v36 = vshra.s32 %v28, 4
  %v37 = vshra.s32 %v29, 4
  %v38 = vshra.s32 %v30, 4
  %v39 = vand.u32 %v35, 15
  %v40 = vand.u32 %v36, 15
  %v41 = vand.u32 %v37, 15
  %v42 = vand.u32 %v38, 15
  %vm43 = vcmp.ge.s32.totalorder %v31, 1
  %vm44 = vcmp.ge.s32.totalorder %v32, 1
  %vm45 = vcmp.ge.s32.totalorder %v33, 1
  %vm46 = vcmp.ge.s32.totalorder %v34, 1
  %v47 = vsel %vm43, 1, 0
  %v48 = vsel %vm44, 1, 0
  %v49 = vsel %vm45, 1, 0
  %v50 = vsel %vm46, 1, 0
  %v51 = vcvt.s32.f32 %v47
  %v52 = vcvt.s32.f32 %v48
  %v53 = vcvt.s32.f32 %v49
  %v54 = vcvt.s32.f32 %v50
  %vm55 = vcmp.le.s32.totalorder %v31, 14
  %vm56 = vcmp.le.s32.totalorder %v32, 14
  %vm57 = vcmp.le.s32.totalorder %v33, 14
  %vm58 = vcmp.le.s32.totalorder %v34, 14
  %v59 = vsel %vm55, 1, 0
  %v60 = vsel %vm56, 1, 0
  %v61 = vsel %vm57, 1, 0
  %v62 = vsel %vm58, 1, 0
  %v63 = vcvt.s32.f32 %v59
  %v64 = vcvt.s32.f32 %v60
  %v65 = vcvt.s32.f32 %v61
  %v66 = vcvt.s32.f32 %v62
  %vm67 = vcmp.ge.s32.totalorder %v39, 1
  %vm68 = vcmp.ge.s32.totalorder %v40, 1
  %vm69 = vcmp.ge.s32.totalorder %v41, 1
  %vm70 = vcmp.ge.s32.totalorder %v42, 1
  %v71 = vsel %vm67, 1, 0
  %v72 = vsel %vm68, 1, 0
  %v73 = vsel %vm69, 1, 0
  %v74 = vsel %vm70, 1, 0
  %v75 = vcvt.s32.f32 %v71
  %v76 = vcvt.s32.f32 %v72
  %v77 = vcvt.s32.f32 %v73
  %v78 = vcvt.s32.f32 %v74
  %vm79 = vcmp.le.s32.totalorder %v39, 14
  %vm80 = vcmp.le.s32.totalorder %v40, 14
  %vm81 = vcmp.le.s32.totalorder %v41, 14
  %vm82 = vcmp.le.s32.totalorder %v42, 14
  %v83 = vsel %vm79, 1, 0
  %v84 = vsel %vm80, 1, 0
  %v85 = vsel %vm81, 1, 0
  %v86 = vsel %vm82, 1, 0
  %v87 = vcvt.s32.f32 %v83
  %v88 = vcvt.s32.f32 %v84
  %v89 = vcvt.s32.f32 %v85
  %v90 = vcvt.s32.f32 %v86
  %v91 = vmul.f32 %v51, %v75
  %v92 = vmul.f32 %v52, %v76
  %v93 = vmul.f32 %v53, %v77
  %v94 = vmul.f32 %v54, %v78
  %v95 = vmul.f32 %v63, %v75
  %v96 = vmul.f32 %v64, %v76
  %v97 = vmul.f32 %v65, %v77
  %v98 = vmul.f32 %v66, %v78
  %v99 = vmul.f32 %v51, %v87
  %v100 = vmul.f32 %v52, %v88
  %v101 = vmul.f32 %v53, %v89
  %v102 = vmul.f32 %v54, %v90
  %v103 = vmul.f32 %v63, %v87
  %v104 = vmul.f32 %v64, %v88
  %v105 = vmul.f32 %v65, %v89
  %v106 = vmul.f32 %v66, %v90
  %v107 = vld [vmem:[%s0] sm:$0xff]
  %v108 = vld [vmem:[%s0 + $0x8] sm:$0xff]
  %v109 = vld [vmem:[%s0 + $0x10] sm:$0xff]
  %v110 = vld [vmem:[%s0 + $0x18] sm:$0xff]
  %115 = vrot.lane.b32.xlu0 %v107, 17
  %v116 = vpop.permute.xlu0 %115
  %117 = vrot.lane.b32.xlu0 %v108, 17
  %v118 = vpop.permute.xlu0 %117
  %119 = vrot.lane.b32.xlu0 %v109, 17
  %v120 = vpop.permute.xlu0 %119
  %121 = vrot.lane.b32.xlu0 %v110, 17
  %v122 = vpop.permute.xlu0 %121
  %vm123 = vcmask 138240
  %v124 = vsel %vm123, %v116, %v118
  %v125 = vsel %vm123, %v118, %v120
  %v126 = vsel %vm123, %v120, %v122
  %v132 = vsel %vm123, 0.0, %v116
  %v133 = vsel %vm123, %v122, 0.0
  %v134 = vmul.f32 %v132, %v91
  %v135 = vmul.f32 %v124, %v92
  %v136 = vmul.f32 %v125, %v93
  %v137 = vmul.f32 %v126, %v94
  %v138 = vld [vmem:[%s1] sm:$0xf]
  %143 = vrot.lane.b32.xlu0 %v75, 1
  %v144 = vpop.permute.xlu0 %143
  %145 = vrot.lane.b32.xlu0 %v76, 1
  %v146 = vpop.permute.xlu0 %145
  %147 = vrot.lane.b32.xlu0 %v77, 1
  %v148 = vpop.permute.xlu0 %147
  %149 = vrot.lane.b32.xlu0 %v78, 1
  %v150 = vpop.permute.xlu0 %149
  %vm151 = vcmask 7168
  %v152 = vsel %vm151, %v144, %v146
  %v153 = vsel %vm151, %v146, %v148
  %v154 = vsel %vm151, %v148, %v150
  %v160 = vmul.f32 %v132, %v144
  %v161 = vmul.f32 %v124, %v152
  %v162 = vmul.f32 %v125, %v153
  %v163 = vmul.f32 %v126, %v154
  %v164 = vmul.f32 %v133, %v150
  %v165 = vld [vmem:[%s1 + $0x4] sm:$0xf]
  %171 = vrot.lane.b32.xlu0 %v160, 127
  %v172 = vpop.permute.xlu0 %171
  %173 = vrot.lane.b32.xlu0 %v161, 127
  %v174 = vpop.permute.xlu0 %173
  %175 = vrot.lane.b32.xlu0 %v162, 127
  %v176 = vpop.permute.xlu0 %175
  %177 = vrot.lane.b32.xlu0 %v163, 127
  %v178 = vpop.permute.xlu0 %177
  %179 = vrot.lane.b32.xlu0 %v164, 127
  %v180 = vpop.permute.xlu0 %179
  %vm181 = vcmask 1039360
  %v182 = vsel %vm181, %v172, %v174
  %v183 = vsel %vm181, %v174, %v176
  %v184 = vsel %vm181, %v176, %v178
  %v185 = vsel %vm181, %v178, %v180
  %vm190 = vcmask 64512
  %v192 = vsel %vm190, %v165, 0
  %194 = vmatprep.subr.mxu0 %v183
  %195 = vmatpush1.msra.mxu0 %v182
  %196 = vmatprep.subr.mxu0 0.0
  %197 = vmatpush1.msra.mxu0 0.0
  %198 = vmatprep.subr.mxu0 0.0
  %199 = vmatpush1.msra.mxu0 0.0
  %200 = vmatprep.subr.mxu0 0.0
  %201 = vmatpush1.msra.mxu0 0.0
  %202 = vmatprep.subr.mxu0 0.0
  %203 = vmatpush1.msra.mxu0 0.0
  %204 = vmatprep.subr.mxu0 0.0
  %205 = vmatpush1.msra.mxu0 0.0
  %206 = vmatprep.subr.mxu0 0.0
  %207 = vmatpush1.msra.mxu0 0.0
  %208 = vmatprep.subr.mxu0 0.0
  %209 = vmatpush1.msra.mxu0 0.0
  %210 = vmatprep.subr.mxu0 0.0
  %211 = vmatpush1.msra.mxu0 0.0
  %212 = vmatprep.subr.mxu0 0.0
  %213 = vmatpush1.msra.mxu0 0.0
  %214 = vmatprep.subr.mxu0 0.0
  %215 = vmatpush1.msra.mxu0 0.0
  %216 = vmatprep.subr.mxu0 0.0
  %217 = vmatpush1.msra.mxu0 0.0
  %218 = vmatprep.subr.mxu0 0.0
  %219 = vmatpush1.msra.mxu0 0.0
  %220 = vmatprep.subr.mxu0 0.0
  %221 = vmatpush1.msra.mxu0 0.0
  %222 = vmatprep.subr.mxu0 0.0
  %223 = vmatpush1.msra.mxu0 0.0
  %224 = vmatprep.subr.mxu0 0.0
  %225 = vmatpush1.msra.mxu0 0.0
  %226 = vmatprep.subr.mxu0 0.0
  %227 = vmatpush1.msra.mxu0 0.0
  %228 = vmatprep.subr.mxu0 0.0
  %229 = vmatpush1.msra.mxu0 0.0
  %230 = vmatprep.subr.mxu0 0.0
  %231 = vmatpush1.msra.mxu0 0.0
  %232 = vmatprep.subr.mxu0 0.0
  %233 = vmatpush1.msra.mxu0 0.0
  %234 = vmatprep.subr.mxu0 0.0
  %235 = vmatpush1.msra.mxu0 0.0
  %236 = vmatprep.subr.mxu0 0.0
  %237 = vmatpush1.msra.mxu0 0.0
  %238 = vmatprep.subr.mxu0 0.0
  %239 = vmatpush1.msra.mxu0 0.0
  %240 = vmatprep.subr.mxu0 0.0
  %241 = vmatpush1.msra.mxu0 0.0
  %242 = vmatprep.subr.mxu0 0.0
  %243 = vmatpush1.msra.mxu0 0.0
  %244 = vmatprep.subr.mxu0 0.0
  %245 = vmatpush1.msra.mxu0 0.0
  %246 = vmatprep.subr.mxu0 0.0
  %247 = vmatpush1.msra.mxu0 0.0
  %248 = vmatprep.subr.mxu0 0.0
  %249 = vmatpush1.msra.mxu0 0.0
  %250 = vmatprep.subr.mxu0 0.0
  %251 = vmatpush1.msra.mxu0 0.0
  %252 = vmatprep.subr.mxu0 0.0
  %253 = vmatpush1.msra.mxu0 0.0
  %254 = vmatprep.subr.mxu0 0.0
  %255 = vmatpush1.msra.mxu0 0.0
  %256 = vmatprep.subr.mxu0 0.0
  %257 = vmatpush1.msra.mxu0 0.0
  %258 = vmatprep.mubr.f32.mxu0 0.0
  %259 = vmatmul.mubr.f32.gmra.mrb[0].mxu0 %v192
  %v260 = vpop.f32.mrb[0].mxu0
  %v261 = vadd.f32 0.0, %v260
  %v262 = vpop.f32.mrb[0].mxu0
  %v263 = vadd.f32 0.0, %v262
  %264 = vdwg.mxu0
  %265 = vmatprep.subr.mxu0 %v185
  %266 = vmatpush1.msra.mxu0 %v184
  %267 = vmatprep.subr.mxu0 0.0
  %268 = vmatpush1.msra.mxu0 0.0
  %269 = vmatprep.subr.mxu0 0.0
  %270 = vmatpush1.msra.mxu0 0.0
  %271 = vmatprep.subr.mxu0 0.0
  %272 = vmatpush1.msra.mxu0 0.0
  %273 = vmatprep.subr.mxu0 0.0
  %274 = vmatpush1.msra.mxu0 0.0
  %275 = vmatprep.subr.mxu0 0.0
  %276 = vmatpush1.msra.mxu0 0.0
  %277 = vmatprep.subr.mxu0 0.0
  %278 = vmatpush1.msra.mxu0 0.0
  %279 = vmatprep.subr.mxu0 0.0
  %280 = vmatpush1.msra.mxu0 0.0
  %281 = vmatprep.subr.mxu0 0.0
  %282 = vmatpush1.msra.mxu0 0.0
  %283 = vmatprep.subr.mxu0 0.0
  %284 = vmatpush1.msra.mxu0 0.0
  %285 = vmatprep.subr.mxu0 0.0
  %286 = vmatpush1.msra.mxu0 0.0
  %287 = vmatprep.subr.mxu0 0.0
  %288 = vmatpush1.msra.mxu0 0.0
  %289 = vmatprep.subr.mxu0 0.0
  %290 = vmatpush1.msra.mxu0 0.0
  %291 = vmatprep.subr.mxu0 0.0
  %292 = vmatpush1.msra.mxu0 0.0
  %293 = vmatprep.subr.mxu0 0.0
  %294 = vmatpush1.msra.mxu0 0.0
  %295 = vmatprep.subr.mxu0 0.0
  %296 = vmatpush1.msra.mxu0 0.0
  %297 = vmatprep.subr.mxu0 0.0
  %298 = vmatpush1.msra.mxu0 0.0
  %299 = vmatprep.subr.mxu0 0.0
  %300 = vmatpush1.msra.mxu0 0.0
  %301 = vmatprep.subr.mxu0 0.0
  %302 = vmatpush1.msra.mxu0 0.0
  %303 = vmatprep.subr.mxu0 0.0
  %304 = vmatpush1.msra.mxu0 0.0
  %305 = vmatprep.subr.mxu0 0.0
  %306 = vmatpush1.msra.mxu0 0.0
  %307 = vmatprep.subr.mxu0 0.0
  %308 = vmatpush1.msra.mxu0 0.0
  %309 = vmatprep.subr.mxu0 0.0
  %310 = vmatpush1.msra.mxu0 0.0
  %311 = vmatprep.subr.mxu0 0.0
  %312 = vmatpush1.msra.mxu0 0.0
  %313 = vmatprep.subr.mxu0 0.0
  %314 = vmatpush1.msra.mxu0 0.0
  %315 = vmatprep.subr.mxu0 0.0
  %316 = vmatpush1.msra.mxu0 0.0
  %317 = vmatprep.subr.mxu0 0.0
  %318 = vmatpush1.msra.mxu0 0.0
  %319 = vmatprep.subr.mxu0 0.0
  %320 = vmatpush1.msra.mxu0 0.0
  %321 = vmatprep.subr.mxu0 0.0
  %322 = vmatpush1.msra.mxu0 0.0
  %323 = vmatprep.subr.mxu0 0.0
  %324 = vmatpush1.msra.mxu0 0.0
  %325 = vmatprep.subr.mxu0 0.0
  %326 = vmatpush1.msra.mxu0 0.0
  %327 = vmatprep.subr.mxu0 0.0
  %328 = vmatpush1.msra.mxu0 0.0
  %329 = vmatprep.mubr.f32.mxu0 0.0
  %330 = vmatmul.mubr.f32.gmra.mrb[0].mxu0 %v192
  %v331 = vpop.f32.mrb[0].mxu0
  %v332 = vadd.f32 0.0, %v331
  %v333 = vpop.f32.mrb[0].mxu0
  %v334 = vadd.f32 0.0, %v333
  %335 = vdwg.mxu0
  %v337 = vsel %vm190, %v138, 0
  %339 = vmatprep.subr.mxu0 %v135
  %340 = vmatpush1.msra.mxu0 %v134
  %341 = vmatprep.subr.mxu0 0.0
  %342 = vmatpush1.msra.mxu0 0.0
  %343 = vmatprep.subr.mxu0 0.0
  %344 = vmatpush1.msra.mxu0 0.0
  %345 = vmatprep.subr.mxu0 0.0
  %346 = vmatpush1.msra.mxu0 0.0
  %347 = vmatprep.subr.mxu0 0.0
  %348 = vmatpush1.msra.mxu0 0.0
  %349 = vmatprep.subr.mxu0 0.0
  %350 = vmatpush1.msra.mxu0 0.0
  %351 = vmatprep.subr.mxu0 0.0
  %352 = vmatpush1.msra.mxu0 0.0
  %353 = vmatprep.subr.mxu0 0.0
  %354 = vmatpush1.msra.mxu0 0.0
  %355 = vmatprep.subr.mxu0 0.0
  %356 = vmatpush1.msra.mxu0 0.0
  %357 = vmatprep.subr.mxu0 0.0
  %358 = vmatpush1.msra.mxu0 0.0
  %359 = vmatprep.subr.mxu0 0.0
  %360 = vmatpush1.msra.mxu0 0.0
  %361 = vmatprep.subr.mxu0 0.0
  %362 = vmatpush1.msra.mxu0 0.0
  %363 = vmatprep.subr.mxu0 0.0
  %364 = vmatpush1.msra.mxu0 0.0
  %365 = vmatprep.subr.mxu0 0.0
  %366 = vmatpush1.msra.mxu0 0.0
  %367 = vmatprep.subr.mxu0 0.0
  %368 = vmatpush1.msra.mxu0 0.0
  %369 = vmatprep.subr.mxu0 0.0
  %370 = vmatpush1.msra.mxu0 0.0
  %371 = vmatprep.subr.mxu0 0.0
  %372 = vmatpush1.msra.mxu0 0.0
  %373 = vmatprep.subr.mxu0 0.0
  %374 = vmatpush1.msra.mxu0 0.0
  %375 = vmatprep.subr.mxu0 0.0
  %376 = vmatpush1.msra.mxu0 0.0
  %377 = vmatprep.subr.mxu0 0.0
  %378 = vmatpush1.msra.mxu0 0.0
  %379 = vmatprep.subr.mxu0 0.0
  %380 = vmatpush1.msra.mxu0 0.0
  %381 = vmatprep.subr.mxu0 0.0
  %382 = vmatpush1.msra.mxu0 0.0
  %383 = vmatprep.subr.mxu0 0.0
  %384 = vmatpush1.msra.mxu0 0.0
  %385 = vmatprep.subr.mxu0 0.0
  %386 = vmatpush1.msra.mxu0 0.0
  %387 = vmatprep.subr.mxu0 0.0
  %388 = vmatpush1.msra.mxu0 0.0
  %389 = vmatprep.subr.mxu0 0.0
  %390 = vmatpush1.msra.mxu0 0.0
  %391 = vmatprep.subr.mxu0 0.0
  %392 = vmatpush1.msra.mxu0 0.0
  %393 = vmatprep.subr.mxu0 0.0
  %394 = vmatpush1.msra.mxu0 0.0
  %395 = vmatprep.subr.mxu0 0.0
  %396 = vmatpush1.msra.mxu0 0.0
  %397 = vmatprep.subr.mxu0 0.0
  %398 = vmatpush1.msra.mxu0 0.0
  %399 = vmatprep.subr.mxu0 0.0
  %400 = vmatpush1.msra.mxu0 0.0
  %401 = vmatprep.subr.mxu0 0.0
  %402 = vmatpush1.msra.mxu0 0.0
  %403 = vmatprep.mubr.f32.mxu0 0.0
  %404 = vmatmul.mubr.f32.gmra.mrb[0].mxu0 %v337
  %v405 = vpop.f32.mrb[0].mxu0
  %v406 = vadd.f32 %v261, %v405
  %v407 = vpop.f32.mrb[0].mxu0
  %v408 = vadd.f32 %v263, %v407
  %409 = vdwg.mxu0
  %410 = vmatprep.subr.mxu0 %v137
  %411 = vmatpush1.msra.mxu0 %v136
  %412 = vmatprep.subr.mxu0 0.0
  %413 = vmatpush1.msra.mxu0 0.0
  %414 = vmatprep.subr.mxu0 0.0
  %415 = vmatpush1.msra.mxu0 0.0
  %416 = vmatprep.subr.mxu0 0.0
  %417 = vmatpush1.msra.mxu0 0.0
  %418 = vmatprep.subr.mxu0 0.0
  %419 = vmatpush1.msra.mxu0 0.0
  %420 = vmatprep.subr.mxu0 0.0
  %421 = vmatpush1.msra.mxu0 0.0
  %422 = vmatprep.subr.mxu0 0.0
  %423 = vmatpush1.msra.mxu0 0.0
  %424 = vmatprep.subr.mxu0 0.0
  %425 = vmatpush1.msra.mxu0 0.0
  %426 = vmatprep.subr.mxu0 0.0
  %427 = vmatpush1.msra.mxu0 0.0
  %428 = vmatprep.subr.mxu0 0.0
  %429 = vmatpush1.msra.mxu0 0.0
  %430 = vmatprep.subr.mxu0 0.0
  %431 = vmatpush1.msra.mxu0 0.0
  %432 = vmatprep.subr.mxu0 0.0
  %433 = vmatpush1.msra.mxu0 0.0
  %434 = vmatprep.subr.mxu0 0.0
  %435 = vmatpush1.msra.mxu0 0.0
  %436 = vmatprep.subr.mxu0 0.0
  %437 = vmatpush1.msra.mxu0 0.0
  %438 = vmatprep.subr.mxu0 0.0
  %439 = vmatpush1.msra.mxu0 0.0
  %440 = vmatprep.subr.mxu0 0.0
  %441 = vmatpush1.msra.mxu0 0.0
  %442 = vmatprep.subr.mxu0 0.0
  %443 = vmatpush1.msra.mxu0 0.0
  %444 = vmatprep.subr.mxu0 0.0
  %445 = vmatpush1.msra.mxu0 0.0
  %446 = vmatprep.subr.mxu0 0.0
  %447 = vmatpush1.msra.mxu0 0.0
  %448 = vmatprep.subr.mxu0 0.0
  %449 = vmatpush1.msra.mxu0 0.0
  %450 = vmatprep.subr.mxu0 0.0
  %451 = vmatpush1.msra.mxu0 0.0
  %452 = vmatprep.subr.mxu0 0.0
  %453 = vmatpush1.msra.mxu0 0.0
  %454 = vmatprep.subr.mxu0 0.0
  %455 = vmatpush1.msra.mxu0 0.0
  %456 = vmatprep.subr.mxu0 0.0
  %457 = vmatpush1.msra.mxu0 0.0
  %458 = vmatprep.subr.mxu0 0.0
  %459 = vmatpush1.msra.mxu0 0.0
  %460 = vmatprep.subr.mxu0 0.0
  %461 = vmatpush1.msra.mxu0 0.0
  %462 = vmatprep.subr.mxu0 0.0
  %463 = vmatpush1.msra.mxu0 0.0
  %464 = vmatprep.subr.mxu0 0.0
  %465 = vmatpush1.msra.mxu0 0.0
  %466 = vmatprep.subr.mxu0 0.0
  %467 = vmatpush1.msra.mxu0 0.0
  %468 = vmatprep.subr.mxu0 0.0
  %469 = vmatpush1.msra.mxu0 0.0
  %470 = vmatprep.subr.mxu0 0.0
  %471 = vmatpush1.msra.mxu0 0.0
  %472 = vmatprep.subr.mxu0 0.0
  %473 = vmatpush1.msra.mxu0 0.0
  %474 = vmatprep.mubr.f32.mxu0 0.0
  %475 = vmatmul.mubr.f32.gmra.mrb[0].mxu0 %v337
  %v476 = vpop.f32.mrb[0].mxu0
  %v477 = vadd.f32 %v332, %v476
  %v478 = vpop.f32.mrb[0].mxu0
  %v479 = vadd.f32 %v334, %v478
  %480 = vdwg.mxu0
  %485 = vrot.lane.b32.xlu0 %v95, 2
  %v486 = vpop.permute.xlu0 %485
  %487 = vrot.lane.b32.xlu0 %v96, 2
  %v488 = vpop.permute.xlu0 %487
  %489 = vrot.lane.b32.xlu0 %v97, 2
  %v490 = vpop.permute.xlu0 %489
  %491 = vrot.lane.b32.xlu0 %v98, 2
  %v492 = vpop.permute.xlu0 %491
  %vm493 = vcmask 15360
  %v494 = vsel %vm493, %v486, %v488
  %v495 = vsel %vm493, %v488, %v490
  %v496 = vsel %vm493, %v490, %v492
  %v502 = vmul.f32 %v132, %v486
  %v503 = vmul.f32 %v124, %v494
  %v504 = vmul.f32 %v125, %v495
  %v505 = vmul.f32 %v126, %v496
  %v506 = vmul.f32 %v133, %v492
  %v507 = vld [vmem:[%s1 + $0x8] sm:$0xf]
  %513 = vrot.lane.b32.xlu0 %v502, 126
  %v514 = vpop.permute.xlu0 %513
  %515 = vrot.lane.b32.xlu0 %v503, 126
  %v516 = vpop.permute.xlu0 %515
  %517 = vrot.lane.b32.xlu0 %v504, 126
  %v518 = vpop.permute.xlu0 %517
  %519 = vrot.lane.b32.xlu0 %v505, 126
  %v520 = vpop.permute.xlu0 %519
  %521 = vrot.lane.b32.xlu0 %v506, 126
  %v522 = vpop.permute.xlu0 %521
  %vm523 = vcmask 1031168
  %v524 = vsel %vm523, %v514, %v516
  %v525 = vsel %vm523, %v516, %v518
  %v526 = vsel %vm523, %v518, %v520
  %v527 = vsel %vm523, %v520, %v522
  %v533 = vsel %vm190, %v507, 0
  %535 = vmatprep.subr.mxu0 %v525
  %536 = vmatpush1.msra.mxu0 %v524
  %537 = vmatprep.subr.mxu0 0.0
  %538 = vmatpush1.msra.mxu0 0.0
  %539 = vmatprep.subr.mxu0 0.0
  %540 = vmatpush1.msra.mxu0 0.0
  %541 = vmatprep.subr.mxu0 0.0
  %542 = vmatpush1.msra.mxu0 0.0
  %543 = vmatprep.subr.mxu0 0.0
  %544 = vmatpush1.msra.mxu0 0.0
  %545 = vmatprep.subr.mxu0 0.0
  %546 = vmatpush1.msra.mxu0 0.0
  %547 = vmatprep.subr.mxu0 0.0
  %548 = vmatpush1.msra.mxu0 0.0
  %549 = vmatprep.subr.mxu0 0.0
  %550 = vmatpush1.msra.mxu0 0.0
  %551 = vmatprep.subr.mxu0 0.0
  %552 = vmatpush1.msra.mxu0 0.0
  %553 = vmatprep.subr.mxu0 0.0
  %554 = vmatpush1.msra.mxu0 0.0
  %555 = vmatprep.subr.mxu0 0.0
  %556 = vmatpush1.msra.mxu0 0.0
  %557 = vmatprep.subr.mxu0 0.0
  %558 = vmatpush1.msra.mxu0 0.0
  %559 = vmatprep.subr.mxu0 0.0
  %560 = vmatpush1.msra.mxu0 0.0
  %561 = vmatprep.subr.mxu0 0.0
  %562 = vmatpush1.msra.mxu0 0.0
  %563 = vmatprep.subr.mxu0 0.0
  %564 = vmatpush1.msra.mxu0 0.0
  %565 = vmatprep.subr.mxu0 0.0
  %566 = vmatpush1.msra.mxu0 0.0
  %567 = vmatprep.subr.mxu0 0.0
  %568 = vmatpush1.msra.mxu0 0.0
  %569 = vmatprep.subr.mxu0 0.0
  %570 = vmatpush1.msra.mxu0 0.0
  %571 = vmatprep.subr.mxu0 0.0
  %572 = vmatpush1.msra.mxu0 0.0
  %573 = vmatprep.subr.mxu0 0.0
  %574 = vmatpush1.msra.mxu0 0.0
  %575 = vmatprep.subr.mxu0 0.0
  %576 = vmatpush1.msra.mxu0 0.0
  %577 = vmatprep.subr.mxu0 0.0
  %578 = vmatpush1.msra.mxu0 0.0
  %579 = vmatprep.subr.mxu0 0.0
  %580 = vmatpush1.msra.mxu0 0.0
  %581 = vmatprep.subr.mxu0 0.0
  %582 = vmatpush1.msra.mxu0 0.0
  %583 = vmatprep.subr.mxu0 0.0
  %584 = vmatpush1.msra.mxu0 0.0
  %585 = vmatprep.subr.mxu0 0.0
  %586 = vmatpush1.msra.mxu0 0.0
  %587 = vmatprep.subr.mxu0 0.0
  %588 = vmatpush1.msra.mxu0 0.0
  %589 = vmatprep.subr.mxu0 0.0
  %590 = vmatpush1.msra.mxu0 0.0
  %591 = vmatprep.subr.mxu0 0.0
  %592 = vmatpush1.msra.mxu0 0.0
  %593 = vmatprep.subr.mxu0 0.0
  %594 = vmatpush1.msra.mxu0 0.0
  %595 = vmatprep.subr.mxu0 0.0
  %596 = vmatpush1.msra.mxu0 0.0
  %597 = vmatprep.subr.mxu0 0.0
  %598 = vmatpush1.msra.mxu0 0.0
  %599 = vmatprep.mubr.f32.mxu0 0.0
  %600 = vmatmul.mubr.f32.gmra.mrb[0].mxu0 %v533
  %v601 = vpop.f32.mrb[0].mxu0
  %v602 = vadd.f32 0.0, %v601
  %v603 = vpop.f32.mrb[0].mxu0
  %v604 = vadd.f32 0.0, %v603
  %605 = vdwg.mxu0
  %606 = vmatprep.subr.mxu0 %v527
  %607 = vmatpush1.msra.mxu0 %v526
  %608 = vmatprep.subr.mxu0 0.0
  %609 = vmatpush1.msra.mxu0 0.0
  %610 = vmatprep.subr.mxu0 0.0
  %611 = vmatpush1.msra.mxu0 0.0
  %612 = vmatprep.subr.mxu0 0.0
  %613 = vmatpush1.msra.mxu0 0.0
  %614 = vmatprep.subr.mxu0 0.0
  %615 = vmatpush1.msra.mxu0 0.0
  %616 = vmatprep.subr.mxu0 0.0
  %617 = vmatpush1.msra.mxu0 0.0
  %618 = vmatprep.subr.mxu0 0.0
  %619 = vmatpush1.msra.mxu0 0.0
  %620 = vmatprep.subr.mxu0 0.0
  %621 = vmatpush1.msra.mxu0 0.0
  %622 = vmatprep.subr.mxu0 0.0
  %623 = vmatpush1.msra.mxu0 0.0
  %624 = vmatprep.subr.mxu0 0.0
  %625 = vmatpush1.msra.mxu0 0.0
  %626 = vmatprep.subr.mxu0 0.0
  %627 = vmatpush1.msra.mxu0 0.0
  %628 = vmatprep.subr.mxu0 0.0
  %629 = vmatpush1.msra.mxu0 0.0
  %630 = vmatprep.subr.mxu0 0.0
  %631 = vmatpush1.msra.mxu0 0.0
  %632 = vmatprep.subr.mxu0 0.0
  %633 = vmatpush1.msra.mxu0 0.0
  %634 = vmatprep.subr.mxu0 0.0
  %635 = vmatpush1.msra.mxu0 0.0
  %636 = vmatprep.subr.mxu0 0.0
  %637 = vmatpush1.msra.mxu0 0.0
  %638 = vmatprep.subr.mxu0 0.0
  %639 = vmatpush1.msra.mxu0 0.0
  %640 = vmatprep.subr.mxu0 0.0
  %641 = vmatpush1.msra.mxu0 0.0
  %642 = vmatprep.subr.mxu0 0.0
  %643 = vmatpush1.msra.mxu0 0.0
  %644 = vmatprep.subr.mxu0 0.0
  %645 = vmatpush1.msra.mxu0 0.0
  %646 = vmatprep.subr.mxu0 0.0
  %647 = vmatpush1.msra.mxu0 0.0
  %648 = vmatprep.subr.mxu0 0.0
  %649 = vmatpush1.msra.mxu0 0.0
  %650 = vmatprep.subr.mxu0 0.0
  %651 = vmatpush1.msra.mxu0 0.0
  %652 = vmatprep.subr.mxu0 0.0
  %653 = vmatpush1.msra.mxu0 0.0
  %654 = vmatprep.subr.mxu0 0.0
  %655 = vmatpush1.msra.mxu0 0.0
  %656 = vmatprep.subr.mxu0 0.0
  %657 = vmatpush1.msra.mxu0 0.0
  %658 = vmatprep.subr.mxu0 0.0
  %659 = vmatpush1.msra.mxu0 0.0
  %660 = vmatprep.subr.mxu0 0.0
  %661 = vmatpush1.msra.mxu0 0.0
  %662 = vmatprep.subr.mxu0 0.0
  %663 = vmatpush1.msra.mxu0 0.0
  %664 = vmatprep.subr.mxu0 0.0
  %665 = vmatpush1.msra.mxu0 0.0
  %666 = vmatprep.subr.mxu0 0.0
  %667 = vmatpush1.msra.mxu0 0.0
  %668 = vmatprep.subr.mxu0 0.0
  %669 = vmatpush1.msra.mxu0 0.0
  %670 = vmatprep.mubr.f32.mxu0 0.0
  %671 = vmatmul.mubr.f32.gmra.mrb[0].mxu0 %v533
  %v672 = vpop.f32.mrb[0].mxu0
  %v673 = vadd.f32 0.0, %v672
  %v674 = vpop.f32.mrb[0].mxu0
  %v675 = vadd.f32 0.0, %v674
  %676 = vdwg.mxu0
  %v677 = vadd.f32 %v406, %v602
  %v678 = vadd.f32 %v408, %v604
  %v679 = vadd.f32 %v477, %v673
  %v680 = vadd.f32 %v479, %v675
  %685 = vrot.lane.b32.xlu0 %v51, 16
  %v686 = vpop.permute.xlu0 %685
  %687 = vrot.lane.b32.xlu0 %v52, 16
  %v688 = vpop.permute.xlu0 %687
  %689 = vrot.lane.b32.xlu0 %v53, 16
  %v690 = vpop.permute.xlu0 %689
  %691 = vrot.lane.b32.xlu0 %v54, 16
  %v692 = vpop.permute.xlu0 %691
  %vm693 = vcmask 130048
  %v694 = vsel %vm693, %v686, %v688
  %v695 = vsel %vm693, %v688, %v690
  %v696 = vsel %vm693, %v690, %v692
  %v702 = vmul.f32 %v132, %v686
  %v703 = vmul.f32 %v124, %v694
  %v704 = vmul.f32 %v125, %v695
  %v705 = vmul.f32 %v126, %v696
  %v706 = vmul.f32 %v133, %v692
  %v707 = vld [vmem:[%s1 + $0xc] sm:$0xf]
  %713 = vrot.lane.b32.xlu0 %v702, 112
  %v714 = vpop.permute.xlu0 %713
  %715 = vrot.lane.b32.xlu0 %v703, 112
  %v716 = vpop.permute.xlu0 %715
  %717 = vrot.lane.b32.xlu0 %v704, 112
  %v718 = vpop.permute.xlu0 %717
  %719 = vrot.lane.b32.xlu0 %v705, 112
  %v720 = vpop.permute.xlu0 %719
  %721 = vrot.lane.b32.xlu0 %v706, 112
  %v722 = vpop.permute.xlu0 %721
  %vm723 = vcmask 916480
  %v724 = vsel %vm723, %v714, %v716
  %v725 = vsel %vm723, %v716, %v718
  %v726 = vsel %vm723, %v718, %v720
  %v727 = vsel %vm723, %v720, %v722
  %v733 = vsel %vm190, %v707, 0
  %735 = vmatprep.subr.mxu0 %v725
  %736 = vmatpush1.msra.mxu0 %v724
  %737 = vmatprep.subr.mxu0 0.0
  %738 = vmatpush1.msra.mxu0 0.0
  %739 = vmatprep.subr.mxu0 0.0
  %740 = vmatpush1.msra.mxu0 0.0
  %741 = vmatprep.subr.mxu0 0.0
  %742 = vmatpush1.msra.mxu0 0.0
  %743 = vmatprep.subr.mxu0 0.0
  %744 = vmatpush1.msra.mxu0 0.0
  %745 = vmatprep.subr.mxu0 0.0
  %746 = vmatpush1.msra.mxu0 0.0
  %747 = vmatprep.subr.mxu0 0.0
  %748 = vmatpush1.msra.mxu0 0.0
  %749 = vmatprep.subr.mxu0 0.0
  %750 = vmatpush1.msra.mxu0 0.0
  %751 = vmatprep.subr.mxu0 0.0
  %752 = vmatpush1.msra.mxu0 0.0
  %753 = vmatprep.subr.mxu0 0.0
  %754 = vmatpush1.msra.mxu0 0.0
  %755 = vmatprep.subr.mxu0 0.0
  %756 = vmatpush1.msra.mxu0 0.0
  %757 = vmatprep.subr.mxu0 0.0
  %758 = vmatpush1.msra.mxu0 0.0
  %759 = vmatprep.subr.mxu0 0.0
  %760 = vmatpush1.msra.mxu0 0.0
  %761 = vmatprep.subr.mxu0 0.0
  %762 = vmatpush1.msra.mxu0 0.0
  %763 = vmatprep.subr.mxu0 0.0
  %764 = vmatpush1.msra.mxu0 0.0
  %765 = vmatprep.subr.mxu0 0.0
  %766 = vmatpush1.msra.mxu0 0.0
  %767 = vmatprep.subr.mxu0 0.0
  %768 = vmatpush1.msra.mxu0 0.0
  %769 = vmatprep.subr.mxu0 0.0
  %770 = vmatpush1.msra.mxu0 0.0
  %771 = vmatprep.subr.mxu0 0.0
  %772 = vmatpush1.msra.mxu0 0.0
  %773 = vmatprep.subr.mxu0 0.0
  %774 = vmatpush1.msra.mxu0 0.0
  %775 = vmatprep.subr.mxu0 0.0
  %776 = vmatpush1.msra.mxu0 0.0
  %777 = vmatprep.subr.mxu0 0.0
  %778 = vmatpush1.msra.mxu0 0.0
  %779 = vmatprep.subr.mxu0 0.0
  %780 = vmatpush1.msra.mxu0 0.0
  %781 = vmatprep.subr.mxu0 0.0
  %782 = vmatpush1.msra.mxu0 0.0
  %783 = vmatprep.subr.mxu0 0.0
  %784 = vmatpush1.msra.mxu0 0.0
  %785 = vmatprep.subr.mxu0 0.0
  %786 = vmatpush1.msra.mxu0 0.0
  %787 = vmatprep.subr.mxu0 0.0
  %788 = vmatpush1.msra.mxu0 0.0
  %789 = vmatprep.subr.mxu0 0.0
  %790 = vmatpush1.msra.mxu0 0.0
  %791 = vmatprep.subr.mxu0 0.0
  %792 = vmatpush1.msra.mxu0 0.0
  %793 = vmatprep.subr.mxu0 0.0
  %794 = vmatpush1.msra.mxu0 0.0
  %795 = vmatprep.subr.mxu0 0.0
  %796 = vmatpush1.msra.mxu0 0.0
  %797 = vmatprep.subr.mxu0 0.0
  %798 = vmatpush1.msra.mxu0 0.0
  %799 = vmatprep.mubr.f32.mxu0 0.0
  %800 = vmatmul.mubr.f32.gmra.mrb[0].mxu0 %v733
  %v801 = vpop.f32.mrb[0].mxu0
  %v802 = vadd.f32 0.0, %v801
  %v803 = vpop.f32.mrb[0].mxu0
  %v804 = vadd.f32 0.0, %v803
  %805 = vdwg.mxu0
  %806 = vmatprep.subr.mxu0 %v727
  %807 = vmatpush1.msra.mxu0 %v726
  %808 = vmatprep.subr.mxu0 0.0
  %809 = vmatpush1.msra.mxu0 0.0
  %810 = vmatprep.subr.mxu0 0.0
  %811 = vmatpush1.msra.mxu0 0.0
  %812 = vmatprep.subr.mxu0 0.0
  %813 = vmatpush1.msra.mxu0 0.0
  %814 = vmatprep.subr.mxu0 0.0
  %815 = vmatpush1.msra.mxu0 0.0
  %816 = vmatprep.subr.mxu0 0.0
  %817 = vmatpush1.msra.mxu0 0.0
  %818 = vmatprep.subr.mxu0 0.0
  %819 = vmatpush1.msra.mxu0 0.0
  %820 = vmatprep.subr.mxu0 0.0
  %821 = vmatpush1.msra.mxu0 0.0
  %822 = vmatprep.subr.mxu0 0.0
  %823 = vmatpush1.msra.mxu0 0.0
  %824 = vmatprep.subr.mxu0 0.0
  %825 = vmatpush1.msra.mxu0 0.0
  %826 = vmatprep.subr.mxu0 0.0
  %827 = vmatpush1.msra.mxu0 0.0
  %828 = vmatprep.subr.mxu0 0.0
  %829 = vmatpush1.msra.mxu0 0.0
  %830 = vmatprep.subr.mxu0 0.0
  %831 = vmatpush1.msra.mxu0 0.0
  %832 = vmatprep.subr.mxu0 0.0
  %833 = vmatpush1.msra.mxu0 0.0
  %834 = vmatprep.subr.mxu0 0.0
  %835 = vmatpush1.msra.mxu0 0.0
  %836 = vmatprep.subr.mxu0 0.0
  %837 = vmatpush1.msra.mxu0 0.0
  %838 = vmatprep.subr.mxu0 0.0
  %839 = vmatpush1.msra.mxu0 0.0
  %840 = vmatprep.subr.mxu0 0.0
  %841 = vmatpush1.msra.mxu0 0.0
  %842 = vmatprep.subr.mxu0 0.0
  %843 = vmatpush1.msra.mxu0 0.0
  %844 = vmatprep.subr.mxu0 0.0
  %845 = vmatpush1.msra.mxu0 0.0
  %846 = vmatprep.subr.mxu0 0.0
  %847 = vmatpush1.msra.mxu0 0.0
  %848 = vmatprep.subr.mxu0 0.0
  %849 = vmatpush1.msra.mxu0 0.0
  %850 = vmatprep.subr.mxu0 0.0
  %851 = vmatpush1.msra.mxu0 0.0
  %852 = vmatprep.subr.mxu0 0.0
  %853 = vmatpush1.msra.mxu0 0.0
  %854 = vmatprep.subr.mxu0 0.0
  %855 = vmatpush1.msra.mxu0 0.0
  %856 = vmatprep.subr.mxu0 0.0
  %857 = vmatpush1.msra.mxu0 0.0
  %858 = vmatprep.subr.mxu0 0.0
  %859 = vmatpush1.msra.mxu0 0.0
  %860 = vmatprep.subr.mxu0 0.0
  %861 = vmatpush1.msra.mxu0 0.0
  %862 = vmatprep.subr.mxu0 0.0
  %863 = vmatpush1.msra.mxu0 0.0
  %864 = vmatprep.subr.mxu0 0.0
  %865 = vmatpush1.msra.mxu0 0.0
  %866 = vmatprep.subr.mxu0 0.0
  %867 = vmatpush1.msra.mxu0 0.0
  %868 = vmatprep.subr.mxu0 0.0
  %869 = vmatpush1.msra.mxu0 0.0
  %870 = vmatprep.mubr.f32.mxu0 0.0
  %871 = vmatmul.mubr.f32.gmra.mrb[0].mxu0 %v733
  %v872 = vpop.f32.mrb[0].mxu0
  %v873 = vadd.f32 0.0, %v872
  %v874 = vpop.f32.mrb[0].mxu0
  %v875 = vadd.f32 0.0, %v874
  %876 = vdwg.mxu0
  %v877 = vadd.f32 %v677, %v802
  %v878 = vadd.f32 %v678, %v804
  %v879 = vadd.f32 %v679, %v873
  %v880 = vadd.f32 %v680, %v875
  %v881 = vld [vmem:[%s1 + $0x10] sm:$0xf]
  %884 = vrot.lane.b32.xlu0 %v132, 111
  %v885 = vpop.permute.xlu0 %884
  %886 = vrot.lane.b32.xlu0 %v124, 111
  %v887 = vpop.permute.xlu0 %886
  %888 = vrot.lane.b32.xlu0 %v125, 111
  %v889 = vpop.permute.xlu0 %888
  %890 = vrot.lane.b32.xlu0 %v126, 111
  %v891 = vpop.permute.xlu0 %890
  %892 = vrot.lane.b32.xlu0 %v133, 111
  %v893 = vpop.permute.xlu0 %892
  %vm894 = vcmask 908288
  %v895 = vsel %vm894, %v885, %v887
  %v896 = vsel %vm894, %v887, %v889
  %v897 = vsel %vm894, %v889, %v891
  %v898 = vsel %vm894, %v891, %v893
  %v904 = vsel %vm190, %v881, 0
  %906 = vmatprep.subr.mxu0 %v896
  %907 = vmatpush1.msra.mxu0 %v895
  %908 = vmatprep.subr.mxu0 0.0
  %909 = vmatpush1.msra.mxu0 0.0
  %910 = vmatprep.subr.mxu0 0.0
  %911 = vmatpush1.msra.mxu0 0.0
  %912 = vmatprep.subr.mxu0 0.0
  %913 = vmatpush1.msra.mxu0 0.0
  %914 = vmatprep.subr.mxu0 0.0
  %915 = vmatpush1.msra.mxu0 0.0
  %916 = vmatprep.subr.mxu0 0.0
  %917 = vmatpush1.msra.mxu0 0.0
  %918 = vmatprep.subr.mxu0 0.0
  %919 = vmatpush1.msra.mxu0 0.0
  %920 = vmatprep.subr.mxu0 0.0
  %921 = vmatpush1.msra.mxu0 0.0
  %922 = vmatprep.subr.mxu0 0.0
  %923 = vmatpush1.msra.mxu0 0.0
  %924 = vmatprep.subr.mxu0 0.0
  %925 = vmatpush1.msra.mxu0 0.0
  %926 = vmatprep.subr.mxu0 0.0
  %927 = vmatpush1.msra.mxu0 0.0
  %928 = vmatprep.subr.mxu0 0.0
  %929 = vmatpush1.msra.mxu0 0.0
  %930 = vmatprep.subr.mxu0 0.0
  %931 = vmatpush1.msra.mxu0 0.0
  %932 = vmatprep.subr.mxu0 0.0
  %933 = vmatpush1.msra.mxu0 0.0
  %934 = vmatprep.subr.mxu0 0.0
  %935 = vmatpush1.msra.mxu0 0.0
  %936 = vmatprep.subr.mxu0 0.0
  %937 = vmatpush1.msra.mxu0 0.0
  %938 = vmatprep.subr.mxu0 0.0
  %939 = vmatpush1.msra.mxu0 0.0
  %940 = vmatprep.subr.mxu0 0.0
  %941 = vmatpush1.msra.mxu0 0.0
  %942 = vmatprep.subr.mxu0 0.0
  %943 = vmatpush1.msra.mxu0 0.0
  %944 = vmatprep.subr.mxu0 0.0
  %945 = vmatpush1.msra.mxu0 0.0
  %946 = vmatprep.subr.mxu0 0.0
  %947 = vmatpush1.msra.mxu0 0.0
  %948 = vmatprep.subr.mxu0 0.0
  %949 = vmatpush1.msra.mxu0 0.0
  %950 = vmatprep.subr.mxu0 0.0
  %951 = vmatpush1.msra.mxu0 0.0
  %952 = vmatprep.subr.mxu0 0.0
  %953 = vmatpush1.msra.mxu0 0.0
  %954 = vmatprep.subr.mxu0 0.0
  %955 = vmatpush1.msra.mxu0 0.0
  %956 = vmatprep.subr.mxu0 0.0
  %957 = vmatpush1.msra.mxu0 0.0
  %958 = vmatprep.subr.mxu0 0.0
  %959 = vmatpush1.msra.mxu0 0.0
  %960 = vmatprep.subr.mxu0 0.0
  %961 = vmatpush1.msra.mxu0 0.0
  %962 = vmatprep.subr.mxu0 0.0
  %963 = vmatpush1.msra.mxu0 0.0
  %964 = vmatprep.subr.mxu0 0.0
  %965 = vmatpush1.msra.mxu0 0.0
  %966 = vmatprep.subr.mxu0 0.0
  %967 = vmatpush1.msra.mxu0 0.0
  %968 = vmatprep.subr.mxu0 0.0
  %969 = vmatpush1.msra.mxu0 0.0
  %970 = vmatprep.mubr.f32.mxu0 0.0
  %971 = vmatmul.mubr.f32.gmra.mrb[0].mxu0 %v904
  %v972 = vpop.f32.mrb[0].mxu0
  %v973 = vadd.f32 0.0, %v972
  %v974 = vpop.f32.mrb[0].mxu0
  %v975 = vadd.f32 0.0, %v974
  %976 = vdwg.mxu0
  %977 = vmatprep.subr.mxu0 %v898
  %978 = vmatpush1.msra.mxu0 %v897
  %979 = vmatprep.subr.mxu0 0.0
  %980 = vmatpush1.msra.mxu0 0.0
  %981 = vmatprep.subr.mxu0 0.0
  %982 = vmatpush1.msra.mxu0 0.0
  %983 = vmatprep.subr.mxu0 0.0
  %984 = vmatpush1.msra.mxu0 0.0
  %985 = vmatprep.subr.mxu0 0.0
  %986 = vmatpush1.msra.mxu0 0.0
  %987 = vmatprep.subr.mxu0 0.0
  %988 = vmatpush1.msra.mxu0 0.0
  %989 = vmatprep.subr.mxu0 0.0
  %990 = vmatpush1.msra.mxu0 0.0
  %991 = vmatprep.subr.mxu0 0.0
  %992 = vmatpush1.msra.mxu0 0.0
  %993 = vmatprep.subr.mxu0 0.0
  %994 = vmatpush1.msra.mxu0 0.0
  %995 = vmatprep.subr.mxu0 0.0
  %996 = vmatpush1.msra.mxu0 0.0
  %997 = vmatprep.subr.mxu0 0.0
  %998 = vmatpush1.msra.mxu0 0.0
  %999 = vmatprep.subr.mxu0 0.0
  %1000 = vmatpush1.msra.mxu0 0.0
  %1001 = vmatprep.subr.mxu0 0.0
  %1002 = vmatpush1.msra.mxu0 0.0
  %1003 = vmatprep.subr.mxu0 0.0
  %1004 = vmatpush1.msra.mxu0 0.0
  %1005 = vmatprep.subr.mxu0 0.0
  %1006 = vmatpush1.msra.mxu0 0.0
  %1007 = vmatprep.subr.mxu0 0.0
  %1008 = vmatpush1.msra.mxu0 0.0
  %1009 = vmatprep.subr.mxu0 0.0
  %1010 = vmatpush1.msra.mxu0 0.0
  %1011 = vmatprep.subr.mxu0 0.0
  %1012 = vmatpush1.msra.mxu0 0.0
  %1013 = vmatprep.subr.mxu0 0.0
  %1014 = vmatpush1.msra.mxu0 0.0
  %1015 = vmatprep.subr.mxu0 0.0
  %1016 = vmatpush1.msra.mxu0 0.0
  %1017 = vmatprep.subr.mxu0 0.0
  %1018 = vmatpush1.msra.mxu0 0.0
  %1019 = vmatprep.subr.mxu0 0.0
  %1020 = vmatpush1.msra.mxu0 0.0
  %1021 = vmatprep.subr.mxu0 0.0
  %1022 = vmatpush1.msra.mxu0 0.0
  %1023 = vmatprep.subr.mxu0 0.0
  %1024 = vmatpush1.msra.mxu0 0.0
  %1025 = vmatprep.subr.mxu0 0.0
  %1026 = vmatpush1.msra.mxu0 0.0
  %1027 = vmatprep.subr.mxu0 0.0
  %1028 = vmatpush1.msra.mxu0 0.0
  %1029 = vmatprep.subr.mxu0 0.0
  %1030 = vmatpush1.msra.mxu0 0.0
  %1031 = vmatprep.subr.mxu0 0.0
  %1032 = vmatpush1.msra.mxu0 0.0
  %1033 = vmatprep.subr.mxu0 0.0
  %1034 = vmatpush1.msra.mxu0 0.0
  %1035 = vmatprep.subr.mxu0 0.0
  %1036 = vmatpush1.msra.mxu0 0.0
  %1037 = vmatprep.subr.mxu0 0.0
  %1038 = vmatpush1.msra.mxu0 0.0
  %1039 = vmatprep.subr.mxu0 0.0
  %1040 = vmatpush1.msra.mxu0 0.0
  %1041 = vmatprep.mubr.f32.mxu0 0.0
  %1042 = vmatmul.mubr.f32.gmra.mrb[0].mxu0 %v904
  %v1043 = vpop.f32.mrb[0].mxu0
  %v1044 = vadd.f32 0.0, %v1043
  %v1045 = vpop.f32.mrb[0].mxu0
  %v1046 = vadd.f32 0.0, %v1045
  %1047 = vdwg.mxu0
  %v1048 = vadd.f32 %v877, %v973
  %v1049 = vadd.f32 %v878, %v975
  %v1050 = vadd.f32 %v879, %v1044
  %v1051 = vadd.f32 %v880, %v1046
  %1056 = vrot.lane.b32.xlu0 %v63, 18
  %v1057 = vpop.permute.xlu0 %1056
  %1058 = vrot.lane.b32.xlu0 %v64, 18
  %v1059 = vpop.permute.xlu0 %1058
  %1060 = vrot.lane.b32.xlu0 %v65, 18
  %v1061 = vpop.permute.xlu0 %1060
  %1062 = vrot.lane.b32.xlu0 %v66, 18
  %v1063 = vpop.permute.xlu0 %1062
  %vm1064 = vcmask 146432
  %v1065 = vsel %vm1064, %v1057, %v1059
  %v1066 = vsel %vm1064, %v1059, %v1061
  %v1067 = vsel %vm1064, %v1061, %v1063
  %v1073 = vmul.f32 %v132, %v1057
  %v1074 = vmul.f32 %v124, %v1065
  %v1075 = vmul.f32 %v125, %v1066
  %v1076 = vmul.f32 %v126, %v1067
  %v1077 = vmul.f32 %v133, %v1063
  %v1078 = vld [vmem:[%s1 + $0x14] sm:$0xf]
  %1084 = vrot.lane.b32.xlu0 %v1073, 110
  %v1085 = vpop.permute.xlu0 %1084
  %1086 = vrot.lane.b32.xlu0 %v1074, 110
  %v1087 = vpop.permute.xlu0 %1086
  %1088 = vrot.lane.b32.xlu0 %v1075, 110
  %v1089 = vpop.permute.xlu0 %1088
  %1090 = vrot.lane.b32.xlu0 %v1076, 110
  %v1091 = vpop.permute.xlu0 %1090
  %1092 = vrot.lane.b32.xlu0 %v1077, 110
  %v1093 = vpop.permute.xlu0 %1092
  %vm1094 = vcmask 900096
  %v1095 = vsel %vm1094, %v1085, %v1087
  %v1096 = vsel %vm1094, %v1087, %v1089
  %v1097 = vsel %vm1094, %v1089, %v1091
  %v1098 = vsel %vm1094, %v1091, %v1093
  %v1104 = vsel %vm190, %v1078, 0
  %1106 = vmatprep.subr.mxu0 %v1096
  %1107 = vmatpush1.msra.mxu0 %v1095
  %1108 = vmatprep.subr.mxu0 0.0
  %1109 = vmatpush1.msra.mxu0 0.0
  %1110 = vmatprep.subr.mxu0 0.0
  %1111 = vmatpush1.msra.mxu0 0.0
  %1112 = vmatprep.subr.mxu0 0.0
  %1113 = vmatpush1.msra.mxu0 0.0
  %1114 = vmatprep.subr.mxu0 0.0
  %1115 = vmatpush1.msra.mxu0 0.0
  %1116 = vmatprep.subr.mxu0 0.0
  %1117 = vmatpush1.msra.mxu0 0.0
  %1118 = vmatprep.subr.mxu0 0.0
  %1119 = vmatpush1.msra.mxu0 0.0
  %1120 = vmatprep.subr.mxu0 0.0
  %1121 = vmatpush1.msra.mxu0 0.0
  %1122 = vmatprep.subr.mxu0 0.0
  %1123 = vmatpush1.msra.mxu0 0.0
  %1124 = vmatprep.subr.mxu0 0.0
  %1125 = vmatpush1.msra.mxu0 0.0
  %1126 = vmatprep.subr.mxu0 0.0
  %1127 = vmatpush1.msra.mxu0 0.0
  %1128 = vmatprep.subr.mxu0 0.0
  %1129 = vmatpush1.msra.mxu0 0.0
  %1130 = vmatprep.subr.mxu0 0.0
  %1131 = vmatpush1.msra.mxu0 0.0
  %1132 = vmatprep.subr.mxu0 0.0
  %1133 = vmatpush1.msra.mxu0 0.0
  %1134 = vmatprep.subr.mxu0 0.0
  %1135 = vmatpush1.msra.mxu0 0.0
  %1136 = vmatprep.subr.mxu0 0.0
  %1137 = vmatpush1.msra.mxu0 0.0
  %1138 = vmatprep.subr.mxu0 0.0
  %1139 = vmatpush1.msra.mxu0 0.0
  %1140 = vmatprep.subr.mxu0 0.0
  %1141 = vmatpush1.msra.mxu0 0.0
  %1142 = vmatprep.subr.mxu0 0.0
  %1143 = vmatpush1.msra.mxu0 0.0
  %1144 = vmatprep.subr.mxu0 0.0
  %1145 = vmatpush1.msra.mxu0 0.0
  %1146 = vmatprep.subr.mxu0 0.0
  %1147 = vmatpush1.msra.mxu0 0.0
  %1148 = vmatprep.subr.mxu0 0.0
  %1149 = vmatpush1.msra.mxu0 0.0
  %1150 = vmatprep.subr.mxu0 0.0
  %1151 = vmatpush1.msra.mxu0 0.0
  %1152 = vmatprep.subr.mxu0 0.0
  %1153 = vmatpush1.msra.mxu0 0.0
  %1154 = vmatprep.subr.mxu0 0.0
  %1155 = vmatpush1.msra.mxu0 0.0
  %1156 = vmatprep.subr.mxu0 0.0
  %1157 = vmatpush1.msra.mxu0 0.0
  %1158 = vmatprep.subr.mxu0 0.0
  %1159 = vmatpush1.msra.mxu0 0.0
  %1160 = vmatprep.subr.mxu0 0.0
  %1161 = vmatpush1.msra.mxu0 0.0
  %1162 = vmatprep.subr.mxu0 0.0
  %1163 = vmatpush1.msra.mxu0 0.0
  %1164 = vmatprep.subr.mxu0 0.0
  %1165 = vmatpush1.msra.mxu0 0.0
  %1166 = vmatprep.subr.mxu0 0.0
  %1167 = vmatpush1.msra.mxu0 0.0
  %1168 = vmatprep.subr.mxu0 0.0
  %1169 = vmatpush1.msra.mxu0 0.0
  %1170 = vmatprep.mubr.f32.mxu0 0.0
  %1171 = vmatmul.mubr.f32.gmra.mrb[0].mxu0 %v1104
  %v1172 = vpop.f32.mrb[0].mxu0
  %v1173 = vadd.f32 0.0, %v1172
  %v1174 = vpop.f32.mrb[0].mxu0
  %v1175 = vadd.f32 0.0, %v1174
  %1176 = vdwg.mxu0
  %1177 = vmatprep.subr.mxu0 %v1098
  %1178 = vmatpush1.msra.mxu0 %v1097
  %1179 = vmatprep.subr.mxu0 0.0
  %1180 = vmatpush1.msra.mxu0 0.0
  %1181 = vmatprep.subr.mxu0 0.0
  %1182 = vmatpush1.msra.mxu0 0.0
  %1183 = vmatprep.subr.mxu0 0.0
  %1184 = vmatpush1.msra.mxu0 0.0
  %1185 = vmatprep.subr.mxu0 0.0
  %1186 = vmatpush1.msra.mxu0 0.0
  %1187 = vmatprep.subr.mxu0 0.0
  %1188 = vmatpush1.msra.mxu0 0.0
  %1189 = vmatprep.subr.mxu0 0.0
  %1190 = vmatpush1.msra.mxu0 0.0
  %1191 = vmatprep.subr.mxu0 0.0
  %1192 = vmatpush1.msra.mxu0 0.0
  %1193 = vmatprep.subr.mxu0 0.0
  %1194 = vmatpush1.msra.mxu0 0.0
  %1195 = vmatprep.subr.mxu0 0.0
  %1196 = vmatpush1.msra.mxu0 0.0
  %1197 = vmatprep.subr.mxu0 0.0
  %1198 = vmatpush1.msra.mxu0 0.0
  %1199 = vmatprep.subr.mxu0 0.0
  %1200 = vmatpush1.msra.mxu0 0.0
  %1201 = vmatprep.subr.mxu0 0.0
  %1202 = vmatpush1.msra.mxu0 0.0
  %1203 = vmatprep.subr.mxu0 0.0
  %1204 = vmatpush1.msra.mxu0 0.0
  %1205 = vmatprep.subr.mxu0 0.0
  %1206 = vmatpush1.msra.mxu0 0.0
  %1207 = vmatprep.subr.mxu0 0.0
  %1208 = vmatpush1.msra.mxu0 0.0
  %1209 = vmatprep.subr.mxu0 0.0
  %1210 = vmatpush1.msra.mxu0 0.0
  %1211 = vmatprep.subr.mxu0 0.0
  %1212 = vmatpush1.msra.mxu0 0.0
  %1213 = vmatprep.subr.mxu0 0.0
  %1214 = vmatpush1.msra.mxu0 0.0
  %1215 = vmatprep.subr.mxu0 0.0
  %1216 = vmatpush1.msra.mxu0 0.0
  %1217 = vmatprep.subr.mxu0 0.0
  %1218 = vmatpush1.msra.mxu0 0.0
  %1219 = vmatprep.subr.mxu0 0.0
  %1220 = vmatpush1.msra.mxu0 0.0
  %1221 = vmatprep.subr.mxu0 0.0
  %1222 = vmatpush1.msra.mxu0 0.0
  %1223 = vmatprep.subr.mxu0 0.0
  %1224 = vmatpush1.msra.mxu0 0.0
  %1225 = vmatprep.subr.mxu0 0.0
  %1226 = vmatpush1.msra.mxu0 0.0
  %1227 = vmatprep.subr.mxu0 0.0
  %1228 = vmatpush1.msra.mxu0 0.0
  %1229 = vmatprep.subr.mxu0 0.0
  %1230 = vmatpush1.msra.mxu0 0.0
  %1231 = vmatprep.subr.mxu0 0.0
  %1232 = vmatpush1.msra.mxu0 0.0
  %1233 = vmatprep.subr.mxu0 0.0
  %1234 = vmatpush1.msra.mxu0 0.0
  %1235 = vmatprep.subr.mxu0 0.0
  %1236 = vmatpush1.msra.mxu0 0.0
  %1237 = vmatprep.subr.mxu0 0.0
  %1238 = vmatpush1.msra.mxu0 0.0
  %1239 = vmatprep.subr.mxu0 0.0
  %1240 = vmatpush1.msra.mxu0 0.0
  %1241 = vmatprep.mubr.f32.mxu0 0.0
  %1242 = vmatmul.mubr.f32.gmra.mrb[0].mxu0 %v1104
  %v1243 = vpop.f32.mrb[0].mxu0
  %v1244 = vadd.f32 0.0, %v1243
  %v1245 = vpop.f32.mrb[0].mxu0
  %v1246 = vadd.f32 0.0, %v1245
  %1247 = vdwg.mxu0
  %v1248 = vadd.f32 %v1048, %v1173
  %v1249 = vadd.f32 %v1049, %v1175
  %v1250 = vadd.f32 %v1050, %v1244
  %v1251 = vadd.f32 %v1051, %v1246
  %1256 = vrot.lane.b32.xlu0 %v99, 32
  %v1257 = vpop.permute.xlu0 %1256
  %1258 = vrot.lane.b32.xlu0 %v100, 32
  %v1259 = vpop.permute.xlu0 %1258
  %1260 = vrot.lane.b32.xlu0 %v101, 32
  %v1261 = vpop.permute.xlu0 %1260
  %1262 = vrot.lane.b32.xlu0 %v102, 32
  %v1263 = vpop.permute.xlu0 %1262
  %vm1264 = vcmask 261120
  %v1265 = vsel %vm1264, %v1257, %v1259
  %v1266 = vsel %vm1264, %v1259, %v1261
  %v1267 = vsel %vm1264, %v1261, %v1263
  %v1273 = vmul.f32 %v132, %v1257
  %v1274 = vmul.f32 %v124, %v1265
  %v1275 = vmul.f32 %v125, %v1266
  %v1276 = vmul.f32 %v126, %v1267
  %v1277 = vmul.f32 %v133, %v1263
  %v1278 = vld [vmem:[%s1 + $0x18] sm:$0xf]
  %1284 = vrot.lane.b32.xlu0 %v1273, 96
  %v1285 = vpop.permute.xlu0 %1284
  %1286 = vrot.lane.b32.xlu0 %v1274, 96
  %v1287 = vpop.permute.xlu0 %1286
  %1288 = vrot.lane.b32.xlu0 %v1275, 96
  %v1289 = vpop.permute.xlu0 %1288
  %1290 = vrot.lane.b32.xlu0 %v1276, 96
  %v1291 = vpop.permute.xlu0 %1290
  %1292 = vrot.lane.b32.xlu0 %v1277, 96
  %v1293 = vpop.permute.xlu0 %1292
  %vm1294 = vcmask 785408
  %v1295 = vsel %vm1294, %v1285, %v1287
  %v1296 = vsel %vm1294, %v1287, %v1289
  %v1297 = vsel %vm1294, %v1289, %v1291
  %v1298 = vsel %vm1294, %v1291, %v1293
  %v1304 = vsel %vm190, %v1278, 0
  %1306 = vmatprep.subr.mxu0 %v1296
  %1307 = vmatpush1.msra.mxu0 %v1295
  %1308 = vmatprep.subr.mxu0 0.0
  %1309 = vmatpush1.msra.mxu0 0.0
  %1310 = vmatprep.subr.mxu0 0.0
  %1311 = vmatpush1.msra.mxu0 0.0
  %1312 = vmatprep.subr.mxu0 0.0
  %1313 = vmatpush1.msra.mxu0 0.0
  %1314 = vmatprep.subr.mxu0 0.0
  %1315 = vmatpush1.msra.mxu0 0.0
  %1316 = vmatprep.subr.mxu0 0.0
  %1317 = vmatpush1.msra.mxu0 0.0
  %1318 = vmatprep.subr.mxu0 0.0
  %1319 = vmatpush1.msra.mxu0 0.0
  %1320 = vmatprep.subr.mxu0 0.0
  %1321 = vmatpush1.msra.mxu0 0.0
  %1322 = vmatprep.subr.mxu0 0.0
  %1323 = vmatpush1.msra.mxu0 0.0
  %1324 = vmatprep.subr.mxu0 0.0
  %1325 = vmatpush1.msra.mxu0 0.0
  %1326 = vmatprep.subr.mxu0 0.0
  %1327 = vmatpush1.msra.mxu0 0.0
  %1328 = vmatprep.subr.mxu0 0.0
  %1329 = vmatpush1.msra.mxu0 0.0
  %1330 = vmatprep.subr.mxu0 0.0
  %1331 = vmatpush1.msra.mxu0 0.0
  %1332 = vmatprep.subr.mxu0 0.0
  %1333 = vmatpush1.msra.mxu0 0.0
  %1334 = vmatprep.subr.mxu0 0.0
  %1335 = vmatpush1.msra.mxu0 0.0
  %1336 = vmatprep.subr.mxu0 0.0
  %1337 = vmatpush1.msra.mxu0 0.0
  %1338 = vmatprep.subr.mxu0 0.0
  %1339 = vmatpush1.msra.mxu0 0.0
  %1340 = vmatprep.subr.mxu0 0.0
  %1341 = vmatpush1.msra.mxu0 0.0
  %1342 = vmatprep.subr.mxu0 0.0
  %1343 = vmatpush1.msra.mxu0 0.0
  %1344 = vmatprep.subr.mxu0 0.0
  %1345 = vmatpush1.msra.mxu0 0.0
  %1346 = vmatprep.subr.mxu0 0.0
  %1347 = vmatpush1.msra.mxu0 0.0
  %1348 = vmatprep.subr.mxu0 0.0
  %1349 = vmatpush1.msra.mxu0 0.0
  %1350 = vmatprep.subr.mxu0 0.0
  %1351 = vmatpush1.msra.mxu0 0.0
  %1352 = vmatprep.subr.mxu0 0.0
  %1353 = vmatpush1.msra.mxu0 0.0
  %1354 = vmatprep.subr.mxu0 0.0
  %1355 = vmatpush1.msra.mxu0 0.0
  %1356 = vmatprep.subr.mxu0 0.0
  %1357 = vmatpush1.msra.mxu0 0.0
  %1358 = vmatprep.subr.mxu0 0.0
  %1359 = vmatpush1.msra.mxu0 0.0
  %1360 = vmatprep.subr.mxu0 0.0
  %1361 = vmatpush1.msra.mxu0 0.0
  %1362 = vmatprep.subr.mxu0 0.0
  %1363 = vmatpush1.msra.mxu0 0.0
  %1364 = vmatprep.subr.mxu0 0.0
  %1365 = vmatpush1.msra.mxu0 0.0
  %1366 = vmatprep.subr.mxu0 0.0
  %1367 = vmatpush1.msra.mxu0 0.0
  %1368 = vmatprep.subr.mxu0 0.0
  %1369 = vmatpush1.msra.mxu0 0.0
  %1370 = vmatprep.mubr.f32.mxu0 0.0
  %1371 = vmatmul.mubr.f32.gmra.mrb[0].mxu0 %v1304
  %v1372 = vpop.f32.mrb[0].mxu0
  %v1373 = vadd.f32 0.0, %v1372
  %v1374 = vpop.f32.mrb[0].mxu0
  %v1375 = vadd.f32 0.0, %v1374
  %1376 = vdwg.mxu0
  %1377 = vmatprep.subr.mxu0 %v1298
  %1378 = vmatpush1.msra.mxu0 %v1297
  %1379 = vmatprep.subr.mxu0 0.0
  %1380 = vmatpush1.msra.mxu0 0.0
  %1381 = vmatprep.subr.mxu0 0.0
  %1382 = vmatpush1.msra.mxu0 0.0
  %1383 = vmatprep.subr.mxu0 0.0
  %1384 = vmatpush1.msra.mxu0 0.0
  %1385 = vmatprep.subr.mxu0 0.0
  %1386 = vmatpush1.msra.mxu0 0.0
  %1387 = vmatprep.subr.mxu0 0.0
  %1388 = vmatpush1.msra.mxu0 0.0
  %1389 = vmatprep.subr.mxu0 0.0
  %1390 = vmatpush1.msra.mxu0 0.0
  %1391 = vmatprep.subr.mxu0 0.0
  %1392 = vmatpush1.msra.mxu0 0.0
  %1393 = vmatprep.subr.mxu0 0.0
  %1394 = vmatpush1.msra.mxu0 0.0
  %1395 = vmatprep.subr.mxu0 0.0
  %1396 = vmatpush1.msra.mxu0 0.0
  %1397 = vmatprep.subr.mxu0 0.0
  %1398 = vmatpush1.msra.mxu0 0.0
  %1399 = vmatprep.subr.mxu0 0.0
  %1400 = vmatpush1.msra.mxu0 0.0
  %1401 = vmatprep.subr.mxu0 0.0
  %1402 = vmatpush1.msra.mxu0 0.0
  %1403 = vmatprep.subr.mxu0 0.0
  %1404 = vmatpush1.msra.mxu0 0.0
  %1405 = vmatprep.subr.mxu0 0.0
  %1406 = vmatpush1.msra.mxu0 0.0
  %1407 = vmatprep.subr.mxu0 0.0
  %1408 = vmatpush1.msra.mxu0 0.0
  %1409 = vmatprep.subr.mxu0 0.0
  %1410 = vmatpush1.msra.mxu0 0.0
  %1411 = vmatprep.subr.mxu0 0.0
  %1412 = vmatpush1.msra.mxu0 0.0
  %1413 = vmatprep.subr.mxu0 0.0
  %1414 = vmatpush1.msra.mxu0 0.0
  %1415 = vmatprep.subr.mxu0 0.0
  %1416 = vmatpush1.msra.mxu0 0.0
  %1417 = vmatprep.subr.mxu0 0.0
  %1418 = vmatpush1.msra.mxu0 0.0
  %1419 = vmatprep.subr.mxu0 0.0
  %1420 = vmatpush1.msra.mxu0 0.0
  %1421 = vmatprep.subr.mxu0 0.0
  %1422 = vmatpush1.msra.mxu0 0.0
  %1423 = vmatprep.subr.mxu0 0.0
  %1424 = vmatpush1.msra.mxu0 0.0
  %1425 = vmatprep.subr.mxu0 0.0
  %1426 = vmatpush1.msra.mxu0 0.0
  %1427 = vmatprep.subr.mxu0 0.0
  %1428 = vmatpush1.msra.mxu0 0.0
  %1429 = vmatprep.subr.mxu0 0.0
  %1430 = vmatpush1.msra.mxu0 0.0
  %1431 = vmatprep.subr.mxu0 0.0
  %1432 = vmatpush1.msra.mxu0 0.0
  %1433 = vmatprep.subr.mxu0 0.0
  %1434 = vmatpush1.msra.mxu0 0.0
  %1435 = vmatprep.subr.mxu0 0.0
  %1436 = vmatpush1.msra.mxu0 0.0
  %1437 = vmatprep.subr.mxu0 0.0
  %1438 = vmatpush1.msra.mxu0 0.0
  %1439 = vmatprep.subr.mxu0 0.0
  %1440 = vmatpush1.msra.mxu0 0.0
  %1441 = vmatprep.mubr.f32.mxu0 0.0
  %1442 = vmatmul.mubr.f32.gmra.mrb[0].mxu0 %v1304
  %v1443 = vpop.f32.mrb[0].mxu0
  %v1444 = vadd.f32 0.0, %v1443
  %v1445 = vpop.f32.mrb[0].mxu0
  %v1446 = vadd.f32 0.0, %v1445
  %1447 = vdwg.mxu0
  %v1448 = vadd.f32 %v1248, %v1373
  %v1449 = vadd.f32 %v1249, %v1375
  %v1450 = vadd.f32 %v1250, %v1444
  %v1451 = vadd.f32 %v1251, %v1446
  %1456 = vrot.lane.b32.xlu0 %v87, 33
  %v1457 = vpop.permute.xlu0 %1456
  %1458 = vrot.lane.b32.xlu0 %v88, 33
  %v1459 = vpop.permute.xlu0 %1458
  %1460 = vrot.lane.b32.xlu0 %v89, 33
  %v1461 = vpop.permute.xlu0 %1460
  %1462 = vrot.lane.b32.xlu0 %v90, 33
  %v1463 = vpop.permute.xlu0 %1462
  %vm1464 = vcmask 269312
  %v1465 = vsel %vm1464, %v1457, %v1459
  %v1466 = vsel %vm1464, %v1459, %v1461
  %v1467 = vsel %vm1464, %v1461, %v1463
  %v1473 = vmul.f32 %v132, %v1457
  %v1474 = vmul.f32 %v124, %v1465
  %v1475 = vmul.f32 %v125, %v1466
  %v1476 = vmul.f32 %v126, %v1467
  %v1477 = vmul.f32 %v133, %v1463
  %v1478 = vld [vmem:[%s1 + $0x1c] sm:$0xf]
  %1484 = vrot.lane.b32.xlu0 %v1473, 95
  %v1485 = vpop.permute.xlu0 %1484
  %1486 = vrot.lane.b32.xlu0 %v1474, 95
  %v1487 = vpop.permute.xlu0 %1486
  %1488 = vrot.lane.b32.xlu0 %v1475, 95
  %v1489 = vpop.permute.xlu0 %1488
  %1490 = vrot.lane.b32.xlu0 %v1476, 95
  %v1491 = vpop.permute.xlu0 %1490
  %1492 = vrot.lane.b32.xlu0 %v1477, 95
  %v1493 = vpop.permute.xlu0 %1492
  %vm1494 = vcmask 777216
  %v1495 = vsel %vm1494, %v1485, %v1487
  %v1496 = vsel %vm1494, %v1487, %v1489
  %v1497 = vsel %vm1494, %v1489, %v1491
  %v1498 = vsel %vm1494, %v1491, %v1493
  %v1504 = vsel %vm190, %v1478, 0
  %1506 = vmatprep.subr.mxu0 %v1496
  %1507 = vmatpush1.msra.mxu0 %v1495
  %1508 = vmatprep.subr.mxu0 0.0
  %1509 = vmatpush1.msra.mxu0 0.0
  %1510 = vmatprep.subr.mxu0 0.0
  %1511 = vmatpush1.msra.mxu0 0.0
  %1512 = vmatprep.subr.mxu0 0.0
  %1513 = vmatpush1.msra.mxu0 0.0
  %1514 = vmatprep.subr.mxu0 0.0
  %1515 = vmatpush1.msra.mxu0 0.0
  %1516 = vmatprep.subr.mxu0 0.0
  %1517 = vmatpush1.msra.mxu0 0.0
  %1518 = vmatprep.subr.mxu0 0.0
  %1519 = vmatpush1.msra.mxu0 0.0
  %1520 = vmatprep.subr.mxu0 0.0
  %1521 = vmatpush1.msra.mxu0 0.0
  %1522 = vmatprep.subr.mxu0 0.0
  %1523 = vmatpush1.msra.mxu0 0.0
  %1524 = vmatprep.subr.mxu0 0.0
  %1525 = vmatpush1.msra.mxu0 0.0
  %1526 = vmatprep.subr.mxu0 0.0
  %1527 = vmatpush1.msra.mxu0 0.0
  %1528 = vmatprep.subr.mxu0 0.0
  %1529 = vmatpush1.msra.mxu0 0.0
  %1530 = vmatprep.subr.mxu0 0.0
  %1531 = vmatpush1.msra.mxu0 0.0
  %1532 = vmatprep.subr.mxu0 0.0
  %1533 = vmatpush1.msra.mxu0 0.0
  %1534 = vmatprep.subr.mxu0 0.0
  %1535 = vmatpush1.msra.mxu0 0.0
  %1536 = vmatprep.subr.mxu0 0.0
  %1537 = vmatpush1.msra.mxu0 0.0
  %1538 = vmatprep.subr.mxu0 0.0
  %1539 = vmatpush1.msra.mxu0 0.0
  %1540 = vmatprep.subr.mxu0 0.0
  %1541 = vmatpush1.msra.mxu0 0.0
  %1542 = vmatprep.subr.mxu0 0.0
  %1543 = vmatpush1.msra.mxu0 0.0
  %1544 = vmatprep.subr.mxu0 0.0
  %1545 = vmatpush1.msra.mxu0 0.0
  %1546 = vmatprep.subr.mxu0 0.0
  %1547 = vmatpush1.msra.mxu0 0.0
  %1548 = vmatprep.subr.mxu0 0.0
  %1549 = vmatpush1.msra.mxu0 0.0
  %1550 = vmatprep.subr.mxu0 0.0
  %1551 = vmatpush1.msra.mxu0 0.0
  %1552 = vmatprep.subr.mxu0 0.0
  %1553 = vmatpush1.msra.mxu0 0.0
  %1554 = vmatprep.subr.mxu0 0.0
  %1555 = vmatpush1.msra.mxu0 0.0
  %1556 = vmatprep.subr.mxu0 0.0
  %1557 = vmatpush1.msra.mxu0 0.0
  %1558 = vmatprep.subr.mxu0 0.0
  %1559 = vmatpush1.msra.mxu0 0.0
  %1560 = vmatprep.subr.mxu0 0.0
  %1561 = vmatpush1.msra.mxu0 0.0
  %1562 = vmatprep.subr.mxu0 0.0
  %1563 = vmatpush1.msra.mxu0 0.0
  %1564 = vmatprep.subr.mxu0 0.0
  %1565 = vmatpush1.msra.mxu0 0.0
  %1566 = vmatprep.subr.mxu0 0.0
  %1567 = vmatpush1.msra.mxu0 0.0
  %1568 = vmatprep.subr.mxu0 0.0
  %1569 = vmatpush1.msra.mxu0 0.0
  %1570 = vmatprep.mubr.f32.mxu0 0.0
  %1571 = vmatmul.mubr.f32.gmra.mrb[0].mxu0 %v1504
  %v1572 = vpop.f32.mrb[0].mxu0
  %v1573 = vadd.f32 0.0, %v1572
  %v1574 = vpop.f32.mrb[0].mxu0
  %v1575 = vadd.f32 0.0, %v1574
  %1576 = vdwg.mxu0
  %1577 = vmatprep.subr.mxu0 %v1498
  %1578 = vmatpush1.msra.mxu0 %v1497
  %1579 = vmatprep.subr.mxu0 0.0
  %1580 = vmatpush1.msra.mxu0 0.0
  %1581 = vmatprep.subr.mxu0 0.0
  %1582 = vmatpush1.msra.mxu0 0.0
  %1583 = vmatprep.subr.mxu0 0.0
  %1584 = vmatpush1.msra.mxu0 0.0
  %1585 = vmatprep.subr.mxu0 0.0
  %1586 = vmatpush1.msra.mxu0 0.0
  %1587 = vmatprep.subr.mxu0 0.0
  %1588 = vmatpush1.msra.mxu0 0.0
  %1589 = vmatprep.subr.mxu0 0.0
  %1590 = vmatpush1.msra.mxu0 0.0
  %1591 = vmatprep.subr.mxu0 0.0
  %1592 = vmatpush1.msra.mxu0 0.0
  %1593 = vmatprep.subr.mxu0 0.0
  %1594 = vmatpush1.msra.mxu0 0.0
  %1595 = vmatprep.subr.mxu0 0.0
  %1596 = vmatpush1.msra.mxu0 0.0
  %1597 = vmatprep.subr.mxu0 0.0
  %1598 = vmatpush1.msra.mxu0 0.0
  %1599 = vmatprep.subr.mxu0 0.0
  %1600 = vmatpush1.msra.mxu0 0.0
  %1601 = vmatprep.subr.mxu0 0.0
  %1602 = vmatpush1.msra.mxu0 0.0
  %1603 = vmatprep.subr.mxu0 0.0
  %1604 = vmatpush1.msra.mxu0 0.0
  %1605 = vmatprep.subr.mxu0 0.0
  %1606 = vmatpush1.msra.mxu0 0.0
  %1607 = vmatprep.subr.mxu0 0.0
  %1608 = vmatpush1.msra.mxu0 0.0
  %1609 = vmatprep.subr.mxu0 0.0
  %1610 = vmatpush1.msra.mxu0 0.0
  %1611 = vmatprep.subr.mxu0 0.0
  %1612 = vmatpush1.msra.mxu0 0.0
  %1613 = vmatprep.subr.mxu0 0.0
  %1614 = vmatpush1.msra.mxu0 0.0
  %1615 = vmatprep.subr.mxu0 0.0
  %1616 = vmatpush1.msra.mxu0 0.0
  %1617 = vmatprep.subr.mxu0 0.0
  %1618 = vmatpush1.msra.mxu0 0.0
  %1619 = vmatprep.subr.mxu0 0.0
  %1620 = vmatpush1.msra.mxu0 0.0
  %1621 = vmatprep.subr.mxu0 0.0
  %1622 = vmatpush1.msra.mxu0 0.0
  %1623 = vmatprep.subr.mxu0 0.0
  %1624 = vmatpush1.msra.mxu0 0.0
  %1625 = vmatprep.subr.mxu0 0.0
  %1626 = vmatpush1.msra.mxu0 0.0
  %1627 = vmatprep.subr.mxu0 0.0
  %1628 = vmatpush1.msra.mxu0 0.0
  %1629 = vmatprep.subr.mxu0 0.0
  %1630 = vmatpush1.msra.mxu0 0.0
  %1631 = vmatprep.subr.mxu0 0.0
  %1632 = vmatpush1.msra.mxu0 0.0
  %1633 = vmatprep.subr.mxu0 0.0
  %1634 = vmatpush1.msra.mxu0 0.0
  %1635 = vmatprep.subr.mxu0 0.0
  %1636 = vmatpush1.msra.mxu0 0.0
  %1637 = vmatprep.subr.mxu0 0.0
  %1638 = vmatpush1.msra.mxu0 0.0
  %1639 = vmatprep.subr.mxu0 0.0
  %1640 = vmatpush1.msra.mxu0 0.0
  %1641 = vmatprep.mubr.f32.mxu0 0.0
  %1642 = vmatmul.mubr.f32.gmra.mrb[0].mxu0 %v1504
  %v1643 = vpop.f32.mrb[0].mxu0
  %v1644 = vadd.f32 0.0, %v1643
  %v1645 = vpop.f32.mrb[0].mxu0
  %v1646 = vadd.f32 0.0, %v1645
  %1647 = vdwg.mxu0
  %v1648 = vadd.f32 %v1448, %v1573
  %v1649 = vadd.f32 %v1449, %v1575
  %v1650 = vadd.f32 %v1450, %v1644
  %v1651 = vadd.f32 %v1451, %v1646
  %1656 = vrot.lane.b32.xlu0 %v103, 34
  %v1657 = vpop.permute.xlu0 %1656
  %1658 = vrot.lane.b32.xlu0 %v104, 34
  %v1659 = vpop.permute.xlu0 %1658
  %1660 = vrot.lane.b32.xlu0 %v105, 34
  %v1661 = vpop.permute.xlu0 %1660
  %1662 = vrot.lane.b32.xlu0 %v106, 34
  %v1663 = vpop.permute.xlu0 %1662
  %vm1664 = vcmask 277504
  %v1665 = vsel %vm1664, %v1657, %v1659
  %v1666 = vsel %vm1664, %v1659, %v1661
  %v1667 = vsel %vm1664, %v1661, %v1663
  %v1673 = vmul.f32 %v132, %v1657
  %v1674 = vmul.f32 %v124, %v1665
  %v1675 = vmul.f32 %v125, %v1666
  %v1676 = vmul.f32 %v126, %v1667
  %v1677 = vmul.f32 %v133, %v1663
  %v1678 = vld [vmem:[%s1 + $0x20] sm:$0xf]
  %1684 = vrot.lane.b32.xlu0 %v1673, 94
  %v1685 = vpop.permute.xlu0 %1684
  %1686 = vrot.lane.b32.xlu0 %v1674, 94
  %v1687 = vpop.permute.xlu0 %1686
  %1688 = vrot.lane.b32.xlu0 %v1675, 94
  %v1689 = vpop.permute.xlu0 %1688
  %1690 = vrot.lane.b32.xlu0 %v1676, 94
  %v1691 = vpop.permute.xlu0 %1690
  %1692 = vrot.lane.b32.xlu0 %v1677, 94
  %v1693 = vpop.permute.xlu0 %1692
  %vm1694 = vcmask 769024
  %v1695 = vsel %vm1694, %v1685, %v1687
  %v1696 = vsel %vm1694, %v1687, %v1689
  %v1697 = vsel %vm1694, %v1689, %v1691
  %v1698 = vsel %vm1694, %v1691, %v1693
  %v1704 = vsel %vm190, %v1678, 0
  %1706 = vmatprep.subr.mxu0 %v1696
  %1707 = vmatpush1.msra.mxu0 %v1695
  %1708 = vmatprep.subr.mxu0 0.0
  %1709 = vmatpush1.msra.mxu0 0.0
  %1710 = vmatprep.subr.mxu0 0.0
  %1711 = vmatpush1.msra.mxu0 0.0
  %1712 = vmatprep.subr.mxu0 0.0
  %1713 = vmatpush1.msra.mxu0 0.0
  %1714 = vmatprep.subr.mxu0 0.0
  %1715 = vmatpush1.msra.mxu0 0.0
  %1716 = vmatprep.subr.mxu0 0.0
  %1717 = vmatpush1.msra.mxu0 0.0
  %1718 = vmatprep.subr.mxu0 0.0
  %1719 = vmatpush1.msra.mxu0 0.0
  %1720 = vmatprep.subr.mxu0 0.0
  %1721 = vmatpush1.msra.mxu0 0.0
  %1722 = vmatprep.subr.mxu0 0.0
  %1723 = vmatpush1.msra.mxu0 0.0
  %1724 = vmatprep.subr.mxu0 0.0
  %1725 = vmatpush1.msra.mxu0 0.0
  %1726 = vmatprep.subr.mxu0 0.0
  %1727 = vmatpush1.msra.mxu0 0.0
  %1728 = vmatprep.subr.mxu0 0.0
  %1729 = vmatpush1.msra.mxu0 0.0
  %1730 = vmatprep.subr.mxu0 0.0
  %1731 = vmatpush1.msra.mxu0 0.0
  %1732 = vmatprep.subr.mxu0 0.0
  %1733 = vmatpush1.msra.mxu0 0.0
  %1734 = vmatprep.subr.mxu0 0.0
  %1735 = vmatpush1.msra.mxu0 0.0
  %1736 = vmatprep.subr.mxu0 0.0
  %1737 = vmatpush1.msra.mxu0 0.0
  %1738 = vmatprep.subr.mxu0 0.0
  %1739 = vmatpush1.msra.mxu0 0.0
  %1740 = vmatprep.subr.mxu0 0.0
  %1741 = vmatpush1.msra.mxu0 0.0
  %1742 = vmatprep.subr.mxu0 0.0
  %1743 = vmatpush1.msra.mxu0 0.0
  %1744 = vmatprep.subr.mxu0 0.0
  %1745 = vmatpush1.msra.mxu0 0.0
  %1746 = vmatprep.subr.mxu0 0.0
  %1747 = vmatpush1.msra.mxu0 0.0
  %1748 = vmatprep.subr.mxu0 0.0
  %1749 = vmatpush1.msra.mxu0 0.0
  %1750 = vmatprep.subr.mxu0 0.0
  %1751 = vmatpush1.msra.mxu0 0.0
  %1752 = vmatprep.subr.mxu0 0.0
  %1753 = vmatpush1.msra.mxu0 0.0
  %1754 = vmatprep.subr.mxu0 0.0
  %1755 = vmatpush1.msra.mxu0 0.0
  %1756 = vmatprep.subr.mxu0 0.0
  %1757 = vmatpush1.msra.mxu0 0.0
  %1758 = vmatprep.subr.mxu0 0.0
  %1759 = vmatpush1.msra.mxu0 0.0
  %1760 = vmatprep.subr.mxu0 0.0
  %1761 = vmatpush1.msra.mxu0 0.0
  %1762 = vmatprep.subr.mxu0 0.0
  %1763 = vmatpush1.msra.mxu0 0.0
  %1764 = vmatprep.subr.mxu0 0.0
  %1765 = vmatpush1.msra.mxu0 0.0
  %1766 = vmatprep.subr.mxu0 0.0
  %1767 = vmatpush1.msra.mxu0 0.0
  %1768 = vmatprep.subr.mxu0 0.0
  %1769 = vmatpush1.msra.mxu0 0.0
  %1770 = vmatprep.mubr.f32.mxu0 0.0
  %1771 = vmatmul.mubr.f32.gmra.mrb[0].mxu0 %v1704
  %v1772 = vpop.f32.mrb[0].mxu0
  %v1773 = vadd.f32 0.0, %v1772
  %v1774 = vpop.f32.mrb[0].mxu0
  %v1775 = vadd.f32 0.0, %v1774
  %1776 = vdwg.mxu0
  %1777 = vmatprep.subr.mxu0 %v1698
  %1778 = vmatpush1.msra.mxu0 %v1697
  %1779 = vmatprep.subr.mxu0 0.0
  %1780 = vmatpush1.msra.mxu0 0.0
  %1781 = vmatprep.subr.mxu0 0.0
  %1782 = vmatpush1.msra.mxu0 0.0
  %1783 = vmatprep.subr.mxu0 0.0
  %1784 = vmatpush1.msra.mxu0 0.0
  %1785 = vmatprep.subr.mxu0 0.0
  %1786 = vmatpush1.msra.mxu0 0.0
  %1787 = vmatprep.subr.mxu0 0.0
  %1788 = vmatpush1.msra.mxu0 0.0
  %1789 = vmatprep.subr.mxu0 0.0
  %1790 = vmatpush1.msra.mxu0 0.0
  %1791 = vmatprep.subr.mxu0 0.0
  %1792 = vmatpush1.msra.mxu0 0.0
  %1793 = vmatprep.subr.mxu0 0.0
  %1794 = vmatpush1.msra.mxu0 0.0
  %1795 = vmatprep.subr.mxu0 0.0
  %1796 = vmatpush1.msra.mxu0 0.0
  %1797 = vmatprep.subr.mxu0 0.0
  %1798 = vmatpush1.msra.mxu0 0.0
  %1799 = vmatprep.subr.mxu0 0.0
  %1800 = vmatpush1.msra.mxu0 0.0
  %1801 = vmatprep.subr.mxu0 0.0
  %1802 = vmatpush1.msra.mxu0 0.0
  %1803 = vmatprep.subr.mxu0 0.0
  %1804 = vmatpush1.msra.mxu0 0.0
  %1805 = vmatprep.subr.mxu0 0.0
  %1806 = vmatpush1.msra.mxu0 0.0
  %1807 = vmatprep.subr.mxu0 0.0
  %1808 = vmatpush1.msra.mxu0 0.0
  %1809 = vmatprep.subr.mxu0 0.0
  %1810 = vmatpush1.msra.mxu0 0.0
  %1811 = vmatprep.subr.mxu0 0.0
  %1812 = vmatpush1.msra.mxu0 0.0
  %1813 = vmatprep.subr.mxu0 0.0
  %1814 = vmatpush1.msra.mxu0 0.0
  %1815 = vmatprep.subr.mxu0 0.0
  %1816 = vmatpush1.msra.mxu0 0.0
  %1817 = vmatprep.subr.mxu0 0.0
  %1818 = vmatpush1.msra.mxu0 0.0
  %1819 = vmatprep.subr.mxu0 0.0
  %1820 = vmatpush1.msra.mxu0 0.0
  %1821 = vmatprep.subr.mxu0 0.0
  %1822 = vmatpush1.msra.mxu0 0.0
  %1823 = vmatprep.subr.mxu0 0.0
  %1824 = vmatpush1.msra.mxu0 0.0
  %1825 = vmatprep.subr.mxu0 0.0
  %1826 = vmatpush1.msra.mxu0 0.0
  %1827 = vmatprep.subr.mxu0 0.0
  %1828 = vmatpush1.msra.mxu0 0.0
  %1829 = vmatprep.subr.mxu0 0.0
  %1830 = vmatpush1.msra.mxu0 0.0
  %1831 = vmatprep.subr.mxu0 0.0
  %1832 = vmatpush1.msra.mxu0 0.0
  %1833 = vmatprep.subr.mxu0 0.0
  %1834 = vmatpush1.msra.mxu0 0.0
  %1835 = vmatprep.subr.mxu0 0.0
  %1836 = vmatpush1.msra.mxu0 0.0
  %1837 = vmatprep.subr.mxu0 0.0
  %1838 = vmatpush1.msra.mxu0 0.0
  %1839 = vmatprep.subr.mxu0 0.0
  %1840 = vmatpush1.msra.mxu0 0.0
  %1841 = vmatprep.mubr.f32.mxu0 0.0
  %1842 = vmatmul.mubr.f32.gmra.mrb[0].mxu0 %v1704
  %v1843 = vpop.f32.mrb[0].mxu0
  %v1844 = vadd.f32 0.0, %v1843
  %v1845 = vpop.f32.mrb[0].mxu0
  %v1846 = vadd.f32 0.0, %v1845
  %1847 = vdwg.mxu0
  %v1848 = vadd.f32 %v1648, %v1773
  %v1849 = vadd.f32 %v1649, %v1775
  %v1850 = vadd.f32 %v1650, %v1844
  %v1851 = vadd.f32 %v1651, %v1846
  %vm1852 = vcmask 1043456
  %v1853 = vsel %vm1852, %v1848, 0.0
  %v1854 = vsel %vm1852, %v1849, 0.0
  %v1855 = vadd.f32 %v1853, %v1854
  %v1856 = vsel %vm1852, %v1850, 0.0
  %v1857 = vadd.f32 %v1855, %v1856
  %v1858 = vsel %vm1852, %v1851, 0.0
  %v1859 = vadd.f32 %v1857, %v1858
  %1860 = vadd.xlane.f32.xlu0 %v1859
  %v1861 = vpop.xlane.xlu0 %1860
  %v1862 = vmul.f32 %v1861, 0.001953125
  %v1863 = vmul.f32 %v1848, %v1848
  %v1864 = vmul.f32 %v1849, %v1849
  %v1865 = vmul.f32 %v1850, %v1850
  %v1866 = vmul.f32 %v1851, %v1851
  %v1867 = vsel %vm1852, %v1863, 0.0
  %v1868 = vsel %vm1852, %v1864, 0.0
  %v1869 = vadd.f32 %v1867, %v1868
  %v1870 = vsel %vm1852, %v1865, 0.0
  %v1871 = vadd.f32 %v1869, %v1870
  %v1872 = vsel %vm1852, %v1866, 0.0
  %v1873 = vadd.f32 %v1871, %v1872
  %1874 = vadd.xlane.f32.xlu0 %v1873
  %v1875 = vpop.xlane.xlu0 %1874
  %v1876 = vmul.f32 %v1875, 0.001953125
  %v1877 = vmul.f32 %v1862, %v1862
  %v1878 = vsub.f32 %v1876, %v1877
  %v1879 = vmax.f32 %v1878, 0.0
  %v1880 = vsub.f32 %v1848, %v1862
  %v1881 = vsub.f32 %v1849, %v1862
  %v1882 = vsub.f32 %v1850, %v1862
  %v1883 = vsub.f32 %v1851, %v1862
  %v1884 = vadd.f32 %v1879, 1e-05
  %v1885 = vrsqrt.pop %v1884
  %v1886 = vmul.f32 %v1880, %v1885
  %v1887 = vmul.f32 %v1881, %v1885
  %v1888 = vmul.f32 %v1882, %v1885
  %v1889 = vmul.f32 %v1883, %v1885
  %v1890 = vld [vmem:[%s2] sm:$0xf]
  %1892 = vset.pattern.permute.xlu0 0
  %1893 = vperm.xlu0 %1892, %v1890
  %v1894 = vpop.permute.xlu0 %1893
  %v1896 = vmul.f32 %v1886, %v1894
  %v1897 = vmul.f32 %v1887, %v1894
  %v1898 = vmul.f32 %v1888, %v1894
  %v1899 = vmul.f32 %v1889, %v1894
  %v1900 = vld [vmem:[%s3] sm:$0xf]
  %1902 = vset.pattern.permute.xlu0 0
  %1903 = vperm.xlu0 %1902, %v1900
  %v1904 = vpop.permute.xlu0 %1903
  %v1906 = vadd.f32 %v1896, %v1904
  %v1907 = vadd.f32 %v1897, %v1904
  %v1908 = vadd.f32 %v1898, %v1904
  %v1909 = vadd.f32 %v1899, %v1904
  %v1910 = vmax.f32 %v1906, 0.0
  %v1911 = vmax.f32 %v1907, 0.0
  %v1912 = vmax.f32 %v1908, 0.0
  %v1913 = vmax.f32 %v1909, 0.0
  %1918 = vrot.lane.b32.xlu0 %v1910, 17
  %v1919 = vpop.permute.xlu0 %1918
  %1920 = vrot.lane.b32.xlu0 %v1911, 17
  %v1921 = vpop.permute.xlu0 %1920
  %1922 = vrot.lane.b32.xlu0 %v1912, 17
  %v1923 = vpop.permute.xlu0 %1922
  %1924 = vrot.lane.b32.xlu0 %v1913, 17
  %v1925 = vpop.permute.xlu0 %1924
  %v1926 = vsel %vm123, %v1919, %v1921
  %v1927 = vsel %vm123, %v1921, %v1923
  %v1928 = vsel %vm123, %v1923, %v1925
  %v1934 = vsel %vm123, 0.0, %v1919
  %v1935 = vsel %vm123, %v1925, 0.0
  %v1936 = vmul.f32 %v1934, %v91
  %v1937 = vmul.f32 %v1926, %v92
  %v1938 = vmul.f32 %v1927, %v93
  %v1939 = vmul.f32 %v1928, %v94
  %v1940 = vld [vmem:[%s4] sm:$0xf]
  %v1941 = vmul.f32 %v1934, %v144
  %v1942 = vmul.f32 %v1926, %v152
  %v1943 = vmul.f32 %v1927, %v153
  %v1944 = vmul.f32 %v1928, %v154
  %v1945 = vmul.f32 %v1935, %v150
  %v1946 = vld [vmem:[%s4 + $0x4] sm:$0xf]
  %1952 = vrot.lane.b32.xlu0 %v1941, 127
  %v1953 = vpop.permute.xlu0 %1952
  %1954 = vrot.lane.b32.xlu0 %v1942, 127
  %v1955 = vpop.permute.xlu0 %1954
  %1956 = vrot.lane.b32.xlu0 %v1943, 127
  %v1957 = vpop.permute.xlu0 %1956
  %1958 = vrot.lane.b32.xlu0 %v1944, 127
  %v1959 = vpop.permute.xlu0 %1958
  %1960 = vrot.lane.b32.xlu0 %v1945, 127
  %v1961 = vpop.permute.xlu0 %1960
  %v1962 = vsel %vm181, %v1953, %v1955
  %v1963 = vsel %vm181, %v1955, %v1957
  %v1964 = vsel %vm181, %v1957, %v1959
  %v1965 = vsel %vm181, %v1959, %v1961
  %vm1966 = vcmask 31744
  %v1968 = vsel %vm1966, %v1946, 0
  %v1970 = vsel %vm1852, %v1962, 0
  %v1972 = vsel %vm1852, %v1963, 0
  %v1974 = vsel %vm1852, %v1964, 0
  %v1976 = vsel %vm1852, %v1965, 0
  %1978 = vmatprep.subr.mxu0 %v1972
  %1979 = vmatpush1.msra.mxu0 %v1970
  %1980 = vmatprep.subr.mxu0 0.0
  %1981 = vmatpush1.msra.mxu0 0.0
  %1982 = vmatprep.subr.mxu0 0.0
  %1983 = vmatpush1.msra.mxu0 0.0
  %1984 = vmatprep.subr.mxu0 0.0
  %1985 = vmatpush1.msra.mxu0 0.0
  %1986 = vmatprep.subr.mxu0 0.0
  %1987 = vmatpush1.msra.mxu0 0.0
  %1988 = vmatprep.subr.mxu0 0.0
  %1989 = vmatpush1.msra.mxu0 0.0
  %1990 = vmatprep.subr.mxu0 0.0
  %1991 = vmatpush1.msra.mxu0 0.0
  %1992 = vmatprep.subr.mxu0 0.0
  %1993 = vmatpush1.msra.mxu0 0.0
  %1994 = vmatprep.subr.mxu0 0.0
  %1995 = vmatpush1.msra.mxu0 0.0
  %1996 = vmatprep.subr.mxu0 0.0
  %1997 = vmatpush1.msra.mxu0 0.0
  %1998 = vmatprep.subr.mxu0 0.0
  %1999 = vmatpush1.msra.mxu0 0.0
  %2000 = vmatprep.subr.mxu0 0.0
  %2001 = vmatpush1.msra.mxu0 0.0
  %2002 = vmatprep.subr.mxu0 0.0
  %2003 = vmatpush1.msra.mxu0 0.0
  %2004 = vmatprep.subr.mxu0 0.0
  %2005 = vmatpush1.msra.mxu0 0.0
  %2006 = vmatprep.subr.mxu0 0.0
  %2007 = vmatpush1.msra.mxu0 0.0
  %2008 = vmatprep.subr.mxu0 0.0
  %2009 = vmatpush1.msra.mxu0 0.0
  %2010 = vmatprep.subr.mxu0 0.0
  %2011 = vmatpush1.msra.mxu0 0.0
  %2012 = vmatprep.subr.mxu0 0.0
  %2013 = vmatpush1.msra.mxu0 0.0
  %2014 = vmatprep.subr.mxu0 0.0
  %2015 = vmatpush1.msra.mxu0 0.0
  %2016 = vmatprep.subr.mxu0 0.0
  %2017 = vmatpush1.msra.mxu0 0.0
  %2018 = vmatprep.subr.mxu0 0.0
  %2019 = vmatpush1.msra.mxu0 0.0
  %2020 = vmatprep.subr.mxu0 0.0
  %2021 = vmatpush1.msra.mxu0 0.0
  %2022 = vmatprep.subr.mxu0 0.0
  %2023 = vmatpush1.msra.mxu0 0.0
  %2024 = vmatprep.subr.mxu0 0.0
  %2025 = vmatpush1.msra.mxu0 0.0
  %2026 = vmatprep.subr.mxu0 0.0
  %2027 = vmatpush1.msra.mxu0 0.0
  %2028 = vmatprep.subr.mxu0 0.0
  %2029 = vmatpush1.msra.mxu0 0.0
  %2030 = vmatprep.subr.mxu0 0.0
  %2031 = vmatpush1.msra.mxu0 0.0
  %2032 = vmatprep.subr.mxu0 0.0
  %2033 = vmatpush1.msra.mxu0 0.0
  %2034 = vmatprep.subr.mxu0 0.0
  %2035 = vmatpush1.msra.mxu0 0.0
  %2036 = vmatprep.subr.mxu0 0.0
  %2037 = vmatpush1.msra.mxu0 0.0
  %2038 = vmatprep.subr.mxu0 0.0
  %2039 = vmatpush1.msra.mxu0 0.0
  %2040 = vmatprep.subr.mxu0 0.0
  %2041 = vmatpush1.msra.mxu0 0.0
  %2042 = vmatprep.mubr.f32.mxu0 0.0
  %2043 = vmatmul.mubr.f32.gmra.mrb[0].mxu0 %v1968
  %v2044 = vpop.f32.mrb[0].mxu0
  %v2045 = vadd.f32 0.0, %v2044
  %v2046 = vpop.f32.mrb[0].mxu0
  %v2047 = vadd.f32 0.0, %v2046
  %2048 = vdwg.mxu0
  %2049 = vmatprep.subr.mxu0 %v1976
  %2050 = vmatpush1.msra.mxu0 %v1974
  %2051 = vmatprep.subr.mxu0 0.0
  %2052 = vmatpush1.msra.mxu0 0.0
  %2053 = vmatprep.subr.mxu0 0.0
  %2054 = vmatpush1.msra.mxu0 0.0
  %2055 = vmatprep.subr.mxu0 0.0
  %2056 = vmatpush1.msra.mxu0 0.0
  %2057 = vmatprep.subr.mxu0 0.0
  %2058 = vmatpush1.msra.mxu0 0.0
  %2059 = vmatprep.subr.mxu0 0.0
  %2060 = vmatpush1.msra.mxu0 0.0
  %2061 = vmatprep.subr.mxu0 0.0
  %2062 = vmatpush1.msra.mxu0 0.0
  %2063 = vmatprep.subr.mxu0 0.0
  %2064 = vmatpush1.msra.mxu0 0.0
  %2065 = vmatprep.subr.mxu0 0.0
  %2066 = vmatpush1.msra.mxu0 0.0
  %2067 = vmatprep.subr.mxu0 0.0
  %2068 = vmatpush1.msra.mxu0 0.0
  %2069 = vmatprep.subr.mxu0 0.0
  %2070 = vmatpush1.msra.mxu0 0.0
  %2071 = vmatprep.subr.mxu0 0.0
  %2072 = vmatpush1.msra.mxu0 0.0
  %2073 = vmatprep.subr.mxu0 0.0
  %2074 = vmatpush1.msra.mxu0 0.0
  %2075 = vmatprep.subr.mxu0 0.0
  %2076 = vmatpush1.msra.mxu0 0.0
  %2077 = vmatprep.subr.mxu0 0.0
  %2078 = vmatpush1.msra.mxu0 0.0
  %2079 = vmatprep.subr.mxu0 0.0
  %2080 = vmatpush1.msra.mxu0 0.0
  %2081 = vmatprep.subr.mxu0 0.0
  %2082 = vmatpush1.msra.mxu0 0.0
  %2083 = vmatprep.subr.mxu0 0.0
  %2084 = vmatpush1.msra.mxu0 0.0
  %2085 = vmatprep.subr.mxu0 0.0
  %2086 = vmatpush1.msra.mxu0 0.0
  %2087 = vmatprep.subr.mxu0 0.0
  %2088 = vmatpush1.msra.mxu0 0.0
  %2089 = vmatprep.subr.mxu0 0.0
  %2090 = vmatpush1.msra.mxu0 0.0
  %2091 = vmatprep.subr.mxu0 0.0
  %2092 = vmatpush1.msra.mxu0 0.0
  %2093 = vmatprep.subr.mxu0 0.0
  %2094 = vmatpush1.msra.mxu0 0.0
  %2095 = vmatprep.subr.mxu0 0.0
  %2096 = vmatpush1.msra.mxu0 0.0
  %2097 = vmatprep.subr.mxu0 0.0
  %2098 = vmatpush1.msra.mxu0 0.0
  %2099 = vmatprep.subr.mxu0 0.0
  %2100 = vmatpush1.msra.mxu0 0.0
  %2101 = vmatprep.subr.mxu0 0.0
  %2102 = vmatpush1.msra.mxu0 0.0
  %2103 = vmatprep.subr.mxu0 0.0
  %2104 = vmatpush1.msra.mxu0 0.0
  %2105 = vmatprep.subr.mxu0 0.0
  %2106 = vmatpush1.msra.mxu0 0.0
  %2107 = vmatprep.subr.mxu0 0.0
  %2108 = vmatpush1.msra.mxu0 0.0
  %2109 = vmatprep.subr.mxu0 0.0
  %2110 = vmatpush1.msra.mxu0 0.0
  %2111 = vmatprep.subr.mxu0 0.0
  %2112 = vmatpush1.msra.mxu0 0.0
  %2113 = vmatprep.mubr.f32.mxu0 0.0
  %2114 = vmatmul.mubr.f32.gmra.mrb[0].mxu0 %v1968
  %v2115 = vpop.f32.mrb[0].mxu0
  %v2116 = vadd.f32 0.0, %v2115
  %v2117 = vpop.f32.mrb[0].mxu0
  %v2118 = vadd.f32 0.0, %v2117
  %2119 = vdwg.mxu0
  %v2121 = vsel %vm1966, %v1940, 0
  %v2124 = vsel %vm1852, %v1936, 0
  %v2127 = vsel %vm1852, %v1937, 0
  %v2130 = vsel %vm1852, %v1938, 0
  %v2133 = vsel %vm1852, %v1939, 0
  %2135 = vmatprep.subr.mxu0 %v2127
  %2136 = vmatpush1.msra.mxu0 %v2124
  %2137 = vmatprep.subr.mxu0 0.0
  %2138 = vmatpush1.msra.mxu0 0.0
  %2139 = vmatprep.subr.mxu0 0.0
  %2140 = vmatpush1.msra.mxu0 0.0
  %2141 = vmatprep.subr.mxu0 0.0
  %2142 = vmatpush1.msra.mxu0 0.0
  %2143 = vmatprep.subr.mxu0 0.0
  %2144 = vmatpush1.msra.mxu0 0.0
  %2145 = vmatprep.subr.mxu0 0.0
  %2146 = vmatpush1.msra.mxu0 0.0
  %2147 = vmatprep.subr.mxu0 0.0
  %2148 = vmatpush1.msra.mxu0 0.0
  %2149 = vmatprep.subr.mxu0 0.0
  %2150 = vmatpush1.msra.mxu0 0.0
  %2151 = vmatprep.subr.mxu0 0.0
  %2152 = vmatpush1.msra.mxu0 0.0
  %2153 = vmatprep.subr.mxu0 0.0
  %2154 = vmatpush1.msra.mxu0 0.0
  %2155 = vmatprep.subr.mxu0 0.0
  %2156 = vmatpush1.msra.mxu0 0.0
  %2157 = vmatprep.subr.mxu0 0.0
  %2158 = vmatpush1.msra.mxu0 0.0
  %2159 = vmatprep.subr.mxu0 0.0
  %2160 = vmatpush1.msra.mxu0 0.0
  %2161 = vmatprep.subr.mxu0 0.0
  %2162 = vmatpush1.msra.mxu0 0.0
  %2163 = vmatprep.subr.mxu0 0.0
  %2164 = vmatpush1.msra.mxu0 0.0
  %2165 = vmatprep.subr.mxu0 0.0
  %2166 = vmatpush1.msra.mxu0 0.0
  %2167 = vmatprep.subr.mxu0 0.0
  %2168 = vmatpush1.msra.mxu0 0.0
  %2169 = vmatprep.subr.mxu0 0.0
  %2170 = vmatpush1.msra.mxu0 0.0
  %2171 = vmatprep.subr.mxu0 0.0
  %2172 = vmatpush1.msra.mxu0 0.0
  %2173 = vmatprep.subr.mxu0 0.0
  %2174 = vmatpush1.msra.mxu0 0.0
  %2175 = vmatprep.subr.mxu0 0.0
  %2176 = vmatpush1.msra.mxu0 0.0
  %2177 = vmatprep.subr.mxu0 0.0
  %2178 = vmatpush1.msra.mxu0 0.0
  %2179 = vmatprep.subr.mxu0 0.0
  %2180 = vmatpush1.msra.mxu0 0.0
  %2181 = vmatprep.subr.mxu0 0.0
  %2182 = vmatpush1.msra.mxu0 0.0
  %2183 = vmatprep.subr.mxu0 0.0
  %2184 = vmatpush1.msra.mxu0 0.0
  %2185 = vmatprep.subr.mxu0 0.0
  %2186 = vmatpush1.msra.mxu0 0.0
  %2187 = vmatprep.subr.mxu0 0.0
  %2188 = vmatpush1.msra.mxu0 0.0
  %2189 = vmatprep.subr.mxu0 0.0
  %2190 = vmatpush1.msra.mxu0 0.0
  %2191 = vmatprep.subr.mxu0 0.0
  %2192 = vmatpush1.msra.mxu0 0.0
  %2193 = vmatprep.subr.mxu0 0.0
  %2194 = vmatpush1.msra.mxu0 0.0
  %2195 = vmatprep.subr.mxu0 0.0
  %2196 = vmatpush1.msra.mxu0 0.0
  %2197 = vmatprep.subr.mxu0 0.0
  %2198 = vmatpush1.msra.mxu0 0.0
  %2199 = vmatprep.mubr.f32.mxu0 0.0
  %2200 = vmatmul.mubr.f32.gmra.mrb[0].mxu0 %v2121
  %v2201 = vpop.f32.mrb[0].mxu0
  %v2202 = vadd.f32 %v2045, %v2201
  %v2203 = vpop.f32.mrb[0].mxu0
  %v2204 = vadd.f32 %v2047, %v2203
  %2205 = vdwg.mxu0
  %2206 = vmatprep.subr.mxu0 %v2133
  %2207 = vmatpush1.msra.mxu0 %v2130
  %2208 = vmatprep.subr.mxu0 0.0
  %2209 = vmatpush1.msra.mxu0 0.0
  %2210 = vmatprep.subr.mxu0 0.0
  %2211 = vmatpush1.msra.mxu0 0.0
  %2212 = vmatprep.subr.mxu0 0.0
  %2213 = vmatpush1.msra.mxu0 0.0
  %2214 = vmatprep.subr.mxu0 0.0
  %2215 = vmatpush1.msra.mxu0 0.0
  %2216 = vmatprep.subr.mxu0 0.0
  %2217 = vmatpush1.msra.mxu0 0.0
  %2218 = vmatprep.subr.mxu0 0.0
  %2219 = vmatpush1.msra.mxu0 0.0
  %2220 = vmatprep.subr.mxu0 0.0
  %2221 = vmatpush1.msra.mxu0 0.0
  %2222 = vmatprep.subr.mxu0 0.0
  %2223 = vmatpush1.msra.mxu0 0.0
  %2224 = vmatprep.subr.mxu0 0.0
  %2225 = vmatpush1.msra.mxu0 0.0
  %2226 = vmatprep.subr.mxu0 0.0
  %2227 = vmatpush1.msra.mxu0 0.0
  %2228 = vmatprep.subr.mxu0 0.0
  %2229 = vmatpush1.msra.mxu0 0.0
  %2230 = vmatprep.subr.mxu0 0.0
  %2231 = vmatpush1.msra.mxu0 0.0
  %2232 = vmatprep.subr.mxu0 0.0
  %2233 = vmatpush1.msra.mxu0 0.0
  %2234 = vmatprep.subr.mxu0 0.0
  %2235 = vmatpush1.msra.mxu0 0.0
  %2236 = vmatprep.subr.mxu0 0.0
  %2237 = vmatpush1.msra.mxu0 0.0
  %2238 = vmatprep.subr.mxu0 0.0
  %2239 = vmatpush1.msra.mxu0 0.0
  %2240 = vmatprep.subr.mxu0 0.0
  %2241 = vmatpush1.msra.mxu0 0.0
  %2242 = vmatprep.subr.mxu0 0.0
  %2243 = vmatpush1.msra.mxu0 0.0
  %2244 = vmatprep.subr.mxu0 0.0
  %2245 = vmatpush1.msra.mxu0 0.0
  %2246 = vmatprep.subr.mxu0 0.0
  %2247 = vmatpush1.msra.mxu0 0.0
  %2248 = vmatprep.subr.mxu0 0.0
  %2249 = vmatpush1.msra.mxu0 0.0
  %2250 = vmatprep.subr.mxu0 0.0
  %2251 = vmatpush1.msra.mxu0 0.0
  %2252 = vmatprep.subr.mxu0 0.0
  %2253 = vmatpush1.msra.mxu0 0.0
  %2254 = vmatprep.subr.mxu0 0.0
  %2255 = vmatpush1.msra.mxu0 0.0
  %2256 = vmatprep.subr.mxu0 0.0
  %2257 = vmatpush1.msra.mxu0 0.0
  %2258 = vmatprep.subr.mxu0 0.0
  %2259 = vmatpush1.msra.mxu0 0.0
  %2260 = vmatprep.subr.mxu0 0.0
  %2261 = vmatpush1.msra.mxu0 0.0
  %2262 = vmatprep.subr.mxu0 0.0
  %2263 = vmatpush1.msra.mxu0 0.0
  %2264 = vmatprep.subr.mxu0 0.0
  %2265 = vmatpush1.msra.mxu0 0.0
  %2266 = vmatprep.subr.mxu0 0.0
  %2267 = vmatpush1.msra.mxu0 0.0
  %2268 = vmatprep.subr.mxu0 0.0
  %2269 = vmatpush1.msra.mxu0 0.0
  %2270 = vmatprep.mubr.f32.mxu0 0.0
  %2271 = vmatmul.mubr.f32.gmra.mrb[0].mxu0 %v2121
  %v2272 = vpop.f32.mrb[0].mxu0
  %v2273 = vadd.f32 %v2116, %v2272
  %v2274 = vpop.f32.mrb[0].mxu0
  %v2275 = vadd.f32 %v2118, %v2274
  %2276 = vdwg.mxu0
  %v2277 = vmul.f32 %v1934, %v486
  %v2278 = vmul.f32 %v1926, %v494
  %v2279 = vmul.f32 %v1927, %v495
  %v2280 = vmul.f32 %v1928, %v496
  %v2281 = vmul.f32 %v1935, %v492
  %v2282 = vld [vmem:[%s4 + $0x8] sm:$0xf]
  %2288 = vrot.lane.b32.xlu0 %v2277, 126
  %v2289 = vpop.permute.xlu0 %2288
  %2290 = vrot.lane.b32.xlu0 %v2278, 126
  %v2291 = vpop.permute.xlu0 %2290
  %2292 = vrot.lane.b32.xlu0 %v2279, 126
  %v2293 = vpop.permute.xlu0 %2292
  %2294 = vrot.lane.b32.xlu0 %v2280, 126
  %v2295 = vpop.permute.xlu0 %2294
  %2296 = vrot.lane.b32.xlu0 %v2281, 126
  %v2297 = vpop.permute.xlu0 %2296
  %v2298 = vsel %vm523, %v2289, %v2291
  %v2299 = vsel %vm523, %v2291, %v2293
  %v2300 = vsel %vm523, %v2293, %v2295
  %v2301 = vsel %vm523, %v2295, %v2297
  %v2303 = vsel %vm1966, %v2282, 0
  %v2305 = vsel %vm1852, %v2298, 0
  %v2307 = vsel %vm1852, %v2299, 0
  %v2309 = vsel %vm1852, %v2300, 0
  %v2311 = vsel %vm1852, %v2301, 0
  %2313 = vmatprep.subr.mxu0 %v2307
  %2314 = vmatpush1.msra.mxu0 %v2305
  %2315 = vmatprep.subr.mxu0 0.0
  %2316 = vmatpush1.msra.mxu0 0.0
  %2317 = vmatprep.subr.mxu0 0.0
  %2318 = vmatpush1.msra.mxu0 0.0
  %2319 = vmatprep.subr.mxu0 0.0
  %2320 = vmatpush1.msra.mxu0 0.0
  %2321 = vmatprep.subr.mxu0 0.0
  %2322 = vmatpush1.msra.mxu0 0.0
  %2323 = vmatprep.subr.mxu0 0.0
  %2324 = vmatpush1.msra.mxu0 0.0
  %2325 = vmatprep.subr.mxu0 0.0
  %2326 = vmatpush1.msra.mxu0 0.0
  %2327 = vmatprep.subr.mxu0 0.0
  %2328 = vmatpush1.msra.mxu0 0.0
  %2329 = vmatprep.subr.mxu0 0.0
  %2330 = vmatpush1.msra.mxu0 0.0
  %2331 = vmatprep.subr.mxu0 0.0
  %2332 = vmatpush1.msra.mxu0 0.0
  %2333 = vmatprep.subr.mxu0 0.0
  %2334 = vmatpush1.msra.mxu0 0.0
  %2335 = vmatprep.subr.mxu0 0.0
  %2336 = vmatpush1.msra.mxu0 0.0
  %2337 = vmatprep.subr.mxu0 0.0
  %2338 = vmatpush1.msra.mxu0 0.0
  %2339 = vmatprep.subr.mxu0 0.0
  %2340 = vmatpush1.msra.mxu0 0.0
  %2341 = vmatprep.subr.mxu0 0.0
  %2342 = vmatpush1.msra.mxu0 0.0
  %2343 = vmatprep.subr.mxu0 0.0
  %2344 = vmatpush1.msra.mxu0 0.0
  %2345 = vmatprep.subr.mxu0 0.0
  %2346 = vmatpush1.msra.mxu0 0.0
  %2347 = vmatprep.subr.mxu0 0.0
  %2348 = vmatpush1.msra.mxu0 0.0
  %2349 = vmatprep.subr.mxu0 0.0
  %2350 = vmatpush1.msra.mxu0 0.0
  %2351 = vmatprep.subr.mxu0 0.0
  %2352 = vmatpush1.msra.mxu0 0.0
  %2353 = vmatprep.subr.mxu0 0.0
  %2354 = vmatpush1.msra.mxu0 0.0
  %2355 = vmatprep.subr.mxu0 0.0
  %2356 = vmatpush1.msra.mxu0 0.0
  %2357 = vmatprep.subr.mxu0 0.0
  %2358 = vmatpush1.msra.mxu0 0.0
  %2359 = vmatprep.subr.mxu0 0.0
  %2360 = vmatpush1.msra.mxu0 0.0
  %2361 = vmatprep.subr.mxu0 0.0
  %2362 = vmatpush1.msra.mxu0 0.0
  %2363 = vmatprep.subr.mxu0 0.0
  %2364 = vmatpush1.msra.mxu0 0.0
  %2365 = vmatprep.subr.mxu0 0.0
  %2366 = vmatpush1.msra.mxu0 0.0
  %2367 = vmatprep.subr.mxu0 0.0
  %2368 = vmatpush1.msra.mxu0 0.0
  %2369 = vmatprep.subr.mxu0 0.0
  %2370 = vmatpush1.msra.mxu0 0.0
  %2371 = vmatprep.subr.mxu0 0.0
  %2372 = vmatpush1.msra.mxu0 0.0
  %2373 = vmatprep.subr.mxu0 0.0
  %2374 = vmatpush1.msra.mxu0 0.0
  %2375 = vmatprep.subr.mxu0 0.0
  %2376 = vmatpush1.msra.mxu0 0.0
  %2377 = vmatprep.mubr.f32.mxu0 0.0
  %2378 = vmatmul.mubr.f32.gmra.mrb[0].mxu0 %v2303
  %v2379 = vpop.f32.mrb[0].mxu0
  %v2380 = vadd.f32 0.0, %v2379
  %v2381 = vpop.f32.mrb[0].mxu0
  %v2382 = vadd.f32 0.0, %v2381
  %2383 = vdwg.mxu0
  %2384 = vmatprep.subr.mxu0 %v2311
  %2385 = vmatpush1.msra.mxu0 %v2309
  %2386 = vmatprep.subr.mxu0 0.0
  %2387 = vmatpush1.msra.mxu0 0.0
  %2388 = vmatprep.subr.mxu0 0.0
  %2389 = vmatpush1.msra.mxu0 0.0
  %2390 = vmatprep.subr.mxu0 0.0
  %2391 = vmatpush1.msra.mxu0 0.0
  %2392 = vmatprep.subr.mxu0 0.0
  %2393 = vmatpush1.msra.mxu0 0.0
  %2394 = vmatprep.subr.mxu0 0.0
  %2395 = vmatpush1.msra.mxu0 0.0
  %2396 = vmatprep.subr.mxu0 0.0
  %2397 = vmatpush1.msra.mxu0 0.0
  %2398 = vmatprep.subr.mxu0 0.0
  %2399 = vmatpush1.msra.mxu0 0.0
  %2400 = vmatprep.subr.mxu0 0.0
  %2401 = vmatpush1.msra.mxu0 0.0
  %2402 = vmatprep.subr.mxu0 0.0
  %2403 = vmatpush1.msra.mxu0 0.0
  %2404 = vmatprep.subr.mxu0 0.0
  %2405 = vmatpush1.msra.mxu0 0.0
  %2406 = vmatprep.subr.mxu0 0.0
  %2407 = vmatpush1.msra.mxu0 0.0
  %2408 = vmatprep.subr.mxu0 0.0
  %2409 = vmatpush1.msra.mxu0 0.0
  %2410 = vmatprep.subr.mxu0 0.0
  %2411 = vmatpush1.msra.mxu0 0.0
  %2412 = vmatprep.subr.mxu0 0.0
  %2413 = vmatpush1.msra.mxu0 0.0
  %2414 = vmatprep.subr.mxu0 0.0
  %2415 = vmatpush1.msra.mxu0 0.0
  %2416 = vmatprep.subr.mxu0 0.0
  %2417 = vmatpush1.msra.mxu0 0.0
  %2418 = vmatprep.subr.mxu0 0.0
  %2419 = vmatpush1.msra.mxu0 0.0
  %2420 = vmatprep.subr.mxu0 0.0
  %2421 = vmatpush1.msra.mxu0 0.0
  %2422 = vmatprep.subr.mxu0 0.0
  %2423 = vmatpush1.msra.mxu0 0.0
  %2424 = vmatprep.subr.mxu0 0.0
  %2425 = vmatpush1.msra.mxu0 0.0
  %2426 = vmatprep.subr.mxu0 0.0
  %2427 = vmatpush1.msra.mxu0 0.0
  %2428 = vmatprep.subr.mxu0 0.0
  %2429 = vmatpush1.msra.mxu0 0.0
  %2430 = vmatprep.subr.mxu0 0.0
  %2431 = vmatpush1.msra.mxu0 0.0
  %2432 = vmatprep.subr.mxu0 0.0
  %2433 = vmatpush1.msra.mxu0 0.0
  %2434 = vmatprep.subr.mxu0 0.0
  %2435 = vmatpush1.msra.mxu0 0.0
  %2436 = vmatprep.subr.mxu0 0.0
  %2437 = vmatpush1.msra.mxu0 0.0
  %2438 = vmatprep.subr.mxu0 0.0
  %2439 = vmatpush1.msra.mxu0 0.0
  %2440 = vmatprep.subr.mxu0 0.0
  %2441 = vmatpush1.msra.mxu0 0.0
  %2442 = vmatprep.subr.mxu0 0.0
  %2443 = vmatpush1.msra.mxu0 0.0
  %2444 = vmatprep.subr.mxu0 0.0
  %2445 = vmatpush1.msra.mxu0 0.0
  %2446 = vmatprep.subr.mxu0 0.0
  %2447 = vmatpush1.msra.mxu0 0.0
  %2448 = vmatprep.mubr.f32.mxu0 0.0
  %2449 = vmatmul.mubr.f32.gmra.mrb[0].mxu0 %v2303
  %v2450 = vpop.f32.mrb[0].mxu0
  %v2451 = vadd.f32 0.0, %v2450
  %v2452 = vpop.f32.mrb[0].mxu0
  %v2453 = vadd.f32 0.0, %v2452
  %2454 = vdwg.mxu0
  %v2455 = vadd.f32 %v2202, %v2380
  %v2456 = vadd.f32 %v2204, %v2382
  %v2457 = vadd.f32 %v2273, %v2451
  %v2458 = vadd.f32 %v2275, %v2453
  %v2459 = vmul.f32 %v1934, %v686
  %v2460 = vmul.f32 %v1926, %v694
  %v2461 = vmul.f32 %v1927, %v695
  %v2462 = vmul.f32 %v1928, %v696
  %v2463 = vmul.f32 %v1935, %v692
  %v2464 = vld [vmem:[%s4 + $0xc] sm:$0xf]
  %2470 = vrot.lane.b32.xlu0 %v2459, 112
  %v2471 = vpop.permute.xlu0 %2470
  %2472 = vrot.lane.b32.xlu0 %v2460, 112
  %v2473 = vpop.permute.xlu0 %2472
  %2474 = vrot.lane.b32.xlu0 %v2461, 112
  %v2475 = vpop.permute.xlu0 %2474
  %2476 = vrot.lane.b32.xlu0 %v2462, 112
  %v2477 = vpop.permute.xlu0 %2476
  %2478 = vrot.lane.b32.xlu0 %v2463, 112
  %v2479 = vpop.permute.xlu0 %2478
  %v2480 = vsel %vm723, %v2471, %v2473
  %v2481 = vsel %vm723, %v2473, %v2475
  %v2482 = vsel %vm723, %v2475, %v2477
  %v2483 = vsel %vm723, %v2477, %v2479
  %v2485 = vsel %vm1966, %v2464, 0
  %v2487 = vsel %vm1852, %v2480, 0
  %v2489 = vsel %vm1852, %v2481, 0
  %v2491 = vsel %vm1852, %v2482, 0
  %v2493 = vsel %vm1852, %v2483, 0
  %2495 = vmatprep.subr.mxu0 %v2489
  %2496 = vmatpush1.msra.mxu0 %v2487
  %2497 = vmatprep.subr.mxu0 0.0
  %2498 = vmatpush1.msra.mxu0 0.0
  %2499 = vmatprep.subr.mxu0 0.0
  %2500 = vmatpush1.msra.mxu0 0.0
  %2501 = vmatprep.subr.mxu0 0.0
  %2502 = vmatpush1.msra.mxu0 0.0
  %2503 = vmatprep.subr.mxu0 0.0
  %2504 = vmatpush1.msra.mxu0 0.0
  %2505 = vmatprep.subr.mxu0 0.0
  %2506 = vmatpush1.msra.mxu0 0.0
  %2507 = vmatprep.subr.mxu0 0.0
  %2508 = vmatpush1.msra.mxu0 0.0
  %2509 = vmatprep.subr.mxu0 0.0
  %2510 = vmatpush1.msra.mxu0 0.0
  %2511 = vmatprep.subr.mxu0 0.0
  %2512 = vmatpush1.msra.mxu0 0.0
  %2513 = vmatprep.subr.mxu0 0.0
  %2514 = vmatpush1.msra.mxu0 0.0
  %2515 = vmatprep.subr.mxu0 0.0
  %2516 = vmatpush1.msra.mxu0 0.0
  %2517 = vmatprep.subr.mxu0 0.0
  %2518 = vmatpush1.msra.mxu0 0.0
  %2519 = vmatprep.subr.mxu0 0.0
  %2520 = vmatpush1.msra.mxu0 0.0
  %2521 = vmatprep.subr.mxu0 0.0
  %2522 = vmatpush1.msra.mxu0 0.0
  %2523 = vmatprep.subr.mxu0 0.0
  %2524 = vmatpush1.msra.mxu0 0.0
  %2525 = vmatprep.subr.mxu0 0.0
  %2526 = vmatpush1.msra.mxu0 0.0
  %2527 = vmatprep.subr.mxu0 0.0
  %2528 = vmatpush1.msra.mxu0 0.0
  %2529 = vmatprep.subr.mxu0 0.0
  %2530 = vmatpush1.msra.mxu0 0.0
  %2531 = vmatprep.subr.mxu0 0.0
  %2532 = vmatpush1.msra.mxu0 0.0
  %2533 = vmatprep.subr.mxu0 0.0
  %2534 = vmatpush1.msra.mxu0 0.0
  %2535 = vmatprep.subr.mxu0 0.0
  %2536 = vmatpush1.msra.mxu0 0.0
  %2537 = vmatprep.subr.mxu0 0.0
  %2538 = vmatpush1.msra.mxu0 0.0
  %2539 = vmatprep.subr.mxu0 0.0
  %2540 = vmatpush1.msra.mxu0 0.0
  %2541 = vmatprep.subr.mxu0 0.0
  %2542 = vmatpush1.msra.mxu0 0.0
  %2543 = vmatprep.subr.mxu0 0.0
  %2544 = vmatpush1.msra.mxu0 0.0
  %2545 = vmatprep.subr.mxu0 0.0
  %2546 = vmatpush1.msra.mxu0 0.0
  %2547 = vmatprep.subr.mxu0 0.0
  %2548 = vmatpush1.msra.mxu0 0.0
  %2549 = vmatprep.subr.mxu0 0.0
  %2550 = vmatpush1.msra.mxu0 0.0
  %2551 = vmatprep.subr.mxu0 0.0
  %2552 = vmatpush1.msra.mxu0 0.0
  %2553 = vmatprep.subr.mxu0 0.0
  %2554 = vmatpush1.msra.mxu0 0.0
  %2555 = vmatprep.subr.mxu0 0.0
  %2556 = vmatpush1.msra.mxu0 0.0
  %2557 = vmatprep.subr.mxu0 0.0
  %2558 = vmatpush1.msra.mxu0 0.0
  %2559 = vmatprep.mubr.f32.mxu0 0.0
  %2560 = vmatmul.mubr.f32.gmra.mrb[0].mxu0 %v2485
  %v2561 = vpop.f32.mrb[0].mxu0
  %v2562 = vadd.f32 0.0, %v2561
  %v2563 = vpop.f32.mrb[0].mxu0
  %v2564 = vadd.f32 0.0, %v2563
  %2565 = vdwg.mxu0
  %2566 = vmatprep.subr.mxu0 %v2493
  %2567 = vmatpush1.msra.mxu0 %v2491
  %2568 = vmatprep.subr.mxu0 0.0
  %2569 = vmatpush1.msra.mxu0 0.0
  %2570 = vmatprep.subr.mxu0 0.0
  %2571 = vmatpush1.msra.mxu0 0.0
  %2572 = vmatprep.subr.mxu0 0.0
  %2573 = vmatpush1.msra.mxu0 0.0
  %2574 = vmatprep.subr.mxu0 0.0
  %2575 = vmatpush1.msra.mxu0 0.0
  %2576 = vmatprep.subr.mxu0 0.0
  %2577 = vmatpush1.msra.mxu0 0.0
  %2578 = vmatprep.subr.mxu0 0.0
  %2579 = vmatpush1.msra.mxu0 0.0
  %2580 = vmatprep.subr.mxu0 0.0
  %2581 = vmatpush1.msra.mxu0 0.0
  %2582 = vmatprep.subr.mxu0 0.0
  %2583 = vmatpush1.msra.mxu0 0.0
  %2584 = vmatprep.subr.mxu0 0.0
  %2585 = vmatpush1.msra.mxu0 0.0
  %2586 = vmatprep.subr.mxu0 0.0
  %2587 = vmatpush1.msra.mxu0 0.0
  %2588 = vmatprep.subr.mxu0 0.0
  %2589 = vmatpush1.msra.mxu0 0.0
  %2590 = vmatprep.subr.mxu0 0.0
  %2591 = vmatpush1.msra.mxu0 0.0
  %2592 = vmatprep.subr.mxu0 0.0
  %2593 = vmatpush1.msra.mxu0 0.0
  %2594 = vmatprep.subr.mxu0 0.0
  %2595 = vmatpush1.msra.mxu0 0.0
  %2596 = vmatprep.subr.mxu0 0.0
  %2597 = vmatpush1.msra.mxu0 0.0
  %2598 = vmatprep.subr.mxu0 0.0
  %2599 = vmatpush1.msra.mxu0 0.0
  %2600 = vmatprep.subr.mxu0 0.0
  %2601 = vmatpush1.msra.mxu0 0.0
  %2602 = vmatprep.subr.mxu0 0.0
  %2603 = vmatpush1.msra.mxu0 0.0
  %2604 = vmatprep.subr.mxu0 0.0
  %2605 = vmatpush1.msra.mxu0 0.0
  %2606 = vmatprep.subr.mxu0 0.0
  %2607 = vmatpush1.msra.mxu0 0.0
  %2608 = vmatprep.subr.mxu0 0.0
  %2609 = vmatpush1.msra.mxu0 0.0
  %2610 = vmatprep.subr.mxu0 0.0
  %2611 = vmatpush1.msra.mxu0 0.0
  %2612 = vmatprep.subr.mxu0 0.0
  %2613 = vmatpush1.msra.mxu0 0.0
  %2614 = vmatprep.subr.mxu0 0.0
  %2615 = vmatpush1.msra.mxu0 0.0
  %2616 = vmatprep.subr.mxu0 0.0
  %2617 = vmatpush1.msra.mxu0 0.0
  %2618 = vmatprep.subr.mxu0 0.0
  %2619 = vmatpush1.msra.mxu0 0.0
  %2620 = vmatprep.subr.mxu0 0.0
  %2621 = vmatpush1.msra.mxu0 0.0
  %2622 = vmatprep.subr.mxu0 0.0
  %2623 = vmatpush1.msra.mxu0 0.0
  %2624 = vmatprep.subr.mxu0 0.0
  %2625 = vmatpush1.msra.mxu0 0.0
  %2626 = vmatprep.subr.mxu0 0.0
  %2627 = vmatpush1.msra.mxu0 0.0
  %2628 = vmatprep.subr.mxu0 0.0
  %2629 = vmatpush1.msra.mxu0 0.0
  %2630 = vmatprep.mubr.f32.mxu0 0.0
  %2631 = vmatmul.mubr.f32.gmra.mrb[0].mxu0 %v2485
  %v2632 = vpop.f32.mrb[0].mxu0
  %v2633 = vadd.f32 0.0, %v2632
  %v2634 = vpop.f32.mrb[0].mxu0
  %v2635 = vadd.f32 0.0, %v2634
  %2636 = vdwg.mxu0
  %v2637 = vadd.f32 %v2455, %v2562
  %v2638 = vadd.f32 %v2456, %v2564
  %v2639 = vadd.f32 %v2457, %v2633
  %v2640 = vadd.f32 %v2458, %v2635
  %v2641 = vld [vmem:[%s4 + $0x10] sm:$0xf]
  %2644 = vrot.lane.b32.xlu0 %v1934, 111
  %v2645 = vpop.permute.xlu0 %2644
  %2646 = vrot.lane.b32.xlu0 %v1926, 111
  %v2647 = vpop.permute.xlu0 %2646
  %2648 = vrot.lane.b32.xlu0 %v1927, 111
  %v2649 = vpop.permute.xlu0 %2648
  %2650 = vrot.lane.b32.xlu0 %v1928, 111
  %v2651 = vpop.permute.xlu0 %2650
  %2652 = vrot.lane.b32.xlu0 %v1935, 111
  %v2653 = vpop.permute.xlu0 %2652
  %v2654 = vsel %vm894, %v2645, %v2647
  %v2655 = vsel %vm894, %v2647, %v2649
  %v2656 = vsel %vm894, %v2649, %v2651
  %v2657 = vsel %vm894, %v2651, %v2653
  %v2659 = vsel %vm1966, %v2641, 0
  %v2661 = vsel %vm1852, %v2654, 0
  %v2663 = vsel %vm1852, %v2655, 0
  %v2665 = vsel %vm1852, %v2656, 0
  %v2667 = vsel %vm1852, %v2657, 0
  %2669 = vmatprep.subr.mxu0 %v2663
  %2670 = vmatpush1.msra.mxu0 %v2661
  %2671 = vmatprep.subr.mxu0 0.0
  %2672 = vmatpush1.msra.mxu0 0.0
  %2673 = vmatprep.subr.mxu0 0.0
  %2674 = vmatpush1.msra.mxu0 0.0
  %2675 = vmatprep.subr.mxu0 0.0
  %2676 = vmatpush1.msra.mxu0 0.0
  %2677 = vmatprep.subr.mxu0 0.0
  %2678 = vmatpush1.msra.mxu0 0.0
  %2679 = vmatprep.subr.mxu0 0.0
  %2680 = vmatpush1.msra.mxu0 0.0
  %2681 = vmatprep.subr.mxu0 0.0
  %2682 = vmatpush1.msra.mxu0 0.0
  %2683 = vmatprep.subr.mxu0 0.0
  %2684 = vmatpush1.msra.mxu0 0.0
  %2685 = vmatprep.subr.mxu0 0.0
  %2686 = vmatpush1.msra.mxu0 0.0
  %2687 = vmatprep.subr.mxu0 0.0
  %2688 = vmatpush1.msra.mxu0 0.0
  %2689 = vmatprep.subr.mxu0 0.0
  %2690 = vmatpush1.msra.mxu0 0.0
  %2691 = vmatprep.subr.mxu0 0.0
  %2692 = vmatpush1.msra.mxu0 0.0
  %2693 = vmatprep.subr.mxu0 0.0
  %2694 = vmatpush1.msra.mxu0 0.0
  %2695 = vmatprep.subr.mxu0 0.0
  %2696 = vmatpush1.msra.mxu0 0.0
  %2697 = vmatprep.subr.mxu0 0.0
  %2698 = vmatpush1.msra.mxu0 0.0
  %2699 = vmatprep.subr.mxu0 0.0
  %2700 = vmatpush1.msra.mxu0 0.0
  %2701 = vmatprep.subr.mxu0 0.0
  %2702 = vmatpush1.msra.mxu0 0.0
  %2703 = vmatprep.subr.mxu0 0.0
  %2704 = vmatpush1.msra.mxu0 0.0
  %2705 = vmatprep.subr.mxu0 0.0
  %2706 = vmatpush1.msra.mxu0 0.0
  %2707 = vmatprep.subr.mxu0 0.0
  %2708 = vmatpush1.msra.mxu0 0.0
  %2709 = vmatprep.subr.mxu0 0.0
  %2710 = vmatpush1.msra.mxu0 0.0
  %2711 = vmatprep.subr.mxu0 0.0
  %2712 = vmatpush1.msra.mxu0 0.0
  %2713 = vmatprep.subr.mxu0 0.0
  %2714 = vmatpush1.msra.mxu0 0.0
  %2715 = vmatprep.subr.mxu0 0.0
  %2716 = vmatpush1.msra.mxu0 0.0
  %2717 = vmatprep.subr.mxu0 0.0
  %2718 = vmatpush1.msra.mxu0 0.0
  %2719 = vmatprep.subr.mxu0 0.0
  %2720 = vmatpush1.msra.mxu0 0.0
  %2721 = vmatprep.subr.mxu0 0.0
  %2722 = vmatpush1.msra.mxu0 0.0
  %2723 = vmatprep.subr.mxu0 0.0
  %2724 = vmatpush1.msra.mxu0 0.0
  %2725 = vmatprep.subr.mxu0 0.0
  %2726 = vmatpush1.msra.mxu0 0.0
  %2727 = vmatprep.subr.mxu0 0.0
  %2728 = vmatpush1.msra.mxu0 0.0
  %2729 = vmatprep.subr.mxu0 0.0
  %2730 = vmatpush1.msra.mxu0 0.0
  %2731 = vmatprep.subr.mxu0 0.0
  %2732 = vmatpush1.msra.mxu0 0.0
  %2733 = vmatprep.mubr.f32.mxu0 0.0
  %2734 = vmatmul.mubr.f32.gmra.mrb[0].mxu0 %v2659
  %v2735 = vpop.f32.mrb[0].mxu0
  %v2736 = vadd.f32 0.0, %v2735
  %v2737 = vpop.f32.mrb[0].mxu0
  %v2738 = vadd.f32 0.0, %v2737
  %2739 = vdwg.mxu0
  %2740 = vmatprep.subr.mxu0 %v2667
  %2741 = vmatpush1.msra.mxu0 %v2665
  %2742 = vmatprep.subr.mxu0 0.0
  %2743 = vmatpush1.msra.mxu0 0.0
  %2744 = vmatprep.subr.mxu0 0.0
  %2745 = vmatpush1.msra.mxu0 0.0
  %2746 = vmatprep.subr.mxu0 0.0
  %2747 = vmatpush1.msra.mxu0 0.0
  %2748 = vmatprep.subr.mxu0 0.0
  %2749 = vmatpush1.msra.mxu0 0.0
  %2750 = vmatprep.subr.mxu0 0.0
  %2751 = vmatpush1.msra.mxu0 0.0
  %2752 = vmatprep.subr.mxu0 0.0
  %2753 = vmatpush1.msra.mxu0 0.0
  %2754 = vmatprep.subr.mxu0 0.0
  %2755 = vmatpush1.msra.mxu0 0.0
  %2756 = vmatprep.subr.mxu0 0.0
  %2757 = vmatpush1.msra.mxu0 0.0
  %2758 = vmatprep.subr.mxu0 0.0
  %2759 = vmatpush1.msra.mxu0 0.0
  %2760 = vmatprep.subr.mxu0 0.0
  %2761 = vmatpush1.msra.mxu0 0.0
  %2762 = vmatprep.subr.mxu0 0.0
  %2763 = vmatpush1.msra.mxu0 0.0
  %2764 = vmatprep.subr.mxu0 0.0
  %2765 = vmatpush1.msra.mxu0 0.0
  %2766 = vmatprep.subr.mxu0 0.0
  %2767 = vmatpush1.msra.mxu0 0.0
  %2768 = vmatprep.subr.mxu0 0.0
  %2769 = vmatpush1.msra.mxu0 0.0
  %2770 = vmatprep.subr.mxu0 0.0
  %2771 = vmatpush1.msra.mxu0 0.0
  %2772 = vmatprep.subr.mxu0 0.0
  %2773 = vmatpush1.msra.mxu0 0.0
  %2774 = vmatprep.subr.mxu0 0.0
  %2775 = vmatpush1.msra.mxu0 0.0
  %2776 = vmatprep.subr.mxu0 0.0
  %2777 = vmatpush1.msra.mxu0 0.0
  %2778 = vmatprep.subr.mxu0 0.0
  %2779 = vmatpush1.msra.mxu0 0.0
  %2780 = vmatprep.subr.mxu0 0.0
  %2781 = vmatpush1.msra.mxu0 0.0
  %2782 = vmatprep.subr.mxu0 0.0
  %2783 = vmatpush1.msra.mxu0 0.0
  %2784 = vmatprep.subr.mxu0 0.0
  %2785 = vmatpush1.msra.mxu0 0.0
  %2786 = vmatprep.subr.mxu0 0.0
  %2787 = vmatpush1.msra.mxu0 0.0
  %2788 = vmatprep.subr.mxu0 0.0
  %2789 = vmatpush1.msra.mxu0 0.0
  %2790 = vmatprep.subr.mxu0 0.0
  %2791 = vmatpush1.msra.mxu0 0.0
  %2792 = vmatprep.subr.mxu0 0.0
  %2793 = vmatpush1.msra.mxu0 0.0
  %2794 = vmatprep.subr.mxu0 0.0
  %2795 = vmatpush1.msra.mxu0 0.0
  %2796 = vmatprep.subr.mxu0 0.0
  %2797 = vmatpush1.msra.mxu0 0.0
  %2798 = vmatprep.subr.mxu0 0.0
  %2799 = vmatpush1.msra.mxu0 0.0
  %2800 = vmatprep.subr.mxu0 0.0
  %2801 = vmatpush1.msra.mxu0 0.0
  %2802 = vmatprep.subr.mxu0 0.0
  %2803 = vmatpush1.msra.mxu0 0.0
  %2804 = vmatprep.mubr.f32.mxu0 0.0
  %2805 = vmatmul.mubr.f32.gmra.mrb[0].mxu0 %v2659
  %v2806 = vpop.f32.mrb[0].mxu0
  %v2807 = vadd.f32 0.0, %v2806
  %v2808 = vpop.f32.mrb[0].mxu0
  %v2809 = vadd.f32 0.0, %v2808
  %2810 = vdwg.mxu0
  %v2811 = vadd.f32 %v2637, %v2736
  %v2812 = vadd.f32 %v2638, %v2738
  %v2813 = vadd.f32 %v2639, %v2807
  %v2814 = vadd.f32 %v2640, %v2809
  %v2815 = vmul.f32 %v1934, %v1057
  %v2816 = vmul.f32 %v1926, %v1065
  %v2817 = vmul.f32 %v1927, %v1066
  %v2818 = vmul.f32 %v1928, %v1067
  %v2819 = vmul.f32 %v1935, %v1063
  %v2820 = vld [vmem:[%s4 + $0x14] sm:$0xf]
  %2826 = vrot.lane.b32.xlu0 %v2815, 110
  %v2827 = vpop.permute.xlu0 %2826
  %2828 = vrot.lane.b32.xlu0 %v2816, 110
  %v2829 = vpop.permute.xlu0 %2828
  %2830 = vrot.lane.b32.xlu0 %v2817, 110
  %v2831 = vpop.permute.xlu0 %2830
  %2832 = vrot.lane.b32.xlu0 %v2818, 110
  %v2833 = vpop.permute.xlu0 %2832
  %2834 = vrot.lane.b32.xlu0 %v2819, 110
  %v2835 = vpop.permute.xlu0 %2834
  %v2836 = vsel %vm1094, %v2827, %v2829
  %v2837 = vsel %vm1094, %v2829, %v2831
  %v2838 = vsel %vm1094, %v2831, %v2833
  %v2839 = vsel %vm1094, %v2833, %v2835
  %v2841 = vsel %vm1966, %v2820, 0
  %v2843 = vsel %vm1852, %v2836, 0
  %v2845 = vsel %vm1852, %v2837, 0
  %v2847 = vsel %vm1852, %v2838, 0
  %v2849 = vsel %vm1852, %v2839, 0
  %2851 = vmatprep.subr.mxu0 %v2845
  %2852 = vmatpush1.msra.mxu0 %v2843
  %2853 = vmatprep.subr.mxu0 0.0
  %2854 = vmatpush1.msra.mxu0 0.0
  %2855 = vmatprep.subr.mxu0 0.0
  %2856 = vmatpush1.msra.mxu0 0.0
  %2857 = vmatprep.subr.mxu0 0.0
  %2858 = vmatpush1.msra.mxu0 0.0
  %2859 = vmatprep.subr.mxu0 0.0
  %2860 = vmatpush1.msra.mxu0 0.0
  %2861 = vmatprep.subr.mxu0 0.0
  %2862 = vmatpush1.msra.mxu0 0.0
  %2863 = vmatprep.subr.mxu0 0.0
  %2864 = vmatpush1.msra.mxu0 0.0
  %2865 = vmatprep.subr.mxu0 0.0
  %2866 = vmatpush1.msra.mxu0 0.0
  %2867 = vmatprep.subr.mxu0 0.0
  %2868 = vmatpush1.msra.mxu0 0.0
  %2869 = vmatprep.subr.mxu0 0.0
  %2870 = vmatpush1.msra.mxu0 0.0
  %2871 = vmatprep.subr.mxu0 0.0
  %2872 = vmatpush1.msra.mxu0 0.0
  %2873 = vmatprep.subr.mxu0 0.0
  %2874 = vmatpush1.msra.mxu0 0.0
  %2875 = vmatprep.subr.mxu0 0.0
  %2876 = vmatpush1.msra.mxu0 0.0
  %2877 = vmatprep.subr.mxu0 0.0
  %2878 = vmatpush1.msra.mxu0 0.0
  %2879 = vmatprep.subr.mxu0 0.0
  %2880 = vmatpush1.msra.mxu0 0.0
  %2881 = vmatprep.subr.mxu0 0.0
  %2882 = vmatpush1.msra.mxu0 0.0
  %2883 = vmatprep.subr.mxu0 0.0
  %2884 = vmatpush1.msra.mxu0 0.0
  %2885 = vmatprep.subr.mxu0 0.0
  %2886 = vmatpush1.msra.mxu0 0.0
  %2887 = vmatprep.subr.mxu0 0.0
  %2888 = vmatpush1.msra.mxu0 0.0
  %2889 = vmatprep.subr.mxu0 0.0
  %2890 = vmatpush1.msra.mxu0 0.0
  %2891 = vmatprep.subr.mxu0 0.0
  %2892 = vmatpush1.msra.mxu0 0.0
  %2893 = vmatprep.subr.mxu0 0.0
  %2894 = vmatpush1.msra.mxu0 0.0
  %2895 = vmatprep.subr.mxu0 0.0
  %2896 = vmatpush1.msra.mxu0 0.0
  %2897 = vmatprep.subr.mxu0 0.0
  %2898 = vmatpush1.msra.mxu0 0.0
  %2899 = vmatprep.subr.mxu0 0.0
  %2900 = vmatpush1.msra.mxu0 0.0
  %2901 = vmatprep.subr.mxu0 0.0
  %2902 = vmatpush1.msra.mxu0 0.0
  %2903 = vmatprep.subr.mxu0 0.0
  %2904 = vmatpush1.msra.mxu0 0.0
  %2905 = vmatprep.subr.mxu0 0.0
  %2906 = vmatpush1.msra.mxu0 0.0
  %2907 = vmatprep.subr.mxu0 0.0
  %2908 = vmatpush1.msra.mxu0 0.0
  %2909 = vmatprep.subr.mxu0 0.0
  %2910 = vmatpush1.msra.mxu0 0.0
  %2911 = vmatprep.subr.mxu0 0.0
  %2912 = vmatpush1.msra.mxu0 0.0
  %2913 = vmatprep.subr.mxu0 0.0
  %2914 = vmatpush1.msra.mxu0 0.0
  %2915 = vmatprep.mubr.f32.mxu0 0.0
  %2916 = vmatmul.mubr.f32.gmra.mrb[0].mxu0 %v2841
  %v2917 = vpop.f32.mrb[0].mxu0
  %v2918 = vadd.f32 0.0, %v2917
  %v2919 = vpop.f32.mrb[0].mxu0
  %v2920 = vadd.f32 0.0, %v2919
  %2921 = vdwg.mxu0
  %2922 = vmatprep.subr.mxu0 %v2849
  %2923 = vmatpush1.msra.mxu0 %v2847
  %2924 = vmatprep.subr.mxu0 0.0
  %2925 = vmatpush1.msra.mxu0 0.0
  %2926 = vmatprep.subr.mxu0 0.0
  %2927 = vmatpush1.msra.mxu0 0.0
  %2928 = vmatprep.subr.mxu0 0.0
  %2929 = vmatpush1.msra.mxu0 0.0
  %2930 = vmatprep.subr.mxu0 0.0
  %2931 = vmatpush1.msra.mxu0 0.0
  %2932 = vmatprep.subr.mxu0 0.0
  %2933 = vmatpush1.msra.mxu0 0.0
  %2934 = vmatprep.subr.mxu0 0.0
  %2935 = vmatpush1.msra.mxu0 0.0
  %2936 = vmatprep.subr.mxu0 0.0
  %2937 = vmatpush1.msra.mxu0 0.0
  %2938 = vmatprep.subr.mxu0 0.0
  %2939 = vmatpush1.msra.mxu0 0.0
  %2940 = vmatprep.subr.mxu0 0.0
  %2941 = vmatpush1.msra.mxu0 0.0
  %2942 = vmatprep.subr.mxu0 0.0
  %2943 = vmatpush1.msra.mxu0 0.0
  %2944 = vmatprep.subr.mxu0 0.0
  %2945 = vmatpush1.msra.mxu0 0.0
  %2946 = vmatprep.subr.mxu0 0.0
  %2947 = vmatpush1.msra.mxu0 0.0
  %2948 = vmatprep.subr.mxu0 0.0
  %2949 = vmatpush1.msra.mxu0 0.0
  %2950 = vmatprep.subr.mxu0 0.0
  %2951 = vmatpush1.msra.mxu0 0.0
  %2952 = vmatprep.subr.mxu0 0.0
  %2953 = vmatpush1.msra.mxu0 0.0
  %2954 = vmatprep.subr.mxu0 0.0
  %2955 = vmatpush1.msra.mxu0 0.0
  %2956 = vmatprep.subr.mxu0 0.0
  %2957 = vmatpush1.msra.mxu0 0.0
  %2958 = vmatprep.subr.mxu0 0.0
  %2959 = vmatpush1.msra.mxu0 0.0
  %2960 = vmatprep.subr.mxu0 0.0
  %2961 = vmatpush1.msra.mxu0 0.0
  %2962 = vmatprep.subr.mxu0 0.0
  %2963 = vmatpush1.msra.mxu0 0.0
  %2964 = vmatprep.subr.mxu0 0.0
  %2965 = vmatpush1.msra.mxu0 0.0
  %2966 = vmatprep.subr.mxu0 0.0
  %2967 = vmatpush1.msra.mxu0 0.0
  %2968 = vmatprep.subr.mxu0 0.0
  %2969 = vmatpush1.msra.mxu0 0.0
  %2970 = vmatprep.subr.mxu0 0.0
  %2971 = vmatpush1.msra.mxu0 0.0
  %2972 = vmatprep.subr.mxu0 0.0
  %2973 = vmatpush1.msra.mxu0 0.0
  %2974 = vmatprep.subr.mxu0 0.0
  %2975 = vmatpush1.msra.mxu0 0.0
  %2976 = vmatprep.subr.mxu0 0.0
  %2977 = vmatpush1.msra.mxu0 0.0
  %2978 = vmatprep.subr.mxu0 0.0
  %2979 = vmatpush1.msra.mxu0 0.0
  %2980 = vmatprep.subr.mxu0 0.0
  %2981 = vmatpush1.msra.mxu0 0.0
  %2982 = vmatprep.subr.mxu0 0.0
  %2983 = vmatpush1.msra.mxu0 0.0
  %2984 = vmatprep.subr.mxu0 0.0
  %2985 = vmatpush1.msra.mxu0 0.0
  %2986 = vmatprep.mubr.f32.mxu0 0.0
  %2987 = vmatmul.mubr.f32.gmra.mrb[0].mxu0 %v2841
  %v2988 = vpop.f32.mrb[0].mxu0
  %v2989 = vadd.f32 0.0, %v2988
  %v2990 = vpop.f32.mrb[0].mxu0
  %v2991 = vadd.f32 0.0, %v2990
  %2992 = vdwg.mxu0
  %v2993 = vadd.f32 %v2811, %v2918
  %v2994 = vadd.f32 %v2812, %v2920
  %v2995 = vadd.f32 %v2813, %v2989
  %v2996 = vadd.f32 %v2814, %v2991
  %v2997 = vmul.f32 %v1934, %v1257
  %v2998 = vmul.f32 %v1926, %v1265
  %v2999 = vmul.f32 %v1927, %v1266
  %v3000 = vmul.f32 %v1928, %v1267
  %v3001 = vmul.f32 %v1935, %v1263
  %v3002 = vld [vmem:[%s4 + $0x18] sm:$0xf]
  %3008 = vrot.lane.b32.xlu0 %v2997, 96
  %v3009 = vpop.permute.xlu0 %3008
  %3010 = vrot.lane.b32.xlu0 %v2998, 96
  %v3011 = vpop.permute.xlu0 %3010
  %3012 = vrot.lane.b32.xlu0 %v2999, 96
  %v3013 = vpop.permute.xlu0 %3012
  %3014 = vrot.lane.b32.xlu0 %v3000, 96
  %v3015 = vpop.permute.xlu0 %3014
  %3016 = vrot.lane.b32.xlu0 %v3001, 96
  %v3017 = vpop.permute.xlu0 %3016
  %v3018 = vsel %vm1294, %v3009, %v3011
  %v3019 = vsel %vm1294, %v3011, %v3013
  %v3020 = vsel %vm1294, %v3013, %v3015
  %v3021 = vsel %vm1294, %v3015, %v3017
  %v3023 = vsel %vm1966, %v3002, 0
  %v3025 = vsel %vm1852, %v3018, 0
  %v3027 = vsel %vm1852, %v3019, 0
  %v3029 = vsel %vm1852, %v3020, 0
  %v3031 = vsel %vm1852, %v3021, 0
  %3033 = vmatprep.subr.mxu0 %v3027
  %3034 = vmatpush1.msra.mxu0 %v3025
  %3035 = vmatprep.subr.mxu0 0.0
  %3036 = vmatpush1.msra.mxu0 0.0
  %3037 = vmatprep.subr.mxu0 0.0
  %3038 = vmatpush1.msra.mxu0 0.0
  %3039 = vmatprep.subr.mxu0 0.0
  %3040 = vmatpush1.msra.mxu0 0.0
  %3041 = vmatprep.subr.mxu0 0.0
  %3042 = vmatpush1.msra.mxu0 0.0
  %3043 = vmatprep.subr.mxu0 0.0
  %3044 = vmatpush1.msra.mxu0 0.0
  %3045 = vmatprep.subr.mxu0 0.0
  %3046 = vmatpush1.msra.mxu0 0.0
  %3047 = vmatprep.subr.mxu0 0.0
  %3048 = vmatpush1.msra.mxu0 0.0
  %3049 = vmatprep.subr.mxu0 0.0
  %3050 = vmatpush1.msra.mxu0 0.0
  %3051 = vmatprep.subr.mxu0 0.0
  %3052 = vmatpush1.msra.mxu0 0.0
  %3053 = vmatprep.subr.mxu0 0.0
  %3054 = vmatpush1.msra.mxu0 0.0
  %3055 = vmatprep.subr.mxu0 0.0
  %3056 = vmatpush1.msra.mxu0 0.0
  %3057 = vmatprep.subr.mxu0 0.0
  %3058 = vmatpush1.msra.mxu0 0.0
  %3059 = vmatprep.subr.mxu0 0.0
  %3060 = vmatpush1.msra.mxu0 0.0
  %3061 = vmatprep.subr.mxu0 0.0
  %3062 = vmatpush1.msra.mxu0 0.0
  %3063 = vmatprep.subr.mxu0 0.0
  %3064 = vmatpush1.msra.mxu0 0.0
  %3065 = vmatprep.subr.mxu0 0.0
  %3066 = vmatpush1.msra.mxu0 0.0
  %3067 = vmatprep.subr.mxu0 0.0
  %3068 = vmatpush1.msra.mxu0 0.0
  %3069 = vmatprep.subr.mxu0 0.0
  %3070 = vmatpush1.msra.mxu0 0.0
  %3071 = vmatprep.subr.mxu0 0.0
  %3072 = vmatpush1.msra.mxu0 0.0
  %3073 = vmatprep.subr.mxu0 0.0
  %3074 = vmatpush1.msra.mxu0 0.0
  %3075 = vmatprep.subr.mxu0 0.0
  %3076 = vmatpush1.msra.mxu0 0.0
  %3077 = vmatprep.subr.mxu0 0.0
  %3078 = vmatpush1.msra.mxu0 0.0
  %3079 = vmatprep.subr.mxu0 0.0
  %3080 = vmatpush1.msra.mxu0 0.0
  %3081 = vmatprep.subr.mxu0 0.0
  %3082 = vmatpush1.msra.mxu0 0.0
  %3083 = vmatprep.subr.mxu0 0.0
  %3084 = vmatpush1.msra.mxu0 0.0
  %3085 = vmatprep.subr.mxu0 0.0
  %3086 = vmatpush1.msra.mxu0 0.0
  %3087 = vmatprep.subr.mxu0 0.0
  %3088 = vmatpush1.msra.mxu0 0.0
  %3089 = vmatprep.subr.mxu0 0.0
  %3090 = vmatpush1.msra.mxu0 0.0
  %3091 = vmatprep.subr.mxu0 0.0
  %3092 = vmatpush1.msra.mxu0 0.0
  %3093 = vmatprep.subr.mxu0 0.0
  %3094 = vmatpush1.msra.mxu0 0.0
  %3095 = vmatprep.subr.mxu0 0.0
  %3096 = vmatpush1.msra.mxu0 0.0
  %3097 = vmatprep.mubr.f32.mxu0 0.0
  %3098 = vmatmul.mubr.f32.gmra.mrb[0].mxu0 %v3023
  %v3099 = vpop.f32.mrb[0].mxu0
  %v3100 = vadd.f32 0.0, %v3099
  %v3101 = vpop.f32.mrb[0].mxu0
  %v3102 = vadd.f32 0.0, %v3101
  %3103 = vdwg.mxu0
  %3104 = vmatprep.subr.mxu0 %v3031
  %3105 = vmatpush1.msra.mxu0 %v3029
  %3106 = vmatprep.subr.mxu0 0.0
  %3107 = vmatpush1.msra.mxu0 0.0
  %3108 = vmatprep.subr.mxu0 0.0
  %3109 = vmatpush1.msra.mxu0 0.0
  %3110 = vmatprep.subr.mxu0 0.0
  %3111 = vmatpush1.msra.mxu0 0.0
  %3112 = vmatprep.subr.mxu0 0.0
  %3113 = vmatpush1.msra.mxu0 0.0
  %3114 = vmatprep.subr.mxu0 0.0
  %3115 = vmatpush1.msra.mxu0 0.0
  %3116 = vmatprep.subr.mxu0 0.0
  %3117 = vmatpush1.msra.mxu0 0.0
  %3118 = vmatprep.subr.mxu0 0.0
  %3119 = vmatpush1.msra.mxu0 0.0
  %3120 = vmatprep.subr.mxu0 0.0
  %3121 = vmatpush1.msra.mxu0 0.0
  %3122 = vmatprep.subr.mxu0 0.0
  %3123 = vmatpush1.msra.mxu0 0.0
  %3124 = vmatprep.subr.mxu0 0.0
  %3125 = vmatpush1.msra.mxu0 0.0
  %3126 = vmatprep.subr.mxu0 0.0
  %3127 = vmatpush1.msra.mxu0 0.0
  %3128 = vmatprep.subr.mxu0 0.0
  %3129 = vmatpush1.msra.mxu0 0.0
  %3130 = vmatprep.subr.mxu0 0.0
  %3131 = vmatpush1.msra.mxu0 0.0
  %3132 = vmatprep.subr.mxu0 0.0
  %3133 = vmatpush1.msra.mxu0 0.0
  %3134 = vmatprep.subr.mxu0 0.0
  %3135 = vmatpush1.msra.mxu0 0.0
  %3136 = vmatprep.subr.mxu0 0.0
  %3137 = vmatpush1.msra.mxu0 0.0
  %3138 = vmatprep.subr.mxu0 0.0
  %3139 = vmatpush1.msra.mxu0 0.0
  %3140 = vmatprep.subr.mxu0 0.0
  %3141 = vmatpush1.msra.mxu0 0.0
  %3142 = vmatprep.subr.mxu0 0.0
  %3143 = vmatpush1.msra.mxu0 0.0
  %3144 = vmatprep.subr.mxu0 0.0
  %3145 = vmatpush1.msra.mxu0 0.0
  %3146 = vmatprep.subr.mxu0 0.0
  %3147 = vmatpush1.msra.mxu0 0.0
  %3148 = vmatprep.subr.mxu0 0.0
  %3149 = vmatpush1.msra.mxu0 0.0
  %3150 = vmatprep.subr.mxu0 0.0
  %3151 = vmatpush1.msra.mxu0 0.0
  %3152 = vmatprep.subr.mxu0 0.0
  %3153 = vmatpush1.msra.mxu0 0.0
  %3154 = vmatprep.subr.mxu0 0.0
  %3155 = vmatpush1.msra.mxu0 0.0
  %3156 = vmatprep.subr.mxu0 0.0
  %3157 = vmatpush1.msra.mxu0 0.0
  %3158 = vmatprep.subr.mxu0 0.0
  %3159 = vmatpush1.msra.mxu0 0.0
  %3160 = vmatprep.subr.mxu0 0.0
  %3161 = vmatpush1.msra.mxu0 0.0
  %3162 = vmatprep.subr.mxu0 0.0
  %3163 = vmatpush1.msra.mxu0 0.0
  %3164 = vmatprep.subr.mxu0 0.0
  %3165 = vmatpush1.msra.mxu0 0.0
  %3166 = vmatprep.subr.mxu0 0.0
  %3167 = vmatpush1.msra.mxu0 0.0
  %3168 = vmatprep.mubr.f32.mxu0 0.0
  %3169 = vmatmul.mubr.f32.gmra.mrb[0].mxu0 %v3023
  %v3170 = vpop.f32.mrb[0].mxu0
  %v3171 = vadd.f32 0.0, %v3170
  %v3172 = vpop.f32.mrb[0].mxu0
  %v3173 = vadd.f32 0.0, %v3172
  %3174 = vdwg.mxu0
  %v3175 = vadd.f32 %v2993, %v3100
  %v3176 = vadd.f32 %v2994, %v3102
  %v3177 = vadd.f32 %v2995, %v3171
  %v3178 = vadd.f32 %v2996, %v3173
  %v3179 = vmul.f32 %v1934, %v1457
  %v3180 = vmul.f32 %v1926, %v1465
  %v3181 = vmul.f32 %v1927, %v1466
  %v3182 = vmul.f32 %v1928, %v1467
  %v3183 = vmul.f32 %v1935, %v1463
  %v3184 = vld [vmem:[%s4 + $0x1c] sm:$0xf]
  %3190 = vrot.lane.b32.xlu0 %v3179, 95
  %v3191 = vpop.permute.xlu0 %3190
  %3192 = vrot.lane.b32.xlu0 %v3180, 95
  %v3193 = vpop.permute.xlu0 %3192
  %3194 = vrot.lane.b32.xlu0 %v3181, 95
  %v3195 = vpop.permute.xlu0 %3194
  %3196 = vrot.lane.b32.xlu0 %v3182, 95
  %v3197 = vpop.permute.xlu0 %3196
  %3198 = vrot.lane.b32.xlu0 %v3183, 95
  %v3199 = vpop.permute.xlu0 %3198
  %v3200 = vsel %vm1494, %v3191, %v3193
  %v3201 = vsel %vm1494, %v3193, %v3195
  %v3202 = vsel %vm1494, %v3195, %v3197
  %v3203 = vsel %vm1494, %v3197, %v3199
  %v3205 = vsel %vm1966, %v3184, 0
  %v3207 = vsel %vm1852, %v3200, 0
  %v3209 = vsel %vm1852, %v3201, 0
  %v3211 = vsel %vm1852, %v3202, 0
  %v3213 = vsel %vm1852, %v3203, 0
  %3215 = vmatprep.subr.mxu0 %v3209
  %3216 = vmatpush1.msra.mxu0 %v3207
  %3217 = vmatprep.subr.mxu0 0.0
  %3218 = vmatpush1.msra.mxu0 0.0
  %3219 = vmatprep.subr.mxu0 0.0
  %3220 = vmatpush1.msra.mxu0 0.0
  %3221 = vmatprep.subr.mxu0 0.0
  %3222 = vmatpush1.msra.mxu0 0.0
  %3223 = vmatprep.subr.mxu0 0.0
  %3224 = vmatpush1.msra.mxu0 0.0
  %3225 = vmatprep.subr.mxu0 0.0
  %3226 = vmatpush1.msra.mxu0 0.0
  %3227 = vmatprep.subr.mxu0 0.0
  %3228 = vmatpush1.msra.mxu0 0.0
  %3229 = vmatprep.subr.mxu0 0.0
  %3230 = vmatpush1.msra.mxu0 0.0
  %3231 = vmatprep.subr.mxu0 0.0
  %3232 = vmatpush1.msra.mxu0 0.0
  %3233 = vmatprep.subr.mxu0 0.0
  %3234 = vmatpush1.msra.mxu0 0.0
  %3235 = vmatprep.subr.mxu0 0.0
  %3236 = vmatpush1.msra.mxu0 0.0
  %3237 = vmatprep.subr.mxu0 0.0
  %3238 = vmatpush1.msra.mxu0 0.0
  %3239 = vmatprep.subr.mxu0 0.0
  %3240 = vmatpush1.msra.mxu0 0.0
  %3241 = vmatprep.subr.mxu0 0.0
  %3242 = vmatpush1.msra.mxu0 0.0
  %3243 = vmatprep.subr.mxu0 0.0
  %3244 = vmatpush1.msra.mxu0 0.0
  %3245 = vmatprep.subr.mxu0 0.0
  %3246 = vmatpush1.msra.mxu0 0.0
  %3247 = vmatprep.subr.mxu0 0.0
  %3248 = vmatpush1.msra.mxu0 0.0
  %3249 = vmatprep.subr.mxu0 0.0
  %3250 = vmatpush1.msra.mxu0 0.0
  %3251 = vmatprep.subr.mxu0 0.0
  %3252 = vmatpush1.msra.mxu0 0.0
  %3253 = vmatprep.subr.mxu0 0.0
  %3254 = vmatpush1.msra.mxu0 0.0
  %3255 = vmatprep.subr.mxu0 0.0
  %3256 = vmatpush1.msra.mxu0 0.0
  %3257 = vmatprep.subr.mxu0 0.0
  %3258 = vmatpush1.msra.mxu0 0.0
  %3259 = vmatprep.subr.mxu0 0.0
  %3260 = vmatpush1.msra.mxu0 0.0
  %3261 = vmatprep.subr.mxu0 0.0
  %3262 = vmatpush1.msra.mxu0 0.0
  %3263 = vmatprep.subr.mxu0 0.0
  %3264 = vmatpush1.msra.mxu0 0.0
  %3265 = vmatprep.subr.mxu0 0.0
  %3266 = vmatpush1.msra.mxu0 0.0
  %3267 = vmatprep.subr.mxu0 0.0
  %3268 = vmatpush1.msra.mxu0 0.0
  %3269 = vmatprep.subr.mxu0 0.0
  %3270 = vmatpush1.msra.mxu0 0.0
  %3271 = vmatprep.subr.mxu0 0.0
  %3272 = vmatpush1.msra.mxu0 0.0
  %3273 = vmatprep.subr.mxu0 0.0
  %3274 = vmatpush1.msra.mxu0 0.0
  %3275 = vmatprep.subr.mxu0 0.0
  %3276 = vmatpush1.msra.mxu0 0.0
  %3277 = vmatprep.subr.mxu0 0.0
  %3278 = vmatpush1.msra.mxu0 0.0
  %3279 = vmatprep.mubr.f32.mxu0 0.0
  %3280 = vmatmul.mubr.f32.gmra.mrb[0].mxu0 %v3205
  %v3281 = vpop.f32.mrb[0].mxu0
  %v3282 = vadd.f32 0.0, %v3281
  %v3283 = vpop.f32.mrb[0].mxu0
  %v3284 = vadd.f32 0.0, %v3283
  %3285 = vdwg.mxu0
  %3286 = vmatprep.subr.mxu0 %v3213
  %3287 = vmatpush1.msra.mxu0 %v3211
  %3288 = vmatprep.subr.mxu0 0.0
  %3289 = vmatpush1.msra.mxu0 0.0
  %3290 = vmatprep.subr.mxu0 0.0
  %3291 = vmatpush1.msra.mxu0 0.0
  %3292 = vmatprep.subr.mxu0 0.0
  %3293 = vmatpush1.msra.mxu0 0.0
  %3294 = vmatprep.subr.mxu0 0.0
  %3295 = vmatpush1.msra.mxu0 0.0
  %3296 = vmatprep.subr.mxu0 0.0
  %3297 = vmatpush1.msra.mxu0 0.0
  %3298 = vmatprep.subr.mxu0 0.0
  %3299 = vmatpush1.msra.mxu0 0.0
  %3300 = vmatprep.subr.mxu0 0.0
  %3301 = vmatpush1.msra.mxu0 0.0
  %3302 = vmatprep.subr.mxu0 0.0
  %3303 = vmatpush1.msra.mxu0 0.0
  %3304 = vmatprep.subr.mxu0 0.0
  %3305 = vmatpush1.msra.mxu0 0.0
  %3306 = vmatprep.subr.mxu0 0.0
  %3307 = vmatpush1.msra.mxu0 0.0
  %3308 = vmatprep.subr.mxu0 0.0
  %3309 = vmatpush1.msra.mxu0 0.0
  %3310 = vmatprep.subr.mxu0 0.0
  %3311 = vmatpush1.msra.mxu0 0.0
  %3312 = vmatprep.subr.mxu0 0.0
  %3313 = vmatpush1.msra.mxu0 0.0
  %3314 = vmatprep.subr.mxu0 0.0
  %3315 = vmatpush1.msra.mxu0 0.0
  %3316 = vmatprep.subr.mxu0 0.0
  %3317 = vmatpush1.msra.mxu0 0.0
  %3318 = vmatprep.subr.mxu0 0.0
  %3319 = vmatpush1.msra.mxu0 0.0
  %3320 = vmatprep.subr.mxu0 0.0
  %3321 = vmatpush1.msra.mxu0 0.0
  %3322 = vmatprep.subr.mxu0 0.0
  %3323 = vmatpush1.msra.mxu0 0.0
  %3324 = vmatprep.subr.mxu0 0.0
  %3325 = vmatpush1.msra.mxu0 0.0
  %3326 = vmatprep.subr.mxu0 0.0
  %3327 = vmatpush1.msra.mxu0 0.0
  %3328 = vmatprep.subr.mxu0 0.0
  %3329 = vmatpush1.msra.mxu0 0.0
  %3330 = vmatprep.subr.mxu0 0.0
  %3331 = vmatpush1.msra.mxu0 0.0
  %3332 = vmatprep.subr.mxu0 0.0
  %3333 = vmatpush1.msra.mxu0 0.0
  %3334 = vmatprep.subr.mxu0 0.0
  %3335 = vmatpush1.msra.mxu0 0.0
  %3336 = vmatprep.subr.mxu0 0.0
  %3337 = vmatpush1.msra.mxu0 0.0
  %3338 = vmatprep.subr.mxu0 0.0
  %3339 = vmatpush1.msra.mxu0 0.0
  %3340 = vmatprep.subr.mxu0 0.0
  %3341 = vmatpush1.msra.mxu0 0.0
  %3342 = vmatprep.subr.mxu0 0.0
  %3343 = vmatpush1.msra.mxu0 0.0
  %3344 = vmatprep.subr.mxu0 0.0
  %3345 = vmatpush1.msra.mxu0 0.0
  %3346 = vmatprep.subr.mxu0 0.0
  %3347 = vmatpush1.msra.mxu0 0.0
  %3348 = vmatprep.subr.mxu0 0.0
  %3349 = vmatpush1.msra.mxu0 0.0
  %3350 = vmatprep.mubr.f32.mxu0 0.0
  %3351 = vmatmul.mubr.f32.gmra.mrb[0].mxu0 %v3205
  %v3352 = vpop.f32.mrb[0].mxu0
  %v3353 = vadd.f32 0.0, %v3352
  %v3354 = vpop.f32.mrb[0].mxu0
  %v3355 = vadd.f32 0.0, %v3354
  %3356 = vdwg.mxu0
  %v3357 = vadd.f32 %v3175, %v3282
  %v3358 = vadd.f32 %v3176, %v3284
  %v3359 = vadd.f32 %v3177, %v3353
  %v3360 = vadd.f32 %v3178, %v3355
  %v3361 = vmul.f32 %v1934, %v1657
  %v3362 = vmul.f32 %v1926, %v1665
  %v3363 = vmul.f32 %v1927, %v1666
  %v3364 = vmul.f32 %v1928, %v1667
  %v3365 = vmul.f32 %v1935, %v1663
  %v3366 = vld [vmem:[%s4 + $0x20] sm:$0xf]
  %3372 = vrot.lane.b32.xlu0 %v3361, 94
  %v3373 = vpop.permute.xlu0 %3372
  %3374 = vrot.lane.b32.xlu0 %v3362, 94
  %v3375 = vpop.permute.xlu0 %3374
  %3376 = vrot.lane.b32.xlu0 %v3363, 94
  %v3377 = vpop.permute.xlu0 %3376
  %3378 = vrot.lane.b32.xlu0 %v3364, 94
  %v3379 = vpop.permute.xlu0 %3378
  %3380 = vrot.lane.b32.xlu0 %v3365, 94
  %v3381 = vpop.permute.xlu0 %3380
  %v3382 = vsel %vm1694, %v3373, %v3375
  %v3383 = vsel %vm1694, %v3375, %v3377
  %v3384 = vsel %vm1694, %v3377, %v3379
  %v3385 = vsel %vm1694, %v3379, %v3381
  %v3387 = vsel %vm1966, %v3366, 0
  %v3389 = vsel %vm1852, %v3382, 0
  %v3391 = vsel %vm1852, %v3383, 0
  %v3393 = vsel %vm1852, %v3384, 0
  %v3395 = vsel %vm1852, %v3385, 0
  %3397 = vmatprep.subr.mxu0 %v3391
  %3398 = vmatpush1.msra.mxu0 %v3389
  %3399 = vmatprep.subr.mxu0 0.0
  %3400 = vmatpush1.msra.mxu0 0.0
  %3401 = vmatprep.subr.mxu0 0.0
  %3402 = vmatpush1.msra.mxu0 0.0
  %3403 = vmatprep.subr.mxu0 0.0
  %3404 = vmatpush1.msra.mxu0 0.0
  %3405 = vmatprep.subr.mxu0 0.0
  %3406 = vmatpush1.msra.mxu0 0.0
  %3407 = vmatprep.subr.mxu0 0.0
  %3408 = vmatpush1.msra.mxu0 0.0
  %3409 = vmatprep.subr.mxu0 0.0
  %3410 = vmatpush1.msra.mxu0 0.0
  %3411 = vmatprep.subr.mxu0 0.0
  %3412 = vmatpush1.msra.mxu0 0.0
  %3413 = vmatprep.subr.mxu0 0.0
  %3414 = vmatpush1.msra.mxu0 0.0
  %3415 = vmatprep.subr.mxu0 0.0
  %3416 = vmatpush1.msra.mxu0 0.0
  %3417 = vmatprep.subr.mxu0 0.0
  %3418 = vmatpush1.msra.mxu0 0.0
  %3419 = vmatprep.subr.mxu0 0.0
  %3420 = vmatpush1.msra.mxu0 0.0
  %3421 = vmatprep.subr.mxu0 0.0
  %3422 = vmatpush1.msra.mxu0 0.0
  %3423 = vmatprep.subr.mxu0 0.0
  %3424 = vmatpush1.msra.mxu0 0.0
  %3425 = vmatprep.subr.mxu0 0.0
  %3426 = vmatpush1.msra.mxu0 0.0
  %3427 = vmatprep.subr.mxu0 0.0
  %3428 = vmatpush1.msra.mxu0 0.0
  %3429 = vmatprep.subr.mxu0 0.0
  %3430 = vmatpush1.msra.mxu0 0.0
  %3431 = vmatprep.subr.mxu0 0.0
  %3432 = vmatpush1.msra.mxu0 0.0
  %3433 = vmatprep.subr.mxu0 0.0
  %3434 = vmatpush1.msra.mxu0 0.0
  %3435 = vmatprep.subr.mxu0 0.0
  %3436 = vmatpush1.msra.mxu0 0.0
  %3437 = vmatprep.subr.mxu0 0.0
  %3438 = vmatpush1.msra.mxu0 0.0
  %3439 = vmatprep.subr.mxu0 0.0
  %3440 = vmatpush1.msra.mxu0 0.0
  %3441 = vmatprep.subr.mxu0 0.0
  %3442 = vmatpush1.msra.mxu0 0.0
  %3443 = vmatprep.subr.mxu0 0.0
  %3444 = vmatpush1.msra.mxu0 0.0
  %3445 = vmatprep.subr.mxu0 0.0
  %3446 = vmatpush1.msra.mxu0 0.0
  %3447 = vmatprep.subr.mxu0 0.0
  %3448 = vmatpush1.msra.mxu0 0.0
  %3449 = vmatprep.subr.mxu0 0.0
  %3450 = vmatpush1.msra.mxu0 0.0
  %3451 = vmatprep.subr.mxu0 0.0
  %3452 = vmatpush1.msra.mxu0 0.0
  %3453 = vmatprep.subr.mxu0 0.0
  %3454 = vmatpush1.msra.mxu0 0.0
  %3455 = vmatprep.subr.mxu0 0.0
  %3456 = vmatpush1.msra.mxu0 0.0
  %3457 = vmatprep.subr.mxu0 0.0
  %3458 = vmatpush1.msra.mxu0 0.0
  %3459 = vmatprep.subr.mxu0 0.0
  %3460 = vmatpush1.msra.mxu0 0.0
  %3461 = vmatprep.mubr.f32.mxu0 0.0
  %3462 = vmatmul.mubr.f32.gmra.mrb[0].mxu0 %v3387
  %v3463 = vpop.f32.mrb[0].mxu0
  %v3464 = vadd.f32 0.0, %v3463
  %v3465 = vpop.f32.mrb[0].mxu0
  %v3466 = vadd.f32 0.0, %v3465
  %3467 = vdwg.mxu0
  %3468 = vmatprep.subr.mxu0 %v3395
  %3469 = vmatpush1.msra.mxu0 %v3393
  %3470 = vmatprep.subr.mxu0 0.0
  %3471 = vmatpush1.msra.mxu0 0.0
  %3472 = vmatprep.subr.mxu0 0.0
  %3473 = vmatpush1.msra.mxu0 0.0
  %3474 = vmatprep.subr.mxu0 0.0
  %3475 = vmatpush1.msra.mxu0 0.0
  %3476 = vmatprep.subr.mxu0 0.0
  %3477 = vmatpush1.msra.mxu0 0.0
  %3478 = vmatprep.subr.mxu0 0.0
  %3479 = vmatpush1.msra.mxu0 0.0
  %3480 = vmatprep.subr.mxu0 0.0
  %3481 = vmatpush1.msra.mxu0 0.0
  %3482 = vmatprep.subr.mxu0 0.0
  %3483 = vmatpush1.msra.mxu0 0.0
  %3484 = vmatprep.subr.mxu0 0.0
  %3485 = vmatpush1.msra.mxu0 0.0
  %3486 = vmatprep.subr.mxu0 0.0
  %3487 = vmatpush1.msra.mxu0 0.0
  %3488 = vmatprep.subr.mxu0 0.0
  %3489 = vmatpush1.msra.mxu0 0.0
  %3490 = vmatprep.subr.mxu0 0.0
  %3491 = vmatpush1.msra.mxu0 0.0
  %3492 = vmatprep.subr.mxu0 0.0
  %3493 = vmatpush1.msra.mxu0 0.0
  %3494 = vmatprep.subr.mxu0 0.0
  %3495 = vmatpush1.msra.mxu0 0.0
  %3496 = vmatprep.subr.mxu0 0.0
  %3497 = vmatpush1.msra.mxu0 0.0
  %3498 = vmatprep.subr.mxu0 0.0
  %3499 = vmatpush1.msra.mxu0 0.0
  %3500 = vmatprep.subr.mxu0 0.0
  %3501 = vmatpush1.msra.mxu0 0.0
  %3502 = vmatprep.subr.mxu0 0.0
  %3503 = vmatpush1.msra.mxu0 0.0
  %3504 = vmatprep.subr.mxu0 0.0
  %3505 = vmatpush1.msra.mxu0 0.0
  %3506 = vmatprep.subr.mxu0 0.0
  %3507 = vmatpush1.msra.mxu0 0.0
  %3508 = vmatprep.subr.mxu0 0.0
  %3509 = vmatpush1.msra.mxu0 0.0
  %3510 = vmatprep.subr.mxu0 0.0
  %3511 = vmatpush1.msra.mxu0 0.0
  %3512 = vmatprep.subr.mxu0 0.0
  %3513 = vmatpush1.msra.mxu0 0.0
  %3514 = vmatprep.subr.mxu0 0.0
  %3515 = vmatpush1.msra.mxu0 0.0
  %3516 = vmatprep.subr.mxu0 0.0
  %3517 = vmatpush1.msra.mxu0 0.0
  %3518 = vmatprep.subr.mxu0 0.0
  %3519 = vmatpush1.msra.mxu0 0.0
  %3520 = vmatprep.subr.mxu0 0.0
  %3521 = vmatpush1.msra.mxu0 0.0
  %3522 = vmatprep.subr.mxu0 0.0
  %3523 = vmatpush1.msra.mxu0 0.0
  %3524 = vmatprep.subr.mxu0 0.0
  %3525 = vmatpush1.msra.mxu0 0.0
  %3526 = vmatprep.subr.mxu0 0.0
  %3527 = vmatpush1.msra.mxu0 0.0
  %3528 = vmatprep.subr.mxu0 0.0
  %3529 = vmatpush1.msra.mxu0 0.0
  %3530 = vmatprep.subr.mxu0 0.0
  %3531 = vmatpush1.msra.mxu0 0.0
  %3532 = vmatprep.mubr.f32.mxu0 0.0
  %3533 = vmatmul.mubr.f32.gmra.mrb[0].mxu0 %v3387
  %v3534 = vpop.f32.mrb[0].mxu0
  %v3535 = vadd.f32 0.0, %v3534
  %v3536 = vpop.f32.mrb[0].mxu0
  %v3537 = vadd.f32 0.0, %v3536
  %3538 = vdwg.mxu0
  %v3539 = vadd.f32 %v3357, %v3464
  %v3540 = vadd.f32 %v3358, %v3466
  %v3541 = vadd.f32 %v3359, %v3535
  %v3542 = vadd.f32 %v3360, %v3537
  %v3543 = vsel %vm1852, %v3539, 0.0
  %v3544 = vsel %vm1852, %v3540, 0.0
  %v3545 = vadd.f32 %v3543, %v3544
  %v3546 = vsel %vm1852, %v3541, 0.0
  %v3547 = vadd.f32 %v3545, %v3546
  %v3548 = vsel %vm1852, %v3542, 0.0
  %v3549 = vadd.f32 %v3547, %v3548
  %3550 = vadd.xlane.f32.xlu0 %v3549
  %v3551 = vpop.xlane.xlu0 %3550
  %v3552 = vmul.f32 %v3551, 0.001953125
  %v3553 = vmul.f32 %v3539, %v3539
  %v3554 = vmul.f32 %v3540, %v3540
  %v3555 = vmul.f32 %v3541, %v3541
  %v3556 = vmul.f32 %v3542, %v3542
  %v3557 = vsel %vm1852, %v3553, 0.0
  %v3558 = vsel %vm1852, %v3554, 0.0
  %v3559 = vadd.f32 %v3557, %v3558
  %v3560 = vsel %vm1852, %v3555, 0.0
  %v3561 = vadd.f32 %v3559, %v3560
  %v3562 = vsel %vm1852, %v3556, 0.0
  %v3563 = vadd.f32 %v3561, %v3562
  %3564 = vadd.xlane.f32.xlu0 %v3563
  %v3565 = vpop.xlane.xlu0 %3564
  %v3566 = vmul.f32 %v3565, 0.001953125
  %v3567 = vmul.f32 %v3552, %v3552
  %v3568 = vsub.f32 %v3566, %v3567
  %v3569 = vmax.f32 %v3568, 0.0
  %v3570 = vsub.f32 %v3539, %v3552
  %v3571 = vsub.f32 %v3540, %v3552
  %v3572 = vsub.f32 %v3541, %v3552
  %v3573 = vsub.f32 %v3542, %v3552
  %v3574 = vadd.f32 %v3569, 1e-05
  %v3575 = vrsqrt.pop %v3574
  %v3576 = vmul.f32 %v3570, %v3575
  %v3577 = vmul.f32 %v3571, %v3575
  %v3578 = vmul.f32 %v3572, %v3575
  %v3579 = vmul.f32 %v3573, %v3575
  %v3580 = vld [vmem:[%s5] sm:$0xf]
  %3582 = vset.pattern.permute.xlu0 0
  %3583 = vperm.xlu0 %3582, %v3580
  %v3584 = vpop.permute.xlu0 %3583
  %v3586 = vmul.f32 %v3576, %v3584
  %v3587 = vmul.f32 %v3577, %v3584
  %v3588 = vmul.f32 %v3578, %v3584
  %v3589 = vmul.f32 %v3579, %v3584
  %v3590 = vld [vmem:[%s6] sm:$0xf]
  %3592 = vset.pattern.permute.xlu0 0
  %3593 = vperm.xlu0 %3592, %v3590
  %v3594 = vpop.permute.xlu0 %3593
  %v3596 = vadd.f32 %v3586, %v3594
  %v3597 = vadd.f32 %v3587, %v3594
  %v3598 = vadd.f32 %v3588, %v3594
  %v3599 = vadd.f32 %v3589, %v3594
  %v3600 = vadd.f32 %v3596, %v1910
  %v3601 = vadd.f32 %v3597, %v1911
  %v3602 = vadd.f32 %v3598, %v1912
  %v3603 = vadd.f32 %v3599, %v1913
  %v3604 = vmax.f32 %v3600, 0.0
  %v3605 = vmax.f32 %v3601, 0.0
  %v3606 = vmax.f32 %v3602, 0.0
  %v3607 = vmax.f32 %v3603, 0.0
  %v3612 = vcombine.low %v3604, %v3605
  %v3613 = vcombine.low %v3606, %v3607
  %3616 = vst [vmem:[%s7] sm:$0xff] %v3612
  %3617 = vst [vmem:[%s7 + $0x8] sm:$0xff] %v3613
  // Predicated region
  $region30: #{up_block_forward.1} parent=0 // pred_check
    _
  $region31: #{up_block_forward.1} parent=0 // pred_check_branch
    %3619 = sbr.rel (0) target = $region33
  $region32: #{up_block_forward.1} parent=0 // pred_region
    _
  $region33: #{up_block_forward.1} parent=0 // pred_fallthru
    _
  // Predicated region
  $region34: #{up_block_forward.1} parent=0 // pred_check
    _
  $region35: #{up_block_forward.1} parent=0 // pred_check_branch
    %3621 = sbr.rel (0) target = $region37
  $region36: #{up_block_forward.1} parent=0 // pred_region
    _
  $region37: #{up_block_forward.1} parent=0 // pred_fallthru
    _

</llo_original>
